<compile_context>
chip_gen: v7x
topology: tpu7x:2x2x1
jax: 0.10.0
libtpu: 0.0.40
codegen_flags: <defaults>
</compile_context>

<pallas_src>
import functools

import jax
import jax.numpy as jnp
from jax import lax
from jax.experimental import pallas as pl
from jax.experimental.pallas import tpu as pltpu

DROPOUT_P = 0.2
_KEEP_SCALE = 1.0 / (1.0 - DROPOUT_P)
_DROP_THRESH_24 = int(DROPOUT_P * (1 << 24))   # integer-space threshold


def _ffn_kernel(seed_ref, x_ref, w1_ref, b1_ref, w2_ref, b2_ref, o_ref,
                *, apply_dropout: bool, block_m: int, n_embd: int):
    # ---- Linear1 + ReLU (MXU bf16, f32 accumulate) ----
    x = x_ref[...]                                              # (TM, D) bf16
    h = jnp.dot(x, w1_ref[...], preferred_element_type=jnp.float32)
    h = jnp.maximum(h + b1_ref[...], 0.0)                       # (TM, 4D) f32

    # ---- Linear2 (MXU bf16, f32 accumulate) ----
    y = jnp.dot(h.astype(jnp.bfloat16), w2_ref[...],
                preferred_element_type=jnp.float32)
    y = y + b2_ref[...]                                         # (TM, D) f32

    # ---- Dropout (training semantics: keep w.p. 1-p, scale by 1/(1-p)) ----
    if apply_dropout:
        i = pl.program_id(0)
        rows = lax.broadcasted_iota(jnp.int32, y.shape, 0)
        cols = lax.broadcasted_iota(jnp.int32, y.shape, 1)
        # Unique id per *global* output element -> mask independent of tiling.
        idx = (rows + i * block_m) * n_embd + cols
        h32 = idx ^ seed_ref[0]
        # lowbias32 integer mixer (Wellons) — pure VPU int32 ops, portable.
        h32 = h32 ^ lax.shift_right_logical(h32, jnp.int32(16))
        h32 = h32 * jnp.int32(0x7FEB352D)
        h32 = h32 ^ lax.shift_right_logical(h32, jnp.int32(15))
        h32 = h32 * jnp.int32(-2072627573)            # 0x846CA68B as int32
        h32 = h32 ^ lax.shift_right_logical(h32, jnp.int32(16))
        bits24 = lax.shift_right_logical(h32, jnp.int32(8))   # uniform [0, 2^24)
        keep = bits24 >= jnp.int32(_DROP_THRESH_24)           # P(keep) = 1 - p
        y = jnp.where(keep, y * jnp.float32(_KEEP_SCALE), 0.0)

    o_ref[...] = y.astype(o_ref.dtype)


def _pick_block_m(m: int) -> int:
    """Largest row-tile that evenly divides M and respects the (8,128) rule."""
    for tm in (512, 256, 128, 64, 32, 16, 8):
        if m % tm == 0:
            return tm
    return m   # whole-array block (allowed even if not a multiple of 8)


def feed_forward(x, w1, b1, w2, b2, *, seed=0, training=True):
    """x: (B, T, n_embd) float32.  Weights stored as (in_features, out_features).

    Returns (B, T, n_embd) float32 matching
    Dropout(Linear2(ReLU(Linear1(x)))) with PyTorch training semantics.
    """
    B, T, D = x.shape
    H = w1.shape[1]
    M = B * T

    # bf16 operands for the MXU; f32 biases / accumulation.
    x2d = x.reshape(M, D).astype(jnp.bfloat16)
    w1b = w1.astype(jnp.bfloat16)
    w2b = w2.astype(jnp.bfloat16)
    b1r = jnp.asarray(b1, jnp.float32).reshape(1, H)
    b2r = jnp.asarray(b2, jnp.float32).reshape(1, D)
    seed_arr = jnp.asarray([seed], dtype=jnp.int32)

    TM = _pick_block_m(M)
    grid = (M // TM,)

    kernel = functools.partial(_ffn_kernel, apply_dropout=training,
                               block_m=TM, n_embd=D)

    bytes_accessed = (x2d.size * 2 + w1b.size * 2 + w2b.size * 2
                      + b1r.size * 4 + b2r.size * 4 + M * D * 4)

    out2d = pl.pallas_call(
        kernel,
        out_shape=jax.ShapeDtypeStruct((M, D), jnp.float32),
        grid=grid,
        in_specs=[
            pl.BlockSpec(memory_space=pltpu.SMEM),            # seed scalar
            pl.BlockSpec((TM, D), lambda i: (i, 0)),           # x row tile
            pl.BlockSpec((D, H), lambda i: (0, 0)),            # w1 (resident)
            pl.BlockSpec((1, H), lambda i: (0, 0)),            # b1 (resident)
            pl.BlockSpec((H, D), lambda i: (0, 0)),            # w2 (resident)
            pl.BlockSpec((1, D), lambda i: (0, 0)),            # b2 (resident)
        ],
        out_specs=pl.BlockSpec((TM, D), lambda i: (i, 0)),
        compiler_params=pltpu.CompilerParams(
            dimension_semantics=("parallel",),
            vmem_limit_bytes=64 * 1024 * 1024,
        ),
        cost_estimate=pl.CostEstimate(
            flops=2 * M * D * H * 2,
            transcendentals=0,
            bytes_accessed=bytes_accessed,
        ),
    )(seed_arr, x2d, w1b, b1r, w2b, b2r)

    return out2d.reshape(B, T, D).astype(x.dtype)


def init_params(key, n_embd):
    """Deterministic params, PyTorch nn.Linear-style uniform(+-1/sqrt(fan_in)).

    Weights are stored transposed vs torch: (in_features, out_features).
    """
    h = 4 * n_embd
    k1, k2, k3, k4 = jax.random.split(key, 4)
    bound1 = 1.0 / jnp.sqrt(jnp.float32(n_embd))
    bound2 = 1.0 / jnp.sqrt(jnp.float32(h))
    w1 = jax.random.uniform(k1, (n_embd, h), jnp.float32, -bound1, bound1)
    b1 = jax.random.uniform(k2, (h,), jnp.float32, -bound1, bound1)
    w2 = jax.random.uniform(k3, (h, n_embd), jnp.float32, -bound2, bound2)
    b2 = jax.random.uniform(k4, (n_embd,), jnp.float32, -bound2, bound2)
    return w1, b1, w2, b2


if __name__ == "__main__":
    # Small shapes consistent with the module's forward: (batch, seq, n_embd=384).
    B, T, n_embd = 2, 8, 384
    key = jax.random.PRNGKey(0)
    kx, kp = jax.random.split(key)
    x = jax.random.normal(kx, (B, T, n_embd), dtype=jnp.float32)
    w1, b1, w2, b2 = init_params(kp, n_embd)

    # Training mode (dropout on).
    y_train = jax.block_until_ready(
        feed_forward(x, w1, b1, w2, b2, seed=0, training=True))

    # Eval mode (dropout off) against a bf16-matched pure-JAX reference.
    y_eval = jax.block_until_ready(
        feed_forward(x, w1, b1, w2, b2, training=False))

    x2d = x.reshape(-1, n_embd)
    xb = x2d.astype(jnp.bfloat16).astype(jnp.float32)
    w1b = w1.astype(jnp.bfloat16).astype(jnp.float32)
    w2b = w2.astype(jnp.bfloat16).astype(jnp.float32)
    h_ref = jnp.maximum(xb @ w1b + b1.reshape(1, -1), 0.0)
    ref = h_ref.astype(jnp.bfloat16).astype(jnp.float32) @ w2b + b2.reshape(1, -1)

    assert y_train.shape == (B, T, n_embd)
    assert jnp.allclose(y_eval.reshape(-1, n_embd), ref, atol=2e-2, rtol=2e-2)

    # Dropout sanity: roughly p=0.2 of outputs zeroed, rest scaled by 1/(1-p).
    zero_frac = float(jnp.mean(y_train == 0.0))
    assert 0.05 < zero_frac < 0.4, zero_frac
    assert bool(jnp.all(jnp.isfinite(y_train)))

    print("KERNEL_OK")
</pallas_src>

<mosaic_0001>
module attributes {stable_mosaic.version = 11 : i64} {
  func.func @_ffn_kernel(%arg0: i32, %arg1: memref<1xi32, #tpu.memory_space<smem>>, %arg2: memref<16x384xbf16, #tpu.memory_space<vmem>>, %arg3: memref<384x1536xbf16, #tpu.memory_space<vmem>>, %arg4: memref<1x1536xf32, #tpu.memory_space<vmem>>, %arg5: memref<1536x384xbf16, #tpu.memory_space<vmem>>, %arg6: memref<1x384xf32, #tpu.memory_space<vmem>>, %arg7: memref<16x384xf32, #tpu.memory_space<vmem>>) attributes {dimension_semantics = [#tpu.dimension_semantics<parallel>], iteration_bounds = array<i64: 1>, scalar_prefetch = 0 : i64, scratch_operands = 0 : i64, tpu.core_type = #tpu.core_type<tc>, window_params = [{transform_indices = @transform_0, window_bounds = array<i64: 1>}, {transform_indices = @transform_1, window_bounds = array<i64: 16, 384>}, {pipeline_mode = #tpu.pipeline_mode<synchronous>, transform_indices = @transform_2, window_bounds = array<i64: 384, 1536>}, {pipeline_mode = #tpu.pipeline_mode<synchronous>, transform_indices = @transform_3, window_bounds = array<i64: 1, 1536>}, {pipeline_mode = #tpu.pipeline_mode<synchronous>, transform_indices = @transform_4, window_bounds = array<i64: 1536, 384>}, {pipeline_mode = #tpu.pipeline_mode<synchronous>, transform_indices = @transform_5, window_bounds = array<i64: 1, 384>}, {transform_indices = @transform_6, window_bounds = array<i64: 16, 384>}]} {
    %c0 = arith.constant 0 : index
    %c0_0 = arith.constant 0 : index
    %0 = vector.load %arg2[%c0, %c0_0] : memref<16x384xbf16, #tpu.memory_space<vmem>>, vector<16x384xbf16>
    %c0_1 = arith.constant 0 : index
    %c0_2 = arith.constant 0 : index
    %1 = vector.load %arg3[%c0_1, %c0_2] : memref<384x1536xbf16, #tpu.memory_space<vmem>>, vector<384x1536xbf16>
    %cst = arith.constant dense<0.000000e+00> : vector<16x1536xf32>
    %2 = tpu.matmul %0, %1, %cst {dimension_numbers = #tpu.dot_dimension_numbers<[1], [0], [0], [1], [0, 0, 1, 1], [], []>} : vector<16x384xbf16>, vector<384x1536xbf16>, vector<16x1536xf32> -> vector<16x1536xf32>
    %c0_3 = arith.constant 0 : index
    %c0_4 = arith.constant 0 : index
    %3 = vector.load %arg4[%c0_3, %c0_4] : memref<1x1536xf32, #tpu.memory_space<vmem>>, vector<1x1536xf32>
    %4 = vector.broadcast %3 : vector<1x1536xf32> to vector<16x1536xf32>
    %5 = arith.addf %2, %4 : vector<16x1536xf32>
    %cst_5 = arith.constant 0.000000e+00 : f32
    %6 = vector.broadcast %cst_5 : f32 to vector<16x1536xf32>
    %7 = arith.maximumf %5, %6 : vector<16x1536xf32>
    %8 = arith.truncf %7 : vector<16x1536xf32> to vector<16x1536xbf16>
    %c0_6 = arith.constant 0 : index
    %c0_7 = arith.constant 0 : index
    %9 = vector.load %arg5[%c0_6, %c0_7] : memref<1536x384xbf16, #tpu.memory_space<vmem>>, vector<1536x384xbf16>
    %cst_8 = arith.constant dense<0.000000e+00> : vector<16x384xf32>
    %10 = tpu.matmul %8, %9, %cst_8 {dimension_numbers = #tpu.dot_dimension_numbers<[1], [0], [0], [1], [0, 0, 1, 1], [], []>} : vector<16x1536xbf16>, vector<1536x384xbf16>, vector<16x384xf32> -> vector<16x384xf32>
    %c0_9 = arith.constant 0 : index
    %c0_10 = arith.constant 0 : index
    %11 = vector.load %arg6[%c0_9, %c0_10] : memref<1x384xf32, #tpu.memory_space<vmem>>, vector<1x384xf32>
    %12 = vector.broadcast %11 : vector<1x384xf32> to vector<16x384xf32>
    %13 = arith.addf %10, %12 : vector<16x384xf32>
    %14 = tpu.iota {dimensions = array<i32: 0>} : vector<16x384xi32>
    %15 = tpu.iota {dimensions = array<i32: 1>} : vector<16x384xi32>
    %c16_i32 = arith.constant 16 : i32
    %16 = arith.muli %arg0, %c16_i32 : i32
    %17 = vector.broadcast %16 : i32 to vector<16x384xi32>
    %18 = arith.addi %14, %17 : vector<16x384xi32>
    %c384_i32 = arith.constant 384 : i32
    %19 = vector.broadcast %c384_i32 : i32 to vector<16x384xi32>
    %20 = arith.muli %18, %19 : vector<16x384xi32>
    %21 = arith.addi %20, %15 : vector<16x384xi32>
    %c0_11 = arith.constant 0 : index
    %22 = memref.load %arg1[%c0_11] : memref<1xi32, #tpu.memory_space<smem>>
    %23 = vector.broadcast %22 : i32 to vector<16x384xi32>
    %24 = arith.xori %21, %23 : vector<16x384xi32>
    %c16_i32_12 = arith.constant 16 : i32
    %25 = vector.broadcast %c16_i32_12 : i32 to vector<16x384xi32>
    %26 = arith.shrui %24, %25 : vector<16x384xi32>
    %27 = arith.xori %24, %26 : vector<16x384xi32>
    %c2146121005_i32 = arith.constant 2146121005 : i32
    %28 = vector.broadcast %c2146121005_i32 : i32 to vector<16x384xi32>
    %29 = arith.muli %27, %28 : vector<16x384xi32>
    %c15_i32 = arith.constant 15 : i32
    %30 = vector.broadcast %c15_i32 : i32 to vector<16x384xi32>
    %31 = arith.shrui %29, %30 : vector<16x384xi32>
    %32 = arith.xori %29, %31 : vector<16x384xi32>
    %c-2072627573_i32 = arith.constant -2072627573 : i32
    %33 = vector.broadcast %c-2072627573_i32 : i32 to vector<16x384xi32>
    %34 = arith.muli %32, %33 : vector<16x384xi32>
    %c16_i32_13 = arith.constant 16 : i32
    %35 = vector.broadcast %c16_i32_13 : i32 to vector<16x384xi32>
    %36 = arith.shrui %34, %35 : vector<16x384xi32>
    %37 = arith.xori %34, %36 : vector<16x384xi32>
    %c8_i32 = arith.constant 8 : i32
    %38 = vector.broadcast %c8_i32 : i32 to vector<16x384xi32>
    %39 = arith.shrui %37, %38 : vector<16x384xi32>
    %c3355443_i32 = arith.constant 3355443 : i32
    %40 = vector.broadcast %c3355443_i32 : i32 to vector<16x384xi32>
    %41 = arith.cmpi sge, %39, %40 : vector<16x384xi32>
    %cst_14 = arith.constant 1.250000e+00 : f32
    %42 = vector.broadcast %cst_14 : f32 to vector<16x384xf32>
    %43 = arith.mulf %13, %42 : vector<16x384xf32>
    %cst_15 = arith.constant 0.000000e+00 : f32
    %44 = vector.broadcast %cst_15 : f32 to vector<16x384xf32>
    %45 = arith.select %41, %43, %44 : vector<16x384xi1>, vector<16x384xf32>
    %c0_16 = arith.constant 0 : index
    %c0_17 = arith.constant 0 : index
    %46 = vector.load %arg7[%c0_16, %c0_17] : memref<16x384xf32, #tpu.memory_space<vmem>>, vector<16x384xf32>
    tpu.vector_store %arg7[%c0_16, %c0_17], %45 {strides = array<i32>} : memref<16x384xf32, #tpu.memory_space<vmem>>, vector<16x384xf32>,
    return
  }
  func.func @transform_0(%arg0: i32) -> i32 {
    %c0_i32 = arith.constant 0 : i32
    %c0_i32_0 = arith.constant 0 : i32
    return %c0_i32 : i32
  }
  func.func @transform_1(%arg0: i32) -> (i32, i32) {
    %c0_i32 = arith.constant 0 : i32
    %c0_i32_0 = arith.constant 0 : i32
    return %arg0, %c0_i32 : i32, i32
  }
  func.func @transform_2(%arg0: i32) -> (i32, i32) {
    %c0_i32 = arith.constant 0 : i32
    %c0_i32_0 = arith.constant 0 : i32
    %c0_i32_1 = arith.constant 0 : i32
    return %c0_i32, %c0_i32_0 : i32, i32
  }
  func.func @transform_3(%arg0: i32) -> (i32, i32) {
    %c0_i32 = arith.constant 0 : i32
    %c0_i32_0 = arith.constant 0 : i32
    %c0_i32_1 = arith.constant 0 : i32
    return %c0_i32, %c0_i32_0 : i32, i32
  }
  func.func @transform_4(%arg0: i32) -> (i32, i32) {
    %c0_i32 = arith.constant 0 : i32
    %c0_i32_0 = arith.constant 0 : i32
    %c0_i32_1 = arith.constant 0 : i32
    return %c0_i32, %c0_i32_0 : i32, i32
  }
  func.func @transform_5(%arg0: i32) -> (i32, i32) {
    %c0_i32 = arith.constant 0 : i32
    %c0_i32_0 = arith.constant 0 : i32
    %c0_i32_1 = arith.constant 0 : i32
    return %c0_i32, %c0_i32_0 : i32, i32
  }
  func.func @transform_6(%arg0: i32) -> (i32, i32) {
    %c0_i32 = arith.constant 0 : i32
    %c0_i32_0 = arith.constant 0 : i32
    return %arg0, %c0_i32 : i32, i32
  }
}

</mosaic_0001>

<llo_original>
// kernel: tpu_custom_call.1
$region0: #{tpu_custom_call.1}
  #allocation0 [shape = 'u32[]', space=smem, size = 0x4, offset = 0x4, fixed_abs, tag = 'smem constant byte address 0x4 - core index']
  #allocation1 [shape = 'u32[144,128]{1,0:T(1,128)}', space=vmem, size = 0x12000, scoped, tag = 'internal scratch']
  #allocation2 [shape = 's32[1]{0:T(128)S(6)}', space=smem, size = 0x200, scoped, tag = 'scoped memory for tpu_custom_call.1']
  %s0 = inlined_call_operand.<no memory space> [shape: s32[1], index: 0, kind: input, shape index: {}]
  %s1 = inlined_call_operand.hbm [shape: bf16[16,384], index: 1, kind: input, shape index: {}]
  %s2 = inlined_call_operand.hbm [shape: bf16[384,1536], index: 2, kind: input, shape index: {}]
  %s3 = inlined_call_operand.hbm [shape: f32[1,1536], index: 3, kind: input, shape index: {}]
  %s4 = inlined_call_operand.hbm [shape: bf16[1536,384], index: 4, kind: input, shape index: {}]
  %s5 = inlined_call_operand.hbm [shape: f32[1,384], index: 5, kind: input, shape index: {}]
  %s6 = inlined_call_operand.hbm [shape: f32[16,384], index: 6, kind: output, shape index: {}]
  %s7 = sld [smem:[#allocation0]]
  $region54: #{tpu_custom_call.1} parent=0
    _
  %s9 = ssub.s32 1, %s7
  %s10 = scalar_select 0, %s9, %s7
  %11 = sst [smem:[#allocation2]] %s0
  $region1: #{tpu_custom_call.1} parent=0
    #allocation3 [shape = 'u8[12288]{0}', space=vmem, size = 0x3000, scoped, tag = 'input window, operand 1, single buffered']
    #allocation4 [shape = 's32[1]{0}', space=sflag, size = 0x4, scoped, tag = 'scoped memory for tpu_custom_call.1']
    #allocation5 [shape = 's32[1]{0}', space=sflag, size = 0x4, scoped, tag = 'scoped memory for tpu_custom_call.1']
    #allocation6 [shape = 'u8[1179648]{0}', space=vmem, size = 0x120000, scoped, tag = 'input window, operand 2, single buffered']
    #allocation7 [shape = 's32[1]{0}', space=sflag, size = 0x4, scoped, tag = 'scoped memory for tpu_custom_call.1']
    #allocation8 [shape = 'u8[6144]{0}', space=vmem, size = 0x1800, scoped, tag = 'input window, operand 3, single buffered']
    #allocation9 [shape = 'u8[1179648]{0}', space=vmem, size = 0x120000, scoped, tag = 'input window, operand 4, single buffered']
    #allocation10 [shape = 's32[1]{0}', space=sflag, size = 0x4, scoped, tag = 'scoped memory for tpu_custom_call.1']
    #allocation11 [shape = 'u8[1536]{0}', space=vmem, size = 0x800, scoped, tag = 'input window, operand 5, single buffered']
    #allocation12 [shape = 'u8[24576]{0}', space=vmem, size = 0x6000, scoped, tag = 'output window, operand 0, single buffered']
    %12 = vsyncpa [#allocation4], 0
    %13 = vsyncpa [#allocation7], 0
    %14 = vsyncpa [#allocation10], 0
    %15 = vsyncpa [#allocation5], 0
    // Predicated region
    $region2: #{tpu_custom_call.1} parent=1 // pred_check
      _
    $region3: #{tpu_custom_call.1} parent=1 // pred_check_branch
      %17 = sbr.rel (0) target = $region5
    $region4: #{tpu_custom_call.1} parent=1 // pred_region
      _
    $region5: #{tpu_custom_call.1} parent=1 // pred_fallthru
      _
    // Predicated region
    $region6: #{tpu_custom_call.1} parent=1 // pred_check
      _
    $region7: #{tpu_custom_call.1} parent=1 // pred_check_branch
      %19 = sbr.rel (0) target = $region9
    $region8: #{tpu_custom_call.1} parent=1 // pred_region
      %s21 = ssub.s32 384, 384
      %22 = vsyncadd [#allocation4], %s21
      %s23 = sshll.u32 [#allocation3], 4
      %s24 = int_to_ptr.vmem [resolvable:$true] %s23
      %29 = dma.hbm_to_vmem [thread:$0]  %s1, 384, %s24, [#allocation4], 192, 192, 12
    $region9: #{tpu_custom_call.1} parent=1 // pred_fallthru
      _
    // Predicated region
    $region10: #{tpu_custom_call.1} parent=1 // pred_check
      _
    $region11: #{tpu_custom_call.1} parent=1 // pred_check_branch
      %31 = sbr.rel (0) target = $region13
    $region12: #{tpu_custom_call.1} parent=1 // pred_region
      %s33 = ssub.s32 36864, 36864
      %34 = vsyncadd [#allocation7], %s33
      %s35 = sshll.u32 [#allocation6], 4
      %s36 = int_to_ptr.vmem [resolvable:$true] %s35
      %41 = dma.hbm_to_vmem [thread:$0]  %s2, 36864, %s36, [#allocation7], 768, 768, 48
    $region13: #{tpu_custom_call.1} parent=1 // pred_fallthru
      _
    // Predicated region
    $region14: #{tpu_custom_call.1} parent=1 // pred_check
      _
    $region15: #{tpu_custom_call.1} parent=1 // pred_check_branch
      %43 = sbr.rel (0) target = $region17
    $region16: #{tpu_custom_call.1} parent=1 // pred_region
      %s45 = ssub.s32 192, 192
      %46 = vsyncadd [#allocation7], %s45
      %s48 = sshll.u32 [#allocation8], 4
      %s49 = int_to_ptr.vmem [resolvable:$true] %s48
      %51 = dma.hbm_to_vmem [thread:$0]  %s3, 192, %s49, [#allocation7]
    $region17: #{tpu_custom_call.1} parent=1 // pred_fallthru
      _
    // Predicated region
    $region18: #{tpu_custom_call.1} parent=1 // pred_check
      _
    $region19: #{tpu_custom_call.1} parent=1 // pred_check_branch
      %53 = sbr.rel (0) target = $region21
    $region20: #{tpu_custom_call.1} parent=1 // pred_region
      %s55 = ssub.s32 36864, 36864
      %56 = vsyncadd [#allocation10], %s55
      %s57 = sshll.u32 [#allocation9], 4
      %s58 = int_to_ptr.vmem [resolvable:$true] %s57
      %63 = dma.hbm_to_vmem [thread:$0]  %s4, 36864, %s58, [#allocation10], 192, 192, 12
    $region21: #{tpu_custom_call.1} parent=1 // pred_fallthru
      _
    // Predicated region
    $region22: #{tpu_custom_call.1} parent=1 // pred_check
      _
    $region23: #{tpu_custom_call.1} parent=1 // pred_check_branch
      %65 = sbr.rel (0) target = $region25
    $region24: #{tpu_custom_call.1} parent=1 // pred_region
      %s67 = ssub.s32 48, 48
      %68 = vsyncadd [#allocation10], %s67
      %s70 = sshll.u32 [#allocation11], 4
      %s71 = int_to_ptr.vmem [resolvable:$true] %s70
      %73 = dma.hbm_to_vmem [thread:$0]  %s5, 48, %s71, [#allocation10]
    $region25: #{tpu_custom_call.1} parent=1 // pred_fallthru
      _
    // Predicated region
    $region26: #{tpu_custom_call.1} parent=1 // pred_check
      _
    $region27: #{tpu_custom_call.1} parent=1 // pred_check_branch
      %75 = sbr.rel (0) target = $region29
    $region28: #{tpu_custom_call.1} parent=1 // pred_region
      %76 = dma.done [#allocation4], 384
    $region29: #{tpu_custom_call.1} parent=1 // pred_fallthru
      _
    // Predicated region
    $region30: #{tpu_custom_call.1} parent=1 // pred_check
      _
    $region31: #{tpu_custom_call.1} parent=1 // pred_check_branch
      %78 = sbr.rel (0) target = $region33
    $region32: #{tpu_custom_call.1} parent=1 // pred_region
      %79 = dma.done [#allocation7], 36864
    $region33: #{tpu_custom_call.1} parent=1 // pred_fallthru
      _
    // Predicated region
    $region34: #{tpu_custom_call.1} parent=1 // pred_check
      _
    $region35: #{tpu_custom_call.1} parent=1 // pred_check_branch
      %81 = sbr.rel (0) target = $region37
    $region36: #{tpu_custom_call.1} parent=1 // pred_region
      %82 = dma.done [#allocation7], 192
    $region37: #{tpu_custom_call.1} parent=1 // pred_fallthru
      _
    // Predicated region
    $region38: #{tpu_custom_call.1} parent=1 // pred_check
      _
    $region39: #{tpu_custom_call.1} parent=1 // pred_check_branch
      %84 = sbr.rel (0) target = $region41
    $region40: #{tpu_custom_call.1} parent=1 // pred_region
      %85 = dma.done [#allocation10], 36864
    $region41: #{tpu_custom_call.1} parent=1 // pred_fallthru
      _
    // Predicated region
    $region42: #{tpu_custom_call.1} parent=1 // pred_check
      _
    $region43: #{tpu_custom_call.1} parent=1 // pred_check_branch
      %87 = sbr.rel (0) target = $region45
    $region44: #{tpu_custom_call.1} parent=1 // pred_region
      %88 = dma.done [#allocation10], 48
    $region45: #{tpu_custom_call.1} parent=1 // pred_fallthru
      _
    %v90 = vld [vmem:[#allocation3] sm:$0xff]
    %v91 = vld [vmem:[#allocation3 + $0x8] sm:$0xf]
    %v92 = vld [vmem:[#allocation3 + $0xc] sm:$0xff]
    %v93 = vld [vmem:[#allocation3 + $0x14] sm:$0xf]
    %v94 = vld [vmem:[#allocation6] sm:$0xff]
    %v95 = vld [vmem:[#allocation6 + $0x8] sm:$0xff]
    %v96 = vld [vmem:[#allocation6 + $0x10] sm:$0xff]
    %v97 = vld [vmem:[#allocation6 + $0x18] sm:$0xff]
    %v98 = vld [vmem:[#allocation6 + $0x20] sm:$0xff]
    %v99 = vld [vmem:[#allocation6 + $0x28] sm:$0xff]
    %v100 = vld [vmem:[#allocation6 + $0x30] sm:$0xff]
    %v101 = vld [vmem:[#allocation6 + $0x38] sm:$0xff]
    %v102 = vld [vmem:[#allocation6 + $0x40] sm:$0xff]
    %v103 = vld [vmem:[#allocation6 + $0x48] sm:$0xff]
    %v104 = vld [vmem:[#allocation6 + $0x50] sm:$0xff]
    %v105 = vld [vmem:[#allocation6 + $0x58] sm:$0xff]
    %v106 = vld [vmem:[#allocation6 + $0x60] sm:$0xff]
    %v107 = vld [vmem:[#allocation6 + $0x68] sm:$0xff]
    %v108 = vld [vmem:[#allocation6 + $0x70] sm:$0xff]
    %v109 = vld [vmem:[#allocation6 + $0x78] sm:$0xff]
    %v110 = vld [vmem:[#allocation6 + $0x80] sm:$0xff]
    %v111 = vld [vmem:[#allocation6 + $0x88] sm:$0xff]
    %v112 = vld [vmem:[#allocation6 + $0x90] sm:$0xff]
    %v113 = vld [vmem:[#allocation6 + $0x98] sm:$0xff]
    %v114 = vld [vmem:[#allocation6 + $0xa0] sm:$0xff]
    %v115 = vld [vmem:[#allocation6 + $0xa8] sm:$0xff]
    %v116 = vld [vmem:[#allocation6 + $0xb0] sm:$0xff]
    %v117 = vld [vmem:[#allocation6 + $0xb8] sm:$0xff]
    %v118 = vld [vmem:[#allocation6 + $0xc0] sm:$0xff]
    %v119 = vld [vmem:[#allocation6 + $0xc8] sm:$0xff]
    %v120 = vld [vmem:[#allocation6 + $0xd0] sm:$0xff]
    %v121 = vld [vmem:[#allocation6 + $0xd8] sm:$0xff]
    %v122 = vld [vmem:[#allocation6 + $0xe0] sm:$0xff]
    %v123 = vld [vmem:[#allocation6 + $0xe8] sm:$0xff]
    %v124 = vld [vmem:[#allocation6 + $0xf0] sm:$0xff]
    %v125 = vld [vmem:[#allocation6 + $0xf8] sm:$0xff]
    %v126 = vld [vmem:[#allocation6 + $0x100] sm:$0xff]
    %v127 = vld [vmem:[#allocation6 + $0x108] sm:$0xff]
    %v128 = vld [vmem:[#allocation6 + $0x110] sm:$0xff]
    %v129 = vld [vmem:[#allocation6 + $0x118] sm:$0xff]
    %v130 = vld [vmem:[#allocation6 + $0x120] sm:$0xff]
    %v131 = vld [vmem:[#allocation6 + $0x128] sm:$0xff]
    %v132 = vld [vmem:[#allocation6 + $0x130] sm:$0xff]
    %v133 = vld [vmem:[#allocation6 + $0x138] sm:$0xff]
    %v134 = vld [vmem:[#allocation6 + $0x140] sm:$0xff]
    %v135 = vld [vmem:[#allocation6 + $0x148] sm:$0xff]
    %v136 = vld [vmem:[#allocation6 + $0x150] sm:$0xff]
    %v137 = vld [vmem:[#allocation6 + $0x158] sm:$0xff]
    %v138 = vld [vmem:[#allocation6 + $0x160] sm:$0xff]
    %v139 = vld [vmem:[#allocation6 + $0x168] sm:$0xff]
    %v140 = vld [vmem:[#allocation6 + $0x170] sm:$0xff]
    %v141 = vld [vmem:[#allocation6 + $0x178] sm:$0xff]
    %v142 = vld [vmem:[#allocation6 + $0x180] sm:$0xff]
    %v143 = vld [vmem:[#allocation6 + $0x188] sm:$0xff]
    %v144 = vld [vmem:[#allocation6 + $0x190] sm:$0xff]
    %v145 = vld [vmem:[#allocation6 + $0x198] sm:$0xff]
    %v146 = vld [vmem:[#allocation6 + $0x1a0] sm:$0xff]
    %v147 = vld [vmem:[#allocation6 + $0x1a8] sm:$0xff]
    %v148 = vld [vmem:[#allocation6 + $0x1b0] sm:$0xff]
    %v149 = vld [vmem:[#allocation6 + $0x1b8] sm:$0xff]
    %v150 = vld [vmem:[#allocation6 + $0x1c0] sm:$0xff]
    %v151 = vld [vmem:[#allocation6 + $0x1c8] sm:$0xff]
    %v152 = vld [vmem:[#allocation6 + $0x1d0] sm:$0xff]
    %v153 = vld [vmem:[#allocation6 + $0x1d8] sm:$0xff]
    %v154 = vld [vmem:[#allocation6 + $0x1e0] sm:$0xff]
    %v155 = vld [vmem:[#allocation6 + $0x1e8] sm:$0xff]
    %v156 = vld [vmem:[#allocation6 + $0x1f0] sm:$0xff]
    %v157 = vld [vmem:[#allocation6 + $0x1f8] sm:$0xff]
    %v158 = vld [vmem:[#allocation6 + $0x200] sm:$0xff]
    %v159 = vld [vmem:[#allocation6 + $0x208] sm:$0xff]
    %v160 = vld [vmem:[#allocation6 + $0x210] sm:$0xff]
    %v161 = vld [vmem:[#allocation6 + $0x218] sm:$0xff]
    %v162 = vld [vmem:[#allocation6 + $0x220] sm:$0xff]
    %v163 = vld [vmem:[#allocation6 + $0x228] sm:$0xff]
    %v164 = vld [vmem:[#allocation6 + $0x230] sm:$0xff]
    %v165 = vld [vmem:[#allocation6 + $0x238] sm:$0xff]
    %v166 = vld [vmem:[#allocation6 + $0x240] sm:$0xff]
    %v167 = vld [vmem:[#allocation6 + $0x248] sm:$0xff]
    %v168 = vld [vmem:[#allocation6 + $0x250] sm:$0xff]
    %v169 = vld [vmem:[#allocation6 + $0x258] sm:$0xff]
    %v170 = vld [vmem:[#allocation6 + $0x260] sm:$0xff]
    %v171 = vld [vmem:[#allocation6 + $0x268] sm:$0xff]
    %v172 = vld [vmem:[#allocation6 + $0x270] sm:$0xff]
    %v173 = vld [vmem:[#allocation6 + $0x278] sm:$0xff]
    %v174 = vld [vmem:[#allocation6 + $0x280] sm:$0xff]
    %v175 = vld [vmem:[#allocation6 + $0x288] sm:$0xff]
    %v176 = vld [vmem:[#allocation6 + $0x290] sm:$0xff]
    %v177 = vld [vmem:[#allocation6 + $0x298] sm:$0xff]
    %v178 = vld [vmem:[#allocation6 + $0x2a0] sm:$0xff]
    %v179 = vld [vmem:[#allocation6 + $0x2a8] sm:$0xff]
    %v180 = vld [vmem:[#allocation6 + $0x2b0] sm:$0xff]
    %v181 = vld [vmem:[#allocation6 + $0x2b8] sm:$0xff]
    %v182 = vld [vmem:[#allocation6 + $0x2c0] sm:$0xff]
    %v183 = vld [vmem:[#allocation6 + $0x2c8] sm:$0xff]
    %v184 = vld [vmem:[#allocation6 + $0x2d0] sm:$0xff]
    %v185 = vld [vmem:[#allocation6 + $0x2d8] sm:$0xff]
    %v186 = vld [vmem:[#allocation6 + $0x2e0] sm:$0xff]
    %v187 = vld [vmem:[#allocation6 + $0x2e8] sm:$0xff]
    %v188 = vld [vmem:[#allocation6 + $0x2f0] sm:$0xff]
    %v189 = vld [vmem:[#allocation6 + $0x2f8] sm:$0xff]
    %v190 = vld [vmem:[#allocation6 + $0x300] sm:$0xff]
    %v191 = vld [vmem:[#allocation6 + $0x308] sm:$0xff]
    %v192 = vld [vmem:[#allocation6 + $0x310] sm:$0xff]
    %v193 = vld [vmem:[#allocation6 + $0x318] sm:$0xff]
    %v194 = vld [vmem:[#allocation6 + $0x320] sm:$0xff]
    %v195 = vld [vmem:[#allocation6 + $0x328] sm:$0xff]
    %v196 = vld [vmem:[#allocation6 + $0x330] sm:$0xff]
    %v197 = vld [vmem:[#allocation6 + $0x338] sm:$0xff]
    %v198 = vld [vmem:[#allocation6 + $0x340] sm:$0xff]
    %v199 = vld [vmem:[#allocation6 + $0x348] sm:$0xff]
    %v200 = vld [vmem:[#allocation6 + $0x350] sm:$0xff]
    %v201 = vld [vmem:[#allocation6 + $0x358] sm:$0xff]
    %v202 = vld [vmem:[#allocation6 + $0x360] sm:$0xff]
    %v203 = vld [vmem:[#allocation6 + $0x368] sm:$0xff]
    %v204 = vld [vmem:[#allocation6 + $0x370] sm:$0xff]
    %v205 = vld [vmem:[#allocation6 + $0x378] sm:$0xff]
    %v206 = vld [vmem:[#allocation6 + $0x380] sm:$0xff]
    %v207 = vld [vmem:[#allocation6 + $0x388] sm:$0xff]
    %v208 = vld [vmem:[#allocation6 + $0x390] sm:$0xff]
    %v209 = vld [vmem:[#allocation6 + $0x398] sm:$0xff]
    %v210 = vld [vmem:[#allocation6 + $0x3a0] sm:$0xff]
    %v211 = vld [vmem:[#allocation6 + $0x3a8] sm:$0xff]
    %v212 = vld [vmem:[#allocation6 + $0x3b0] sm:$0xff]
    %v213 = vld [vmem:[#allocation6 + $0x3b8] sm:$0xff]
    %v214 = vld [vmem:[#allocation6 + $0x3c0] sm:$0xff]
    %v215 = vld [vmem:[#allocation6 + $0x3c8] sm:$0xff]
    %v216 = vld [vmem:[#allocation6 + $0x3d0] sm:$0xff]
    %v217 = vld [vmem:[#allocation6 + $0x3d8] sm:$0xff]
    %v218 = vld [vmem:[#allocation6 + $0x3e0] sm:$0xff]
    %v219 = vld [vmem:[#allocation6 + $0x3e8] sm:$0xff]
    %v220 = vld [vmem:[#allocation6 + $0x3f0] sm:$0xff]
    %v221 = vld [vmem:[#allocation6 + $0x3f8] sm:$0xff]
    %v222 = vld [vmem:[#allocation6 + $0x400] sm:$0xff]
    %v223 = vld [vmem:[#allocation6 + $0x408] sm:$0xff]
    %v224 = vld [vmem:[#allocation6 + $0x410] sm:$0xff]
    %v225 = vld [vmem:[#allocation6 + $0x418] sm:$0xff]
    %v226 = vld [vmem:[#allocation6 + $0x420] sm:$0xff]
    %v227 = vld [vmem:[#allocation6 + $0x428] sm:$0xff]
    %v228 = vld [vmem:[#allocation6 + $0x430] sm:$0xff]
    %v229 = vld [vmem:[#allocation6 + $0x438] sm:$0xff]
    %v230 = vld [vmem:[#allocation6 + $0x440] sm:$0xff]
    %v231 = vld [vmem:[#allocation6 + $0x448] sm:$0xff]
    %v232 = vld [vmem:[#allocation6 + $0x450] sm:$0xff]
    %v233 = vld [vmem:[#allocation6 + $0x458] sm:$0xff]
    %v234 = vld [vmem:[#allocation6 + $0x460] sm:$0xff]
    %v235 = vld [vmem:[#allocation6 + $0x468] sm:$0xff]
    %v236 = vld [vmem:[#allocation6 + $0x470] sm:$0xff]
    %v237 = vld [vmem:[#allocation6 + $0x478] sm:$0xff]
    %v238 = vld [vmem:[#allocation6 + $0x480] sm:$0xff]
    %v239 = vld [vmem:[#allocation6 + $0x488] sm:$0xff]
    %v240 = vld [vmem:[#allocation6 + $0x490] sm:$0xff]
    %v241 = vld [vmem:[#allocation6 + $0x498] sm:$0xff]
    %v242 = vld [vmem:[#allocation6 + $0x4a0] sm:$0xff]
    %v243 = vld [vmem:[#allocation6 + $0x4a8] sm:$0xff]
    %v244 = vld [vmem:[#allocation6 + $0x4b0] sm:$0xff]
    %v245 = vld [vmem:[#allocation6 + $0x4b8] sm:$0xff]
    %v246 = vld [vmem:[#allocation6 + $0x4c0] sm:$0xff]
    %v247 = vld [vmem:[#allocation6 + $0x4c8] sm:$0xff]
    %v248 = vld [vmem:[#allocation6 + $0x4d0] sm:$0xff]
    %v249 = vld [vmem:[#allocation6 + $0x4d8] sm:$0xff]
    %v250 = vld [vmem:[#allocation6 + $0x4e0] sm:$0xff]
    %v251 = vld [vmem:[#allocation6 + $0x4e8] sm:$0xff]
    %v252 = vld [vmem:[#allocation6 + $0x4f0] sm:$0xff]
    %v253 = vld [vmem:[#allocation6 + $0x4f8] sm:$0xff]
    %v254 = vld [vmem:[#allocation6 + $0x500] sm:$0xff]
    %v255 = vld [vmem:[#allocation6 + $0x508] sm:$0xff]
    %v256 = vld [vmem:[#allocation6 + $0x510] sm:$0xff]
    %v257 = vld [vmem:[#allocation6 + $0x518] sm:$0xff]
    %v258 = vld [vmem:[#allocation6 + $0x520] sm:$0xff]
    %v259 = vld [vmem:[#allocation6 + $0x528] sm:$0xff]
    %v260 = vld [vmem:[#allocation6 + $0x530] sm:$0xff]
    %v261 = vld [vmem:[#allocation6 + $0x538] sm:$0xff]
    %v262 = vld [vmem:[#allocation6 + $0x540] sm:$0xff]
    %v263 = vld [vmem:[#allocation6 + $0x548] sm:$0xff]
    %v264 = vld [vmem:[#allocation6 + $0x550] sm:$0xff]
    %v265 = vld [vmem:[#allocation6 + $0x558] sm:$0xff]
    %v266 = vld [vmem:[#allocation6 + $0x560] sm:$0xff]
    %v267 = vld [vmem:[#allocation6 + $0x568] sm:$0xff]
    %v268 = vld [vmem:[#allocation6 + $0x570] sm:$0xff]
    %v269 = vld [vmem:[#allocation6 + $0x578] sm:$0xff]
    %v270 = vld [vmem:[#allocation6 + $0x580] sm:$0xff]
    %v271 = vld [vmem:[#allocation6 + $0x588] sm:$0xff]
    %v272 = vld [vmem:[#allocation6 + $0x590] sm:$0xff]
    %v273 = vld [vmem:[#allocation6 + $0x598] sm:$0xff]
    %v274 = vld [vmem:[#allocation6 + $0x5a0] sm:$0xff]
    %v275 = vld [vmem:[#allocation6 + $0x5a8] sm:$0xff]
    %v276 = vld [vmem:[#allocation6 + $0x5b0] sm:$0xff]
    %v277 = vld [vmem:[#allocation6 + $0x5b8] sm:$0xff]
    %v278 = vld [vmem:[#allocation6 + $0x5c0] sm:$0xff]
    %v279 = vld [vmem:[#allocation6 + $0x5c8] sm:$0xff]
    %v280 = vld [vmem:[#allocation6 + $0x5d0] sm:$0xff]
    %v281 = vld [vmem:[#allocation6 + $0x5d8] sm:$0xff]
    %v282 = vld [vmem:[#allocation6 + $0x5e0] sm:$0xff]
    %v283 = vld [vmem:[#allocation6 + $0x5e8] sm:$0xff]
    %v284 = vld [vmem:[#allocation6 + $0x5f0] sm:$0xff]
    %v285 = vld [vmem:[#allocation6 + $0x5f8] sm:$0xff]
    %v286 = vld [vmem:[#allocation6 + $0x600] sm:$0xff]
    %v287 = vld [vmem:[#allocation6 + $0x608] sm:$0xff]
    %v288 = vld [vmem:[#allocation6 + $0x610] sm:$0xff]
    %v289 = vld [vmem:[#allocation6 + $0x618] sm:$0xff]
    %v290 = vld [vmem:[#allocation6 + $0x620] sm:$0xff]
    %v291 = vld [vmem:[#allocation6 + $0x628] sm:$0xff]
    %v292 = vld [vmem:[#allocation6 + $0x630] sm:$0xff]
    %v293 = vld [vmem:[#allocation6 + $0x638] sm:$0xff]
    %v294 = vld [vmem:[#allocation6 + $0x640] sm:$0xff]
    %v295 = vld [vmem:[#allocation6 + $0x648] sm:$0xff]
    %v296 = vld [vmem:[#allocation6 + $0x650] sm:$0xff]
    %v297 = vld [vmem:[#allocation6 + $0x658] sm:$0xff]
    %v298 = vld [vmem:[#allocation6 + $0x660] sm:$0xff]
    %v299 = vld [vmem:[#allocation6 + $0x668] sm:$0xff]
    %v300 = vld [vmem:[#allocation6 + $0x670] sm:$0xff]
    %v301 = vld [vmem:[#allocation6 + $0x678] sm:$0xff]
    %v302 = vld [vmem:[#allocation6 + $0x680] sm:$0xff]
    %v303 = vld [vmem:[#allocation6 + $0x688] sm:$0xff]
    %v304 = vld [vmem:[#allocation6 + $0x690] sm:$0xff]
    %v305 = vld [vmem:[#allocation6 + $0x698] sm:$0xff]
    %v306 = vld [vmem:[#allocation6 + $0x6a0] sm:$0xff]
    %v307 = vld [vmem:[#allocation6 + $0x6a8] sm:$0xff]
    %v308 = vld [vmem:[#allocation6 + $0x6b0] sm:$0xff]
    %v309 = vld [vmem:[#allocation6 + $0x6b8] sm:$0xff]
    %v310 = vld [vmem:[#allocation6 + $0x6c0] sm:$0xff]
    %v311 = vld [vmem:[#allocation6 + $0x6c8] sm:$0xff]
    %v312 = vld [vmem:[#allocation6 + $0x6d0] sm:$0xff]
    %v313 = vld [vmem:[#allocation6 + $0x6d8] sm:$0xff]
    %v314 = vld [vmem:[#allocation6 + $0x6e0] sm:$0xff]
    %v315 = vld [vmem:[#allocation6 + $0x6e8] sm:$0xff]
    %v316 = vld [vmem:[#allocation6 + $0x6f0] sm:$0xff]
    %v317 = vld [vmem:[#allocation6 + $0x6f8] sm:$0xff]
    %v318 = vld [vmem:[#allocation6 + $0x700] sm:$0xff]
    %v319 = vld [vmem:[#allocation6 + $0x708] sm:$0xff]
    %v320 = vld [vmem:[#allocation6 + $0x710] sm:$0xff]
    %v321 = vld [vmem:[#allocation6 + $0x718] sm:$0xff]
    %v322 = vld [vmem:[#allocation6 + $0x720] sm:$0xff]
    %v323 = vld [vmem:[#allocation6 + $0x728] sm:$0xff]
    %v324 = vld [vmem:[#allocation6 + $0x730] sm:$0xff]
    %v325 = vld [vmem:[#allocation6 + $0x738] sm:$0xff]
    %v326 = vld [vmem:[#allocation6 + $0x740] sm:$0xff]
    %v327 = vld [vmem:[#allocation6 + $0x748] sm:$0xff]
    %v328 = vld [vmem:[#allocation6 + $0x750] sm:$0xff]
    %v329 = vld [vmem:[#allocation6 + $0x758] sm:$0xff]
    %v330 = vld [vmem:[#allocation6 + $0x760] sm:$0xff]
    %v331 = vld [vmem:[#allocation6 + $0x768] sm:$0xff]
    %v332 = vld [vmem:[#allocation6 + $0x770] sm:$0xff]
    %v333 = vld [vmem:[#allocation6 + $0x778] sm:$0xff]
    %v334 = vld [vmem:[#allocation6 + $0x780] sm:$0xff]
    %v335 = vld [vmem:[#allocation6 + $0x788] sm:$0xff]
    %v336 = vld [vmem:[#allocation6 + $0x790] sm:$0xff]
    %v337 = vld [vmem:[#allocation6 + $0x798] sm:$0xff]
    %v338 = vld [vmem:[#allocation6 + $0x7a0] sm:$0xff]
    %v339 = vld [vmem:[#allocation6 + $0x7a8] sm:$0xff]
    %v340 = vld [vmem:[#allocation6 + $0x7b0] sm:$0xff]
    %v341 = vld [vmem:[#allocation6 + $0x7b8] sm:$0xff]
    %v342 = vld [vmem:[#allocation6 + $0x7c0] sm:$0xff]
    %v343 = vld [vmem:[#allocation6 + $0x7c8] sm:$0xff]
    %v344 = vld [vmem:[#allocation6 + $0x7d0] sm:$0xff]
    %v345 = vld [vmem:[#allocation6 + $0x7d8] sm:$0xff]
    %v346 = vld [vmem:[#allocation6 + $0x7e0] sm:$0xff]
    %v347 = vld [vmem:[#allocation6 + $0x7e8] sm:$0xff]
    %v348 = vld [vmem:[#allocation6 + $0x7f0] sm:$0xff]
    %v349 = vld [vmem:[#allocation6 + $0x7f8] sm:$0xff]
    %v350 = vld [vmem:[#allocation6 + $0x800] sm:$0xff]
    %v351 = vld [vmem:[#allocation6 + $0x808] sm:$0xff]
    %v352 = vld [vmem:[#allocation6 + $0x810] sm:$0xff]
    %v353 = vld [vmem:[#allocation6 + $0x818] sm:$0xff]
    %v354 = vld [vmem:[#allocation6 + $0x820] sm:$0xff]
    %v355 = vld [vmem:[#allocation6 + $0x828] sm:$0xff]
    %v356 = vld [vmem:[#allocation6 + $0x830] sm:$0xff]
    %v357 = vld [vmem:[#allocation6 + $0x838] sm:$0xff]
    %v358 = vld [vmem:[#allocation6 + $0x840] sm:$0xff]
    %v359 = vld [vmem:[#allocation6 + $0x848] sm:$0xff]
    %v360 = vld [vmem:[#allocation6 + $0x850] sm:$0xff]
    %v361 = vld [vmem:[#allocation6 + $0x858] sm:$0xff]
    %v362 = vld [vmem:[#allocation6 + $0x860] sm:$0xff]
    %v363 = vld [vmem:[#allocation6 + $0x868] sm:$0xff]
    %v364 = vld [vmem:[#allocation6 + $0x870] sm:$0xff]
    %v365 = vld [vmem:[#allocation6 + $0x878] sm:$0xff]
    %v366 = vld [vmem:[#allocation6 + $0x880] sm:$0xff]
    %v367 = vld [vmem:[#allocation6 + $0x888] sm:$0xff]
    %v368 = vld [vmem:[#allocation6 + $0x890] sm:$0xff]
    %v369 = vld [vmem:[#allocation6 + $0x898] sm:$0xff]
    %v370 = vld [vmem:[#allocation6 + $0x8a0] sm:$0xff]
    %v371 = vld [vmem:[#allocation6 + $0x8a8] sm:$0xff]
    %v372 = vld [vmem:[#allocation6 + $0x8b0] sm:$0xff]
    %v373 = vld [vmem:[#allocation6 + $0x8b8] sm:$0xff]
    %v374 = vld [vmem:[#allocation6 + $0x8c0] sm:$0xff]
    %v375 = vld [vmem:[#allocation6 + $0x8c8] sm:$0xff]
    %v376 = vld [vmem:[#allocation6 + $0x8d0] sm:$0xff]
    %v377 = vld [vmem:[#allocation6 + $0x8d8] sm:$0xff]
    %v378 = vld [vmem:[#allocation6 + $0x8e0] sm:$0xff]
    %v379 = vld [vmem:[#allocation6 + $0x8e8] sm:$0xff]
    %v380 = vld [vmem:[#allocation6 + $0x8f0] sm:$0xff]
    %v381 = vld [vmem:[#allocation6 + $0x8f8] sm:$0xff]
    %v382 = vld [vmem:[#allocation8] sm:$0xff]
    %v383 = vld [vmem:[#allocation8 + $0x8] sm:$0xf]
    %v386 = vlaneseq
    %v387 = vshrl.u32 %v386, 7
    %v388 = vsub.s32 0, %v387
    %v389 = vrot.slane %v382, %v388
    %v390 = vlaneseq
    %v391 = vshrl.u32 %v390, 7
    %v392 = vsub.s32 1, %v391
    %v393 = vrot.slane %v382, %v392
    %v394 = vlaneseq
    %v395 = vshrl.u32 %v394, 7
    %v396 = vsub.s32 2, %v395
    %v397 = vrot.slane %v382, %v396
    %v398 = vlaneseq
    %v399 = vshrl.u32 %v398, 7
    %v400 = vsub.s32 3, %v399
    %v401 = vrot.slane %v382, %v400
    %v402 = vlaneseq
    %v403 = vshrl.u32 %v402, 7
    %v404 = vsub.s32 4, %v403
    %v405 = vrot.slane %v382, %v404
    %v406 = vlaneseq
    %v407 = vshrl.u32 %v406, 7
    %v408 = vsub.s32 5, %v407
    %v409 = vrot.slane %v382, %v408
    %v410 = vlaneseq
    %v411 = vshrl.u32 %v410, 7
    %v412 = vsub.s32 6, %v411
    %v413 = vrot.slane %v382, %v412
    %v414 = vlaneseq
    %v415 = vshrl.u32 %v414, 7
    %v416 = vsub.s32 7, %v415
    %v417 = vrot.slane %v382, %v416
    %v418 = vlaneseq
    %v419 = vshrl.u32 %v418, 7
    %v420 = vsub.s32 0, %v419
    %v421 = vrot.slane %v383, %v420
    %v422 = vlaneseq
    %v423 = vshrl.u32 %v422, 7
    %v424 = vsub.s32 1, %v423
    %v425 = vrot.slane %v383, %v424
    %v426 = vlaneseq
    %v427 = vshrl.u32 %v426, 7
    %v428 = vsub.s32 2, %v427
    %v429 = vrot.slane %v383, %v428
    %v430 = vlaneseq
    %v431 = vshrl.u32 %v430, 7
    %v432 = vsub.s32 3, %v431
    %v433 = vrot.slane %v383, %v432
    %v450 = vunpack.c.l.b16 %v90
    %v451 = vunpack.c.h.b16 %v90
    %v452 = vunpack.c.l.b16 %v91
    %v453 = vunpack.c.l.b16 %v92
    %v454 = vunpack.c.h.b16 %v92
    %v455 = vunpack.c.l.b16 %v93
    %v456 = vpack.c.b16 %v453, %v450
    %v457 = vpack.c.b16 %v454, %v451
    %v458 = vpack.c.b16 %v455, %v452
    %v750 = vunpack.c.l.b16 %v94
    %v751 = vunpack.c.h.b16 %v94
    %v752 = vunpack.c.l.b16 %v95
    %v753 = vunpack.c.h.b16 %v95
    %v754 = vunpack.c.l.b16 %v96
    %v755 = vunpack.c.h.b16 %v96
    %v756 = vunpack.c.l.b16 %v97
    %v757 = vunpack.c.h.b16 %v97
    %v758 = vunpack.c.l.b16 %v98
    %v759 = vunpack.c.h.b16 %v98
    %v760 = vunpack.c.l.b16 %v99
    %v761 = vunpack.c.h.b16 %v99
    %v762 = vunpack.c.l.b16 %v100
    %v763 = vunpack.c.h.b16 %v100
    %v764 = vunpack.c.l.b16 %v101
    %v765 = vunpack.c.h.b16 %v101
    %v766 = vunpack.c.l.b16 %v102
    %v767 = vunpack.c.h.b16 %v102
    %v768 = vunpack.c.l.b16 %v103
    %v769 = vunpack.c.h.b16 %v103
    %v770 = vunpack.c.l.b16 %v104
    %v771 = vunpack.c.h.b16 %v104
    %v772 = vunpack.c.l.b16 %v105
    %v773 = vunpack.c.h.b16 %v105
    %v774 = vunpack.c.l.b16 %v106
    %v775 = vunpack.c.h.b16 %v106
    %v776 = vunpack.c.l.b16 %v107
    %v777 = vunpack.c.h.b16 %v107
    %v778 = vunpack.c.l.b16 %v108
    %v779 = vunpack.c.h.b16 %v108
    %v780 = vunpack.c.l.b16 %v109
    %v781 = vunpack.c.h.b16 %v109
    %v782 = vunpack.c.l.b16 %v110
    %v783 = vunpack.c.h.b16 %v110
    %v784 = vunpack.c.l.b16 %v111
    %v785 = vunpack.c.h.b16 %v111
    %v786 = vunpack.c.l.b16 %v112
    %v787 = vunpack.c.h.b16 %v112
    %v788 = vunpack.c.l.b16 %v113
    %v789 = vunpack.c.h.b16 %v113
    %v790 = vunpack.c.l.b16 %v114
    %v791 = vunpack.c.h.b16 %v114
    %v792 = vunpack.c.l.b16 %v115
    %v793 = vunpack.c.h.b16 %v115
    %v794 = vunpack.c.l.b16 %v116
    %v795 = vunpack.c.h.b16 %v116
    %v796 = vunpack.c.l.b16 %v117
    %v797 = vunpack.c.h.b16 %v117
    %v798 = vunpack.c.l.b16 %v118
    %v799 = vunpack.c.h.b16 %v118
    %v800 = vunpack.c.l.b16 %v119
    %v801 = vunpack.c.h.b16 %v119
    %v802 = vunpack.c.l.b16 %v120
    %v803 = vunpack.c.h.b16 %v120
    %v804 = vunpack.c.l.b16 %v121
    %v805 = vunpack.c.h.b16 %v121
    %v806 = vunpack.c.l.b16 %v122
    %v807 = vunpack.c.h.b16 %v122
    %v808 = vunpack.c.l.b16 %v123
    %v809 = vunpack.c.h.b16 %v123
    %v810 = vunpack.c.l.b16 %v124
    %v811 = vunpack.c.h.b16 %v124
    %v812 = vunpack.c.l.b16 %v125
    %v813 = vunpack.c.h.b16 %v125
    %v814 = vunpack.c.l.b16 %v126
    %v815 = vunpack.c.h.b16 %v126
    %v816 = vunpack.c.l.b16 %v127
    %v817 = vunpack.c.h.b16 %v127
    %v818 = vunpack.c.l.b16 %v128
    %v819 = vunpack.c.h.b16 %v128
    %v820 = vunpack.c.l.b16 %v129
    %v821 = vunpack.c.h.b16 %v129
    %v822 = vunpack.c.l.b16 %v130
    %v823 = vunpack.c.h.b16 %v130
    %v824 = vunpack.c.l.b16 %v131
    %v825 = vunpack.c.h.b16 %v131
    %v826 = vunpack.c.l.b16 %v132
    %v827 = vunpack.c.h.b16 %v132
    %v828 = vunpack.c.l.b16 %v133
    %v829 = vunpack.c.h.b16 %v133
    %v830 = vunpack.c.l.b16 %v134
    %v831 = vunpack.c.h.b16 %v134
    %v832 = vunpack.c.l.b16 %v135
    %v833 = vunpack.c.h.b16 %v135
    %v834 = vunpack.c.l.b16 %v136
    %v835 = vunpack.c.h.b16 %v136
    %v836 = vunpack.c.l.b16 %v137
    %v837 = vunpack.c.h.b16 %v137
    %v838 = vunpack.c.l.b16 %v138
    %v839 = vunpack.c.h.b16 %v138
    %v840 = vunpack.c.l.b16 %v139
    %v841 = vunpack.c.h.b16 %v139
    %v842 = vunpack.c.l.b16 %v140
    %v843 = vunpack.c.h.b16 %v140
    %v844 = vunpack.c.l.b16 %v141
    %v845 = vunpack.c.h.b16 %v141
    %v846 = vunpack.c.l.b16 %v142
    %v847 = vunpack.c.h.b16 %v142
    %v848 = vunpack.c.l.b16 %v143
    %v849 = vunpack.c.h.b16 %v143
    %v850 = vunpack.c.l.b16 %v144
    %v851 = vunpack.c.h.b16 %v144
    %v852 = vunpack.c.l.b16 %v145
    %v853 = vunpack.c.h.b16 %v145
    %v854 = vunpack.c.l.b16 %v146
    %v855 = vunpack.c.h.b16 %v146
    %v856 = vunpack.c.l.b16 %v147
    %v857 = vunpack.c.h.b16 %v147
    %v858 = vunpack.c.l.b16 %v148
    %v859 = vunpack.c.h.b16 %v148
    %v860 = vunpack.c.l.b16 %v149
    %v861 = vunpack.c.h.b16 %v149
    %v862 = vunpack.c.l.b16 %v150
    %v863 = vunpack.c.h.b16 %v150
    %v864 = vunpack.c.l.b16 %v151
    %v865 = vunpack.c.h.b16 %v151
    %v866 = vunpack.c.l.b16 %v152
    %v867 = vunpack.c.h.b16 %v152
    %v868 = vunpack.c.l.b16 %v153
    %v869 = vunpack.c.h.b16 %v153
    %v870 = vunpack.c.l.b16 %v154
    %v871 = vunpack.c.h.b16 %v154
    %v872 = vunpack.c.l.b16 %v155
    %v873 = vunpack.c.h.b16 %v155
    %v874 = vunpack.c.l.b16 %v156
    %v875 = vunpack.c.h.b16 %v156
    %v876 = vunpack.c.l.b16 %v157
    %v877 = vunpack.c.h.b16 %v157
    %v878 = vunpack.c.l.b16 %v158
    %v879 = vunpack.c.h.b16 %v158
    %v880 = vunpack.c.l.b16 %v159
    %v881 = vunpack.c.h.b16 %v159
    %v882 = vunpack.c.l.b16 %v160
    %v883 = vunpack.c.h.b16 %v160
    %v884 = vunpack.c.l.b16 %v161
    %v885 = vunpack.c.h.b16 %v161
    %v886 = vunpack.c.l.b16 %v162
    %v887 = vunpack.c.h.b16 %v162
    %v888 = vunpack.c.l.b16 %v163
    %v889 = vunpack.c.h.b16 %v163
    %v890 = vunpack.c.l.b16 %v164
    %v891 = vunpack.c.h.b16 %v164
    %v892 = vunpack.c.l.b16 %v165
    %v893 = vunpack.c.h.b16 %v165
    %v894 = vunpack.c.l.b16 %v166
    %v895 = vunpack.c.h.b16 %v166
    %v896 = vunpack.c.l.b16 %v167
    %v897 = vunpack.c.h.b16 %v167
    %v898 = vunpack.c.l.b16 %v168
    %v899 = vunpack.c.h.b16 %v168
    %v900 = vunpack.c.l.b16 %v169
    %v901 = vunpack.c.h.b16 %v169
    %v902 = vunpack.c.l.b16 %v170
    %v903 = vunpack.c.h.b16 %v170
    %v904 = vunpack.c.l.b16 %v171
    %v905 = vunpack.c.h.b16 %v171
    %v906 = vunpack.c.l.b16 %v172
    %v907 = vunpack.c.h.b16 %v172
    %v908 = vunpack.c.l.b16 %v173
    %v909 = vunpack.c.h.b16 %v173
    %v910 = vunpack.c.l.b16 %v174
    %v911 = vunpack.c.h.b16 %v174
    %v912 = vunpack.c.l.b16 %v175
    %v913 = vunpack.c.h.b16 %v175
    %v914 = vunpack.c.l.b16 %v176
    %v915 = vunpack.c.h.b16 %v176
    %v916 = vunpack.c.l.b16 %v177
    %v917 = vunpack.c.h.b16 %v177
    %v918 = vunpack.c.l.b16 %v178
    %v919 = vunpack.c.h.b16 %v178
    %v920 = vunpack.c.l.b16 %v179
    %v921 = vunpack.c.h.b16 %v179
    %v922 = vunpack.c.l.b16 %v180
    %v923 = vunpack.c.h.b16 %v180
    %v924 = vunpack.c.l.b16 %v181
    %v925 = vunpack.c.h.b16 %v181
    %v926 = vunpack.c.l.b16 %v182
    %v927 = vunpack.c.h.b16 %v182
    %v928 = vunpack.c.l.b16 %v183
    %v929 = vunpack.c.h.b16 %v183
    %v930 = vunpack.c.l.b16 %v184
    %v931 = vunpack.c.h.b16 %v184
    %v932 = vunpack.c.l.b16 %v185
    %v933 = vunpack.c.h.b16 %v185
    %v934 = vunpack.c.l.b16 %v186
    %v935 = vunpack.c.h.b16 %v186
    %v936 = vunpack.c.l.b16 %v187
    %v937 = vunpack.c.h.b16 %v187
    %v938 = vunpack.c.l.b16 %v188
    %v939 = vunpack.c.h.b16 %v188
    %v940 = vunpack.c.l.b16 %v189
    %v941 = vunpack.c.h.b16 %v189
    %v942 = vunpack.c.l.b16 %v190
    %v943 = vunpack.c.h.b16 %v190
    %v944 = vunpack.c.l.b16 %v191
    %v945 = vunpack.c.h.b16 %v191
    %v946 = vunpack.c.l.b16 %v192
    %v947 = vunpack.c.h.b16 %v192
    %v948 = vunpack.c.l.b16 %v193
    %v949 = vunpack.c.h.b16 %v193
    %v950 = vunpack.c.l.b16 %v194
    %v951 = vunpack.c.h.b16 %v194
    %v952 = vunpack.c.l.b16 %v195
    %v953 = vunpack.c.h.b16 %v195
    %v954 = vunpack.c.l.b16 %v196
    %v955 = vunpack.c.h.b16 %v196
    %v956 = vunpack.c.l.b16 %v197
    %v957 = vunpack.c.h.b16 %v197
    %v958 = vunpack.c.l.b16 %v198
    %v959 = vunpack.c.h.b16 %v198
    %v960 = vunpack.c.l.b16 %v199
    %v961 = vunpack.c.h.b16 %v199
    %v962 = vunpack.c.l.b16 %v200
    %v963 = vunpack.c.h.b16 %v200
    %v964 = vunpack.c.l.b16 %v201
    %v965 = vunpack.c.h.b16 %v201
    %v966 = vunpack.c.l.b16 %v202
    %v967 = vunpack.c.h.b16 %v202
    %v968 = vunpack.c.l.b16 %v203
    %v969 = vunpack.c.h.b16 %v203
    %v970 = vunpack.c.l.b16 %v204
    %v971 = vunpack.c.h.b16 %v204
    %v972 = vunpack.c.l.b16 %v205
    %v973 = vunpack.c.h.b16 %v205
    %v974 = vunpack.c.l.b16 %v206
    %v975 = vunpack.c.h.b16 %v206
    %v976 = vunpack.c.l.b16 %v207
    %v977 = vunpack.c.h.b16 %v207
    %v978 = vunpack.c.l.b16 %v208
    %v979 = vunpack.c.h.b16 %v208
    %v980 = vunpack.c.l.b16 %v209
    %v981 = vunpack.c.h.b16 %v209
    %v982 = vunpack.c.l.b16 %v210
    %v983 = vunpack.c.h.b16 %v210
    %v984 = vunpack.c.l.b16 %v211
    %v985 = vunpack.c.h.b16 %v211
    %v986 = vunpack.c.l.b16 %v212
    %v987 = vunpack.c.h.b16 %v212
    %v988 = vunpack.c.l.b16 %v213
    %v989 = vunpack.c.h.b16 %v213
    %v990 = vunpack.c.l.b16 %v214
    %v991 = vunpack.c.h.b16 %v214
    %v992 = vunpack.c.l.b16 %v215
    %v993 = vunpack.c.h.b16 %v215
    %v994 = vunpack.c.l.b16 %v216
    %v995 = vunpack.c.h.b16 %v216
    %v996 = vunpack.c.l.b16 %v217
    %v997 = vunpack.c.h.b16 %v217
    %v998 = vunpack.c.l.b16 %v218
    %v999 = vunpack.c.h.b16 %v218
    %v1000 = vunpack.c.l.b16 %v219
    %v1001 = vunpack.c.h.b16 %v219
    %v1002 = vunpack.c.l.b16 %v220
    %v1003 = vunpack.c.h.b16 %v220
    %v1004 = vunpack.c.l.b16 %v221
    %v1005 = vunpack.c.h.b16 %v221
    %v1006 = vunpack.c.l.b16 %v222
    %v1007 = vunpack.c.h.b16 %v222
    %v1008 = vunpack.c.l.b16 %v223
    %v1009 = vunpack.c.h.b16 %v223
    %v1010 = vunpack.c.l.b16 %v224
    %v1011 = vunpack.c.h.b16 %v224
    %v1012 = vunpack.c.l.b16 %v225
    %v1013 = vunpack.c.h.b16 %v225
    %v1014 = vunpack.c.l.b16 %v226
    %v1015 = vunpack.c.h.b16 %v226
    %v1016 = vunpack.c.l.b16 %v227
    %v1017 = vunpack.c.h.b16 %v227
    %v1018 = vunpack.c.l.b16 %v228
    %v1019 = vunpack.c.h.b16 %v228
    %v1020 = vunpack.c.l.b16 %v229
    %v1021 = vunpack.c.h.b16 %v229
    %v1022 = vunpack.c.l.b16 %v230
    %v1023 = vunpack.c.h.b16 %v230
    %v1024 = vunpack.c.l.b16 %v231
    %v1025 = vunpack.c.h.b16 %v231
    %v1026 = vunpack.c.l.b16 %v232
    %v1027 = vunpack.c.h.b16 %v232
    %v1028 = vunpack.c.l.b16 %v233
    %v1029 = vunpack.c.h.b16 %v233
    %v1030 = vunpack.c.l.b16 %v234
    %v1031 = vunpack.c.h.b16 %v234
    %v1032 = vunpack.c.l.b16 %v235
    %v1033 = vunpack.c.h.b16 %v235
    %v1034 = vunpack.c.l.b16 %v236
    %v1035 = vunpack.c.h.b16 %v236
    %v1036 = vunpack.c.l.b16 %v237
    %v1037 = vunpack.c.h.b16 %v237
    %v1038 = vunpack.c.l.b16 %v238
    %v1039 = vunpack.c.h.b16 %v238
    %v1040 = vunpack.c.l.b16 %v239
    %v1041 = vunpack.c.h.b16 %v239
    %v1042 = vunpack.c.l.b16 %v240
    %v1043 = vunpack.c.h.b16 %v240
    %v1044 = vunpack.c.l.b16 %v241
    %v1045 = vunpack.c.h.b16 %v241
    %v1046 = vunpack.c.l.b16 %v242
    %v1047 = vunpack.c.h.b16 %v242
    %v1048 = vunpack.c.l.b16 %v243
    %v1049 = vunpack.c.h.b16 %v243
    %v1050 = vunpack.c.l.b16 %v244
    %v1051 = vunpack.c.h.b16 %v244
    %v1052 = vunpack.c.l.b16 %v245
    %v1053 = vunpack.c.h.b16 %v245
    %v1054 = vunpack.c.l.b16 %v246
    %v1055 = vunpack.c.h.b16 %v246
    %v1056 = vunpack.c.l.b16 %v247
    %v1057 = vunpack.c.h.b16 %v247
    %v1058 = vunpack.c.l.b16 %v248
    %v1059 = vunpack.c.h.b16 %v248
    %v1060 = vunpack.c.l.b16 %v249
    %v1061 = vunpack.c.h.b16 %v249
    %v1062 = vunpack.c.l.b16 %v250
    %v1063 = vunpack.c.h.b16 %v250
    %v1064 = vunpack.c.l.b16 %v251
    %v1065 = vunpack.c.h.b16 %v251
    %v1066 = vunpack.c.l.b16 %v252
    %v1067 = vunpack.c.h.b16 %v252
    %v1068 = vunpack.c.l.b16 %v253
    %v1069 = vunpack.c.h.b16 %v253
    %v1070 = vunpack.c.l.b16 %v254
    %v1071 = vunpack.c.h.b16 %v254
    %v1072 = vunpack.c.l.b16 %v255
    %v1073 = vunpack.c.h.b16 %v255
    %v1074 = vunpack.c.l.b16 %v256
    %v1075 = vunpack.c.h.b16 %v256
    %v1076 = vunpack.c.l.b16 %v257
    %v1077 = vunpack.c.h.b16 %v257
    %v1078 = vunpack.c.l.b16 %v258
    %v1079 = vunpack.c.h.b16 %v258
    %v1080 = vunpack.c.l.b16 %v259
    %v1081 = vunpack.c.h.b16 %v259
    %v1082 = vunpack.c.l.b16 %v260
    %v1083 = vunpack.c.h.b16 %v260
    %v1084 = vunpack.c.l.b16 %v261
    %v1085 = vunpack.c.h.b16 %v261
    %v1086 = vunpack.c.l.b16 %v262
    %v1087 = vunpack.c.h.b16 %v262
    %v1088 = vunpack.c.l.b16 %v263
    %v1089 = vunpack.c.h.b16 %v263
    %v1090 = vunpack.c.l.b16 %v264
    %v1091 = vunpack.c.h.b16 %v264
    %v1092 = vunpack.c.l.b16 %v265
    %v1093 = vunpack.c.h.b16 %v265
    %v1094 = vunpack.c.l.b16 %v266
    %v1095 = vunpack.c.h.b16 %v266
    %v1096 = vunpack.c.l.b16 %v267
    %v1097 = vunpack.c.h.b16 %v267
    %v1098 = vunpack.c.l.b16 %v268
    %v1099 = vunpack.c.h.b16 %v268
    %v1100 = vunpack.c.l.b16 %v269
    %v1101 = vunpack.c.h.b16 %v269
    %v1102 = vunpack.c.l.b16 %v270
    %v1103 = vunpack.c.h.b16 %v270
    %v1104 = vunpack.c.l.b16 %v271
    %v1105 = vunpack.c.h.b16 %v271
    %v1106 = vunpack.c.l.b16 %v272
    %v1107 = vunpack.c.h.b16 %v272
    %v1108 = vunpack.c.l.b16 %v273
    %v1109 = vunpack.c.h.b16 %v273
    %v1110 = vunpack.c.l.b16 %v274
    %v1111 = vunpack.c.h.b16 %v274
    %v1112 = vunpack.c.l.b16 %v275
    %v1113 = vunpack.c.h.b16 %v275
    %v1114 = vunpack.c.l.b16 %v276
    %v1115 = vunpack.c.h.b16 %v276
    %v1116 = vunpack.c.l.b16 %v277
    %v1117 = vunpack.c.h.b16 %v277
    %v1118 = vunpack.c.l.b16 %v278
    %v1119 = vunpack.c.h.b16 %v278
    %v1120 = vunpack.c.l.b16 %v279
    %v1121 = vunpack.c.h.b16 %v279
    %v1122 = vunpack.c.l.b16 %v280
    %v1123 = vunpack.c.h.b16 %v280
    %v1124 = vunpack.c.l.b16 %v281
    %v1125 = vunpack.c.h.b16 %v281
    %v1126 = vunpack.c.l.b16 %v282
    %v1127 = vunpack.c.h.b16 %v282
    %v1128 = vunpack.c.l.b16 %v283
    %v1129 = vunpack.c.h.b16 %v283
    %v1130 = vunpack.c.l.b16 %v284
    %v1131 = vunpack.c.h.b16 %v284
    %v1132 = vunpack.c.l.b16 %v285
    %v1133 = vunpack.c.h.b16 %v285
    %v1134 = vunpack.c.l.b16 %v286
    %v1135 = vunpack.c.h.b16 %v286
    %v1136 = vunpack.c.l.b16 %v287
    %v1137 = vunpack.c.h.b16 %v287
    %v1138 = vunpack.c.l.b16 %v288
    %v1139 = vunpack.c.h.b16 %v288
    %v1140 = vunpack.c.l.b16 %v289
    %v1141 = vunpack.c.h.b16 %v289
    %v1142 = vunpack.c.l.b16 %v290
    %v1143 = vunpack.c.h.b16 %v290
    %v1144 = vunpack.c.l.b16 %v291
    %v1145 = vunpack.c.h.b16 %v291
    %v1146 = vunpack.c.l.b16 %v292
    %v1147 = vunpack.c.h.b16 %v292
    %v1148 = vunpack.c.l.b16 %v293
    %v1149 = vunpack.c.h.b16 %v293
    %v1150 = vunpack.c.l.b16 %v294
    %v1151 = vunpack.c.h.b16 %v294
    %v1152 = vunpack.c.l.b16 %v295
    %v1153 = vunpack.c.h.b16 %v295
    %v1154 = vunpack.c.l.b16 %v296
    %v1155 = vunpack.c.h.b16 %v296
    %v1156 = vunpack.c.l.b16 %v297
    %v1157 = vunpack.c.h.b16 %v297
    %v1158 = vunpack.c.l.b16 %v298
    %v1159 = vunpack.c.h.b16 %v298
    %v1160 = vunpack.c.l.b16 %v299
    %v1161 = vunpack.c.h.b16 %v299
    %v1162 = vunpack.c.l.b16 %v300
    %v1163 = vunpack.c.h.b16 %v300
    %v1164 = vunpack.c.l.b16 %v301
    %v1165 = vunpack.c.h.b16 %v301
    %v1166 = vunpack.c.l.b16 %v302
    %v1167 = vunpack.c.h.b16 %v302
    %v1168 = vunpack.c.l.b16 %v303
    %v1169 = vunpack.c.h.b16 %v303
    %v1170 = vunpack.c.l.b16 %v304
    %v1171 = vunpack.c.h.b16 %v304
    %v1172 = vunpack.c.l.b16 %v305
    %v1173 = vunpack.c.h.b16 %v305
    %v1174 = vunpack.c.l.b16 %v306
    %v1175 = vunpack.c.h.b16 %v306
    %v1176 = vunpack.c.l.b16 %v307
    %v1177 = vunpack.c.h.b16 %v307
    %v1178 = vunpack.c.l.b16 %v308
    %v1179 = vunpack.c.h.b16 %v308
    %v1180 = vunpack.c.l.b16 %v309
    %v1181 = vunpack.c.h.b16 %v309
    %v1182 = vunpack.c.l.b16 %v310
    %v1183 = vunpack.c.h.b16 %v310
    %v1184 = vunpack.c.l.b16 %v311
    %v1185 = vunpack.c.h.b16 %v311
    %v1186 = vunpack.c.l.b16 %v312
    %v1187 = vunpack.c.h.b16 %v312
    %v1188 = vunpack.c.l.b16 %v313
    %v1189 = vunpack.c.h.b16 %v313
    %v1190 = vunpack.c.l.b16 %v314
    %v1191 = vunpack.c.h.b16 %v314
    %v1192 = vunpack.c.l.b16 %v315
    %v1193 = vunpack.c.h.b16 %v315
    %v1194 = vunpack.c.l.b16 %v316
    %v1195 = vunpack.c.h.b16 %v316
    %v1196 = vunpack.c.l.b16 %v317
    %v1197 = vunpack.c.h.b16 %v317
    %v1198 = vunpack.c.l.b16 %v318
    %v1199 = vunpack.c.h.b16 %v318
    %v1200 = vunpack.c.l.b16 %v319
    %v1201 = vunpack.c.h.b16 %v319
    %v1202 = vunpack.c.l.b16 %v320
    %v1203 = vunpack.c.h.b16 %v320
    %v1204 = vunpack.c.l.b16 %v321
    %v1205 = vunpack.c.h.b16 %v321
    %v1206 = vunpack.c.l.b16 %v322
    %v1207 = vunpack.c.h.b16 %v322
    %v1208 = vunpack.c.l.b16 %v323
    %v1209 = vunpack.c.h.b16 %v323
    %v1210 = vunpack.c.l.b16 %v324
    %v1211 = vunpack.c.h.b16 %v324
    %v1212 = vunpack.c.l.b16 %v325
    %v1213 = vunpack.c.h.b16 %v325
    %v1214 = vunpack.c.l.b16 %v326
    %v1215 = vunpack.c.h.b16 %v326
    %v1216 = vunpack.c.l.b16 %v327
    %v1217 = vunpack.c.h.b16 %v327
    %v1218 = vunpack.c.l.b16 %v328
    %v1219 = vunpack.c.h.b16 %v328
    %v1220 = vunpack.c.l.b16 %v329
    %v1221 = vunpack.c.h.b16 %v329
    %v1222 = vunpack.c.l.b16 %v330
    %v1223 = vunpack.c.h.b16 %v330
    %v1224 = vunpack.c.l.b16 %v331
    %v1225 = vunpack.c.h.b16 %v331
    %v1226 = vunpack.c.l.b16 %v332
    %v1227 = vunpack.c.h.b16 %v332
    %v1228 = vunpack.c.l.b16 %v333
    %v1229 = vunpack.c.h.b16 %v333
    %v1230 = vunpack.c.l.b16 %v334
    %v1231 = vunpack.c.h.b16 %v334
    %v1232 = vunpack.c.l.b16 %v335
    %v1233 = vunpack.c.h.b16 %v335
    %v1234 = vunpack.c.l.b16 %v336
    %v1235 = vunpack.c.h.b16 %v336
    %v1236 = vunpack.c.l.b16 %v337
    %v1237 = vunpack.c.h.b16 %v337
    %v1238 = vunpack.c.l.b16 %v338
    %v1239 = vunpack.c.h.b16 %v338
    %v1240 = vunpack.c.l.b16 %v339
    %v1241 = vunpack.c.h.b16 %v339
    %v1242 = vunpack.c.l.b16 %v340
    %v1243 = vunpack.c.h.b16 %v340
    %v1244 = vunpack.c.l.b16 %v341
    %v1245 = vunpack.c.h.b16 %v341
    %v1246 = vunpack.c.l.b16 %v342
    %v1247 = vunpack.c.h.b16 %v342
    %v1248 = vunpack.c.l.b16 %v343
    %v1249 = vunpack.c.h.b16 %v343
    %v1250 = vunpack.c.l.b16 %v344
    %v1251 = vunpack.c.h.b16 %v344
    %v1252 = vunpack.c.l.b16 %v345
    %v1253 = vunpack.c.h.b16 %v345
    %v1254 = vunpack.c.l.b16 %v346
    %v1255 = vunpack.c.h.b16 %v346
    %v1256 = vunpack.c.l.b16 %v347
    %v1257 = vunpack.c.h.b16 %v347
    %v1258 = vunpack.c.l.b16 %v348
    %v1259 = vunpack.c.h.b16 %v348
    %v1260 = vunpack.c.l.b16 %v349
    %v1261 = vunpack.c.h.b16 %v349
    %v1262 = vunpack.c.l.b16 %v350
    %v1263 = vunpack.c.h.b16 %v350
    %v1264 = vunpack.c.l.b16 %v351
    %v1265 = vunpack.c.h.b16 %v351
    %v1266 = vunpack.c.l.b16 %v352
    %v1267 = vunpack.c.h.b16 %v352
    %v1268 = vunpack.c.l.b16 %v353
    %v1269 = vunpack.c.h.b16 %v353
    %v1270 = vunpack.c.l.b16 %v354
    %v1271 = vunpack.c.h.b16 %v354
    %v1272 = vunpack.c.l.b16 %v355
    %v1273 = vunpack.c.h.b16 %v355
    %v1274 = vunpack.c.l.b16 %v356
    %v1275 = vunpack.c.h.b16 %v356
    %v1276 = vunpack.c.l.b16 %v357
    %v1277 = vunpack.c.h.b16 %v357
    %v1278 = vunpack.c.l.b16 %v358
    %v1279 = vunpack.c.h.b16 %v358
    %v1280 = vunpack.c.l.b16 %v359
    %v1281 = vunpack.c.h.b16 %v359
    %v1282 = vunpack.c.l.b16 %v360
    %v1283 = vunpack.c.h.b16 %v360
    %v1284 = vunpack.c.l.b16 %v361
    %v1285 = vunpack.c.h.b16 %v361
    %v1286 = vunpack.c.l.b16 %v362
    %v1287 = vunpack.c.h.b16 %v362
    %v1288 = vunpack.c.l.b16 %v363
    %v1289 = vunpack.c.h.b16 %v363
    %v1290 = vunpack.c.l.b16 %v364
    %v1291 = vunpack.c.h.b16 %v364
    %v1292 = vunpack.c.l.b16 %v365
    %v1293 = vunpack.c.h.b16 %v365
    %v1294 = vunpack.c.l.b16 %v366
    %v1295 = vunpack.c.h.b16 %v366
    %v1296 = vunpack.c.l.b16 %v367
    %v1297 = vunpack.c.h.b16 %v367
    %v1298 = vunpack.c.l.b16 %v368
    %v1299 = vunpack.c.h.b16 %v368
    %v1300 = vunpack.c.l.b16 %v369
    %v1301 = vunpack.c.h.b16 %v369
    %v1302 = vunpack.c.l.b16 %v370
    %v1303 = vunpack.c.h.b16 %v370
    %v1304 = vunpack.c.l.b16 %v371
    %v1305 = vunpack.c.h.b16 %v371
    %v1306 = vunpack.c.l.b16 %v372
    %v1307 = vunpack.c.h.b16 %v372
    %v1308 = vunpack.c.l.b16 %v373
    %v1309 = vunpack.c.h.b16 %v373
    %v1310 = vunpack.c.l.b16 %v374
    %v1311 = vunpack.c.h.b16 %v374
    %v1312 = vunpack.c.l.b16 %v375
    %v1313 = vunpack.c.h.b16 %v375
    %v1314 = vunpack.c.l.b16 %v376
    %v1315 = vunpack.c.h.b16 %v376
    %v1316 = vunpack.c.l.b16 %v377
    %v1317 = vunpack.c.h.b16 %v377
    %v1318 = vunpack.c.l.b16 %v378
    %v1319 = vunpack.c.h.b16 %v378
    %v1320 = vunpack.c.l.b16 %v379
    %v1321 = vunpack.c.h.b16 %v379
    %v1322 = vunpack.c.l.b16 %v380
    %v1323 = vunpack.c.h.b16 %v380
    %v1324 = vunpack.c.l.b16 %v381
    %v1325 = vunpack.c.h.b16 %v381
    %v1326 = vpack.c.b16 %v762, %v750
    %v1327 = vpack.c.b16 %v763, %v751
    %v1328 = vpack.c.b16 %v764, %v752
    %v1329 = vpack.c.b16 %v765, %v753
    %v1330 = vpack.c.b16 %v766, %v754
    %v1331 = vpack.c.b16 %v767, %v755
    %v1332 = vpack.c.b16 %v768, %v756
    %v1333 = vpack.c.b16 %v769, %v757
    %v1334 = vpack.c.b16 %v770, %v758
    %v1335 = vpack.c.b16 %v771, %v759
    %v1336 = vpack.c.b16 %v772, %v760
    %v1337 = vpack.c.b16 %v773, %v761
    %v1338 = vpack.c.b16 %v786, %v774
    %v1339 = vpack.c.b16 %v787, %v775
    %v1340 = vpack.c.b16 %v788, %v776
    %v1341 = vpack.c.b16 %v789, %v777
    %v1342 = vpack.c.b16 %v790, %v778
    %v1343 = vpack.c.b16 %v791, %v779
    %v1344 = vpack.c.b16 %v792, %v780
    %v1345 = vpack.c.b16 %v793, %v781
    %v1346 = vpack.c.b16 %v794, %v782
    %v1347 = vpack.c.b16 %v795, %v783
    %v1348 = vpack.c.b16 %v796, %v784
    %v1349 = vpack.c.b16 %v797, %v785
    %v1350 = vpack.c.b16 %v810, %v798
    %v1351 = vpack.c.b16 %v811, %v799
    %v1352 = vpack.c.b16 %v812, %v800
    %v1353 = vpack.c.b16 %v813, %v801
    %v1354 = vpack.c.b16 %v814, %v802
    %v1355 = vpack.c.b16 %v815, %v803
    %v1356 = vpack.c.b16 %v816, %v804
    %v1357 = vpack.c.b16 %v817, %v805
    %v1358 = vpack.c.b16 %v818, %v806
    %v1359 = vpack.c.b16 %v819, %v807
    %v1360 = vpack.c.b16 %v820, %v808
    %v1361 = vpack.c.b16 %v821, %v809
    %v1362 = vpack.c.b16 %v834, %v822
    %v1363 = vpack.c.b16 %v835, %v823
    %v1364 = vpack.c.b16 %v836, %v824
    %v1365 = vpack.c.b16 %v837, %v825
    %v1366 = vpack.c.b16 %v838, %v826
    %v1367 = vpack.c.b16 %v839, %v827
    %v1368 = vpack.c.b16 %v840, %v828
    %v1369 = vpack.c.b16 %v841, %v829
    %v1370 = vpack.c.b16 %v842, %v830
    %v1371 = vpack.c.b16 %v843, %v831
    %v1372 = vpack.c.b16 %v844, %v832
    %v1373 = vpack.c.b16 %v845, %v833
    %v1374 = vpack.c.b16 %v858, %v846
    %v1375 = vpack.c.b16 %v859, %v847
    %v1376 = vpack.c.b16 %v860, %v848
    %v1377 = vpack.c.b16 %v861, %v849
    %v1378 = vpack.c.b16 %v862, %v850
    %v1379 = vpack.c.b16 %v863, %v851
    %v1380 = vpack.c.b16 %v864, %v852
    %v1381 = vpack.c.b16 %v865, %v853
    %v1382 = vpack.c.b16 %v866, %v854
    %v1383 = vpack.c.b16 %v867, %v855
    %v1384 = vpack.c.b16 %v868, %v856
    %v1385 = vpack.c.b16 %v869, %v857
    %v1386 = vpack.c.b16 %v882, %v870
    %v1387 = vpack.c.b16 %v883, %v871
    %v1388 = vpack.c.b16 %v884, %v872
    %v1389 = vpack.c.b16 %v885, %v873
    %v1390 = vpack.c.b16 %v886, %v874
    %v1391 = vpack.c.b16 %v887, %v875
    %v1392 = vpack.c.b16 %v888, %v876
    %v1393 = vpack.c.b16 %v889, %v877
    %v1394 = vpack.c.b16 %v890, %v878
    %v1395 = vpack.c.b16 %v891, %v879
    %v1396 = vpack.c.b16 %v892, %v880
    %v1397 = vpack.c.b16 %v893, %v881
    %v1398 = vpack.c.b16 %v906, %v894
    %v1399 = vpack.c.b16 %v907, %v895
    %v1400 = vpack.c.b16 %v908, %v896
    %v1401 = vpack.c.b16 %v909, %v897
    %v1402 = vpack.c.b16 %v910, %v898
    %v1403 = vpack.c.b16 %v911, %v899
    %v1404 = vpack.c.b16 %v912, %v900
    %v1405 = vpack.c.b16 %v913, %v901
    %v1406 = vpack.c.b16 %v914, %v902
    %v1407 = vpack.c.b16 %v915, %v903
    %v1408 = vpack.c.b16 %v916, %v904
    %v1409 = vpack.c.b16 %v917, %v905
    %v1410 = vpack.c.b16 %v930, %v918
    %v1411 = vpack.c.b16 %v931, %v919
    %v1412 = vpack.c.b16 %v932, %v920
    %v1413 = vpack.c.b16 %v933, %v921
    %v1414 = vpack.c.b16 %v934, %v922
    %v1415 = vpack.c.b16 %v935, %v923
    %v1416 = vpack.c.b16 %v936, %v924
    %v1417 = vpack.c.b16 %v937, %v925
    %v1418 = vpack.c.b16 %v938, %v926
    %v1419 = vpack.c.b16 %v939, %v927
    %v1420 = vpack.c.b16 %v940, %v928
    %v1421 = vpack.c.b16 %v941, %v929
    %v1422 = vpack.c.b16 %v954, %v942
    %v1423 = vpack.c.b16 %v955, %v943
    %v1424 = vpack.c.b16 %v956, %v944
    %v1425 = vpack.c.b16 %v957, %v945
    %v1426 = vpack.c.b16 %v958, %v946
    %v1427 = vpack.c.b16 %v959, %v947
    %v1428 = vpack.c.b16 %v960, %v948
    %v1429 = vpack.c.b16 %v961, %v949
    %v1430 = vpack.c.b16 %v962, %v950
    %v1431 = vpack.c.b16 %v963, %v951
    %v1432 = vpack.c.b16 %v964, %v952
    %v1433 = vpack.c.b16 %v965, %v953
    %v1434 = vpack.c.b16 %v978, %v966
    %v1435 = vpack.c.b16 %v979, %v967
    %v1436 = vpack.c.b16 %v980, %v968
    %v1437 = vpack.c.b16 %v981, %v969
    %v1438 = vpack.c.b16 %v982, %v970
    %v1439 = vpack.c.b16 %v983, %v971
    %v1440 = vpack.c.b16 %v984, %v972
    %v1441 = vpack.c.b16 %v985, %v973
    %v1442 = vpack.c.b16 %v986, %v974
    %v1443 = vpack.c.b16 %v987, %v975
    %v1444 = vpack.c.b16 %v988, %v976
    %v1445 = vpack.c.b16 %v989, %v977
    %v1446 = vpack.c.b16 %v1002, %v990
    %v1447 = vpack.c.b16 %v1003, %v991
    %v1448 = vpack.c.b16 %v1004, %v992
    %v1449 = vpack.c.b16 %v1005, %v993
    %v1450 = vpack.c.b16 %v1006, %v994
    %v1451 = vpack.c.b16 %v1007, %v995
    %v1452 = vpack.c.b16 %v1008, %v996
    %v1453 = vpack.c.b16 %v1009, %v997
    %v1454 = vpack.c.b16 %v1010, %v998
    %v1455 = vpack.c.b16 %v1011, %v999
    %v1456 = vpack.c.b16 %v1012, %v1000
    %v1457 = vpack.c.b16 %v1013, %v1001
    %v1458 = vpack.c.b16 %v1026, %v1014
    %v1459 = vpack.c.b16 %v1027, %v1015
    %v1460 = vpack.c.b16 %v1028, %v1016
    %v1461 = vpack.c.b16 %v1029, %v1017
    %v1462 = vpack.c.b16 %v1030, %v1018
    %v1463 = vpack.c.b16 %v1031, %v1019
    %v1464 = vpack.c.b16 %v1032, %v1020
    %v1465 = vpack.c.b16 %v1033, %v1021
    %v1466 = vpack.c.b16 %v1034, %v1022
    %v1467 = vpack.c.b16 %v1035, %v1023
    %v1468 = vpack.c.b16 %v1036, %v1024
    %v1469 = vpack.c.b16 %v1037, %v1025
    %v1470 = vpack.c.b16 %v1050, %v1038
    %v1471 = vpack.c.b16 %v1051, %v1039
    %v1472 = vpack.c.b16 %v1052, %v1040
    %v1473 = vpack.c.b16 %v1053, %v1041
    %v1474 = vpack.c.b16 %v1054, %v1042
    %v1475 = vpack.c.b16 %v1055, %v1043
    %v1476 = vpack.c.b16 %v1056, %v1044
    %v1477 = vpack.c.b16 %v1057, %v1045
    %v1478 = vpack.c.b16 %v1058, %v1046
    %v1479 = vpack.c.b16 %v1059, %v1047
    %v1480 = vpack.c.b16 %v1060, %v1048
    %v1481 = vpack.c.b16 %v1061, %v1049
    %v1482 = vpack.c.b16 %v1074, %v1062
    %v1483 = vpack.c.b16 %v1075, %v1063
    %v1484 = vpack.c.b16 %v1076, %v1064
    %v1485 = vpack.c.b16 %v1077, %v1065
    %v1486 = vpack.c.b16 %v1078, %v1066
    %v1487 = vpack.c.b16 %v1079, %v1067
    %v1488 = vpack.c.b16 %v1080, %v1068
    %v1489 = vpack.c.b16 %v1081, %v1069
    %v1490 = vpack.c.b16 %v1082, %v1070
    %v1491 = vpack.c.b16 %v1083, %v1071
    %v1492 = vpack.c.b16 %v1084, %v1072
    %v1493 = vpack.c.b16 %v1085, %v1073
    %v1494 = vpack.c.b16 %v1098, %v1086
    %v1495 = vpack.c.b16 %v1099, %v1087
    %v1496 = vpack.c.b16 %v1100, %v1088
    %v1497 = vpack.c.b16 %v1101, %v1089
    %v1498 = vpack.c.b16 %v1102, %v1090
    %v1499 = vpack.c.b16 %v1103, %v1091
    %v1500 = vpack.c.b16 %v1104, %v1092
    %v1501 = vpack.c.b16 %v1105, %v1093
    %v1502 = vpack.c.b16 %v1106, %v1094
    %v1503 = vpack.c.b16 %v1107, %v1095
    %v1504 = vpack.c.b16 %v1108, %v1096
    %v1505 = vpack.c.b16 %v1109, %v1097
    %v1506 = vpack.c.b16 %v1122, %v1110
    %v1507 = vpack.c.b16 %v1123, %v1111
    %v1508 = vpack.c.b16 %v1124, %v1112
    %v1509 = vpack.c.b16 %v1125, %v1113
    %v1510 = vpack.c.b16 %v1126, %v1114
    %v1511 = vpack.c.b16 %v1127, %v1115
    %v1512 = vpack.c.b16 %v1128, %v1116
    %v1513 = vpack.c.b16 %v1129, %v1117
    %v1514 = vpack.c.b16 %v1130, %v1118
    %v1515 = vpack.c.b16 %v1131, %v1119
    %v1516 = vpack.c.b16 %v1132, %v1120
    %v1517 = vpack.c.b16 %v1133, %v1121
    %v1518 = vpack.c.b16 %v1146, %v1134
    %v1519 = vpack.c.b16 %v1147, %v1135
    %v1520 = vpack.c.b16 %v1148, %v1136
    %v1521 = vpack.c.b16 %v1149, %v1137
    %v1522 = vpack.c.b16 %v1150, %v1138
    %v1523 = vpack.c.b16 %v1151, %v1139
    %v1524 = vpack.c.b16 %v1152, %v1140
    %v1525 = vpack.c.b16 %v1153, %v1141
    %v1526 = vpack.c.b16 %v1154, %v1142
    %v1527 = vpack.c.b16 %v1155, %v1143
    %v1528 = vpack.c.b16 %v1156, %v1144
    %v1529 = vpack.c.b16 %v1157, %v1145
    %v1530 = vpack.c.b16 %v1170, %v1158
    %v1531 = vpack.c.b16 %v1171, %v1159
    %v1532 = vpack.c.b16 %v1172, %v1160
    %v1533 = vpack.c.b16 %v1173, %v1161
    %v1534 = vpack.c.b16 %v1174, %v1162
    %v1535 = vpack.c.b16 %v1175, %v1163
    %v1536 = vpack.c.b16 %v1176, %v1164
    %v1537 = vpack.c.b16 %v1177, %v1165
    %v1538 = vpack.c.b16 %v1178, %v1166
    %v1539 = vpack.c.b16 %v1179, %v1167
    %v1540 = vpack.c.b16 %v1180, %v1168
    %v1541 = vpack.c.b16 %v1181, %v1169
    %v1542 = vpack.c.b16 %v1194, %v1182
    %v1543 = vpack.c.b16 %v1195, %v1183
    %v1544 = vpack.c.b16 %v1196, %v1184
    %v1545 = vpack.c.b16 %v1197, %v1185
    %v1546 = vpack.c.b16 %v1198, %v1186
    %v1547 = vpack.c.b16 %v1199, %v1187
    %v1548 = vpack.c.b16 %v1200, %v1188
    %v1549 = vpack.c.b16 %v1201, %v1189
    %v1550 = vpack.c.b16 %v1202, %v1190
    %v1551 = vpack.c.b16 %v1203, %v1191
    %v1552 = vpack.c.b16 %v1204, %v1192
    %v1553 = vpack.c.b16 %v1205, %v1193
    %v1554 = vpack.c.b16 %v1218, %v1206
    %v1555 = vpack.c.b16 %v1219, %v1207
    %v1556 = vpack.c.b16 %v1220, %v1208
    %v1557 = vpack.c.b16 %v1221, %v1209
    %v1558 = vpack.c.b16 %v1222, %v1210
    %v1559 = vpack.c.b16 %v1223, %v1211
    %v1560 = vpack.c.b16 %v1224, %v1212
    %v1561 = vpack.c.b16 %v1225, %v1213
    %v1562 = vpack.c.b16 %v1226, %v1214
    %v1563 = vpack.c.b16 %v1227, %v1215
    %v1564 = vpack.c.b16 %v1228, %v1216
    %v1565 = vpack.c.b16 %v1229, %v1217
    %v1566 = vpack.c.b16 %v1242, %v1230
    %v1567 = vpack.c.b16 %v1243, %v1231
    %v1568 = vpack.c.b16 %v1244, %v1232
    %v1569 = vpack.c.b16 %v1245, %v1233
    %v1570 = vpack.c.b16 %v1246, %v1234
    %v1571 = vpack.c.b16 %v1247, %v1235
    %v1572 = vpack.c.b16 %v1248, %v1236
    %v1573 = vpack.c.b16 %v1249, %v1237
    %v1574 = vpack.c.b16 %v1250, %v1238
    %v1575 = vpack.c.b16 %v1251, %v1239
    %v1576 = vpack.c.b16 %v1252, %v1240
    %v1577 = vpack.c.b16 %v1253, %v1241
    %v1578 = vpack.c.b16 %v1266, %v1254
    %v1579 = vpack.c.b16 %v1267, %v1255
    %v1580 = vpack.c.b16 %v1268, %v1256
    %v1581 = vpack.c.b16 %v1269, %v1257
    %v1582 = vpack.c.b16 %v1270, %v1258
    %v1583 = vpack.c.b16 %v1271, %v1259
    %v1584 = vpack.c.b16 %v1272, %v1260
    %v1585 = vpack.c.b16 %v1273, %v1261
    %v1586 = vpack.c.b16 %v1274, %v1262
    %v1587 = vpack.c.b16 %v1275, %v1263
    %v1588 = vpack.c.b16 %v1276, %v1264
    %v1589 = vpack.c.b16 %v1277, %v1265
    %v1590 = vpack.c.b16 %v1290, %v1278
    %v1591 = vpack.c.b16 %v1291, %v1279
    %v1592 = vpack.c.b16 %v1292, %v1280
    %v1593 = vpack.c.b16 %v1293, %v1281
    %v1594 = vpack.c.b16 %v1294, %v1282
    %v1595 = vpack.c.b16 %v1295, %v1283
    %v1596 = vpack.c.b16 %v1296, %v1284
    %v1597 = vpack.c.b16 %v1297, %v1285
    %v1598 = vpack.c.b16 %v1298, %v1286
    %v1599 = vpack.c.b16 %v1299, %v1287
    %v1600 = vpack.c.b16 %v1300, %v1288
    %v1601 = vpack.c.b16 %v1301, %v1289
    %v1602 = vpack.c.b16 %v1314, %v1302
    %v1603 = vpack.c.b16 %v1315, %v1303
    %v1604 = vpack.c.b16 %v1316, %v1304
    %v1605 = vpack.c.b16 %v1317, %v1305
    %v1606 = vpack.c.b16 %v1318, %v1306
    %v1607 = vpack.c.b16 %v1319, %v1307
    %v1608 = vpack.c.b16 %v1320, %v1308
    %v1609 = vpack.c.b16 %v1321, %v1309
    %v1610 = vpack.c.b16 %v1322, %v1310
    %v1611 = vpack.c.b16 %v1323, %v1311
    %v1612 = vpack.c.b16 %v1324, %v1312
    %v1613 = vpack.c.b16 %v1325, %v1313
    %1902 = vmatprep.subr.bf16.mxu0 %v1327
    %1903 = vmatpush1.bf16.msra.mxu0 %v1326
    %1904 = vmatprep.subr.bf16.mxu0 %v1339
    %1905 = vmatpush1.bf16.msra.mxu0 %v1338
    %1906 = vmatprep.subr.bf16.mxu0 %v1351
    %1907 = vmatpush1.bf16.msra.mxu0 %v1350
    %1908 = vmatprep.subr.bf16.mxu0 %v1363
    %1909 = vmatpush1.bf16.msra.mxu0 %v1362
    %1910 = vmatprep.subr.bf16.mxu0 %v1375
    %1911 = vmatpush1.bf16.msra.mxu0 %v1374
    %1912 = vmatprep.subr.bf16.mxu0 %v1387
    %1913 = vmatpush1.bf16.msra.mxu0 %v1386
    %1914 = vmatprep.subr.bf16.mxu0 %v1399
    %1915 = vmatpush1.bf16.msra.mxu0 %v1398
    %1916 = vmatprep.subr.bf16.mxu0 %v1411
    %1917 = vmatpush1.bf16.msra.mxu0 %v1410
    %1918 = vmatprep.subr.bf16.mxu0 %v1423
    %1919 = vmatpush1.bf16.msra.mxu0 %v1422
    %1920 = vmatprep.subr.bf16.mxu0 %v1435
    %1921 = vmatpush1.bf16.msra.mxu0 %v1434
    %1922 = vmatprep.subr.bf16.mxu0 %v1447
    %1923 = vmatpush1.bf16.msra.mxu0 %v1446
    %1924 = vmatprep.subr.bf16.mxu0 %v1459
    %1925 = vmatpush1.bf16.msra.mxu0 %v1458
    %1926 = vmatprep.subr.bf16.mxu0 %v1471
    %1927 = vmatpush1.bf16.msra.mxu0 %v1470
    %1928 = vmatprep.subr.bf16.mxu0 %v1483
    %1929 = vmatpush1.bf16.msra.mxu0 %v1482
    %1930 = vmatprep.subr.bf16.mxu0 %v1495
    %1931 = vmatpush1.bf16.msra.mxu0 %v1494
    %1932 = vmatprep.subr.bf16.mxu0 %v1507
    %1933 = vmatpush1.bf16.msra.mxu0 %v1506
    %1934 = vmatprep.mubr.bf16.mxu0 %v457
    %1935 = vmatmul.mubr.bf16.gmra.mrb[0].mxu0 %v456
    %v1936 = vpop.f32.mrb[0].mxu0
    %v1937 = vadd.f32 %v389, %v1936
    %v1938 = vpop.f32.mrb[0].mxu0
    %v1939 = vadd.f32 %v393, %v1938
    %v1940 = vpop.f32.mrb[0].mxu0
    %v1941 = vadd.f32 %v389, %v1940
    %v1942 = vpop.f32.mrb[0].mxu0
    %v1943 = vadd.f32 %v393, %v1942
    %1944 = vdwg.mxu0
    %1945 = vmatprep.subr.bf16.mxu0 %v1519
    %1946 = vmatpush1.bf16.msra.mxu0 %v1518
    %1947 = vmatprep.subr.bf16.mxu0 %v1531
    %1948 = vmatpush1.bf16.msra.mxu0 %v1530
    %1949 = vmatprep.subr.bf16.mxu0 %v1543
    %1950 = vmatpush1.bf16.msra.mxu0 %v1542
    %1951 = vmatprep.subr.bf16.mxu0 %v1555
    %1952 = vmatpush1.bf16.msra.mxu0 %v1554
    %1953 = vmatprep.subr.bf16.mxu0 %v1567
    %1954 = vmatpush1.bf16.msra.mxu0 %v1566
    %1955 = vmatprep.subr.bf16.mxu0 %v1579
    %1956 = vmatpush1.bf16.msra.mxu0 %v1578
    %1957 = vmatprep.subr.bf16.mxu0 %v1591
    %1958 = vmatpush1.bf16.msra.mxu0 %v1590
    %1959 = vmatprep.subr.bf16.mxu0 %v1603
    %1960 = vmatpush1.bf16.msra.mxu0 %v1602
    %1961 = vmatprep.subr.bf16.mxu0 0
    %1962 = vmatpush1.bf16.msra.mxu0 0
    %1963 = vmatprep.subr.bf16.mxu0 0
    %1964 = vmatpush1.bf16.msra.mxu0 0
    %1965 = vmatprep.subr.bf16.mxu0 0
    %1966 = vmatpush1.bf16.msra.mxu0 0
    %1967 = vmatprep.subr.bf16.mxu0 0
    %1968 = vmatpush1.bf16.msra.mxu0 0
    %1969 = vmatprep.subr.bf16.mxu0 0
    %1970 = vmatpush1.bf16.msra.mxu0 0
    %1971 = vmatprep.subr.bf16.mxu0 0
    %1972 = vmatpush1.bf16.msra.mxu0 0
    %1973 = vmatprep.subr.bf16.mxu0 0
    %1974 = vmatpush1.bf16.msra.mxu0 0
    %1975 = vmatprep.subr.bf16.mxu0 0
    %1976 = vmatpush1.bf16.msra.mxu0 0
    %1977 = vmatprep.mubr.bf16.mxu0 0
    %1978 = vmatmul.mubr.bf16.gmra.mrb[0].mxu0 %v458
    %v1979 = vpop.f32.mrb[0].mxu0
    %v1980 = vadd.f32 %v1937, %v1979
    %v1981 = vpop.f32.mrb[0].mxu0
    %v1982 = vadd.f32 %v1939, %v1981
    %v1983 = vpop.f32.mrb[0].mxu0
    %v1984 = vadd.f32 %v1941, %v1983
    %v1985 = vpop.f32.mrb[0].mxu0
    %v1986 = vadd.f32 %v1943, %v1985
    %1987 = vdwg.mxu0
    %1988 = vmatprep.subr.bf16.mxu0 %v1329
    %1989 = vmatpush1.bf16.msra.mxu0 %v1328
    %1990 = vmatprep.subr.bf16.mxu0 %v1341
    %1991 = vmatpush1.bf16.msra.mxu0 %v1340
    %1992 = vmatprep.subr.bf16.mxu0 %v1353
    %1993 = vmatpush1.bf16.msra.mxu0 %v1352
    %1994 = vmatprep.subr.bf16.mxu0 %v1365
    %1995 = vmatpush1.bf16.msra.mxu0 %v1364
    %1996 = vmatprep.subr.bf16.mxu0 %v1377
    %1997 = vmatpush1.bf16.msra.mxu0 %v1376
    %1998 = vmatprep.subr.bf16.mxu0 %v1389
    %1999 = vmatpush1.bf16.msra.mxu0 %v1388
    %2000 = vmatprep.subr.bf16.mxu0 %v1401
    %2001 = vmatpush1.bf16.msra.mxu0 %v1400
    %2002 = vmatprep.subr.bf16.mxu0 %v1413
    %2003 = vmatpush1.bf16.msra.mxu0 %v1412
    %2004 = vmatprep.subr.bf16.mxu0 %v1425
    %2005 = vmatpush1.bf16.msra.mxu0 %v1424
    %2006 = vmatprep.subr.bf16.mxu0 %v1437
    %2007 = vmatpush1.bf16.msra.mxu0 %v1436
    %2008 = vmatprep.subr.bf16.mxu0 %v1449
    %2009 = vmatpush1.bf16.msra.mxu0 %v1448
    %2010 = vmatprep.subr.bf16.mxu0 %v1461
    %2011 = vmatpush1.bf16.msra.mxu0 %v1460
    %2012 = vmatprep.subr.bf16.mxu0 %v1473
    %2013 = vmatpush1.bf16.msra.mxu0 %v1472
    %2014 = vmatprep.subr.bf16.mxu0 %v1485
    %2015 = vmatpush1.bf16.msra.mxu0 %v1484
    %2016 = vmatprep.subr.bf16.mxu0 %v1497
    %2017 = vmatpush1.bf16.msra.mxu0 %v1496
    %2018 = vmatprep.subr.bf16.mxu0 %v1509
    %2019 = vmatpush1.bf16.msra.mxu0 %v1508
    %2020 = vmatprep.mubr.bf16.mxu0 %v457
    %2021 = vmatmul.mubr.bf16.gmra.mrb[0].mxu0 %v456
    %v2022 = vpop.f32.mrb[0].mxu0
    %v2023 = vadd.f32 %v397, %v2022
    %v2024 = vpop.f32.mrb[0].mxu0
    %v2025 = vadd.f32 %v401, %v2024
    %v2026 = vpop.f32.mrb[0].mxu0
    %v2027 = vadd.f32 %v397, %v2026
    %v2028 = vpop.f32.mrb[0].mxu0
    %v2029 = vadd.f32 %v401, %v2028
    %2030 = vdwg.mxu0
    %2031 = vmatprep.subr.bf16.mxu0 %v1521
    %2032 = vmatpush1.bf16.msra.mxu0 %v1520
    %2033 = vmatprep.subr.bf16.mxu0 %v1533
    %2034 = vmatpush1.bf16.msra.mxu0 %v1532
    %2035 = vmatprep.subr.bf16.mxu0 %v1545
    %2036 = vmatpush1.bf16.msra.mxu0 %v1544
    %2037 = vmatprep.subr.bf16.mxu0 %v1557
    %2038 = vmatpush1.bf16.msra.mxu0 %v1556
    %2039 = vmatprep.subr.bf16.mxu0 %v1569
    %2040 = vmatpush1.bf16.msra.mxu0 %v1568
    %2041 = vmatprep.subr.bf16.mxu0 %v1581
    %2042 = vmatpush1.bf16.msra.mxu0 %v1580
    %2043 = vmatprep.subr.bf16.mxu0 %v1593
    %2044 = vmatpush1.bf16.msra.mxu0 %v1592
    %2045 = vmatprep.subr.bf16.mxu0 %v1605
    %2046 = vmatpush1.bf16.msra.mxu0 %v1604
    %2047 = vmatprep.subr.bf16.mxu0 0
    %2048 = vmatpush1.bf16.msra.mxu0 0
    %2049 = vmatprep.subr.bf16.mxu0 0
    %2050 = vmatpush1.bf16.msra.mxu0 0
    %2051 = vmatprep.subr.bf16.mxu0 0
    %2052 = vmatpush1.bf16.msra.mxu0 0
    %2053 = vmatprep.subr.bf16.mxu0 0
    %2054 = vmatpush1.bf16.msra.mxu0 0
    %2055 = vmatprep.subr.bf16.mxu0 0
    %2056 = vmatpush1.bf16.msra.mxu0 0
    %2057 = vmatprep.subr.bf16.mxu0 0
    %2058 = vmatpush1.bf16.msra.mxu0 0
    %2059 = vmatprep.subr.bf16.mxu0 0
    %2060 = vmatpush1.bf16.msra.mxu0 0
    %2061 = vmatprep.subr.bf16.mxu0 0
    %2062 = vmatpush1.bf16.msra.mxu0 0
    %2063 = vmatprep.mubr.bf16.mxu0 0
    %2064 = vmatmul.mubr.bf16.gmra.mrb[0].mxu0 %v458
    %v2065 = vpop.f32.mrb[0].mxu0
    %v2066 = vadd.f32 %v2023, %v2065
    %v2067 = vpop.f32.mrb[0].mxu0
    %v2068 = vadd.f32 %v2025, %v2067
    %v2069 = vpop.f32.mrb[0].mxu0
    %v2070 = vadd.f32 %v2027, %v2069
    %v2071 = vpop.f32.mrb[0].mxu0
    %v2072 = vadd.f32 %v2029, %v2071
    %2073 = vdwg.mxu0
    %2074 = vmatprep.subr.bf16.mxu0 %v1331
    %2075 = vmatpush1.bf16.msra.mxu0 %v1330
    %2076 = vmatprep.subr.bf16.mxu0 %v1343
    %2077 = vmatpush1.bf16.msra.mxu0 %v1342
    %2078 = vmatprep.subr.bf16.mxu0 %v1355
    %2079 = vmatpush1.bf16.msra.mxu0 %v1354
    %2080 = vmatprep.subr.bf16.mxu0 %v1367
    %2081 = vmatpush1.bf16.msra.mxu0 %v1366
    %2082 = vmatprep.subr.bf16.mxu0 %v1379
    %2083 = vmatpush1.bf16.msra.mxu0 %v1378
    %2084 = vmatprep.subr.bf16.mxu0 %v1391
    %2085 = vmatpush1.bf16.msra.mxu0 %v1390
    %2086 = vmatprep.subr.bf16.mxu0 %v1403
    %2087 = vmatpush1.bf16.msra.mxu0 %v1402
    %2088 = vmatprep.subr.bf16.mxu0 %v1415
    %2089 = vmatpush1.bf16.msra.mxu0 %v1414
    %2090 = vmatprep.subr.bf16.mxu0 %v1427
    %2091 = vmatpush1.bf16.msra.mxu0 %v1426
    %2092 = vmatprep.subr.bf16.mxu0 %v1439
    %2093 = vmatpush1.bf16.msra.mxu0 %v1438
    %2094 = vmatprep.subr.bf16.mxu0 %v1451
    %2095 = vmatpush1.bf16.msra.mxu0 %v1450
    %2096 = vmatprep.subr.bf16.mxu0 %v1463
    %2097 = vmatpush1.bf16.msra.mxu0 %v1462
    %2098 = vmatprep.subr.bf16.mxu0 %v1475
    %2099 = vmatpush1.bf16.msra.mxu0 %v1474
    %2100 = vmatprep.subr.bf16.mxu0 %v1487
    %2101 = vmatpush1.bf16.msra.mxu0 %v1486
    %2102 = vmatprep.subr.bf16.mxu0 %v1499
    %2103 = vmatpush1.bf16.msra.mxu0 %v1498
    %2104 = vmatprep.subr.bf16.mxu0 %v1511
    %2105 = vmatpush1.bf16.msra.mxu0 %v1510
    %2106 = vmatprep.mubr.bf16.mxu0 %v457
    %2107 = vmatmul.mubr.bf16.gmra.mrb[0].mxu0 %v456
    %v2108 = vpop.f32.mrb[0].mxu0
    %v2109 = vadd.f32 %v405, %v2108
    %v2110 = vpop.f32.mrb[0].mxu0
    %v2111 = vadd.f32 %v409, %v2110
    %v2112 = vpop.f32.mrb[0].mxu0
    %v2113 = vadd.f32 %v405, %v2112
    %v2114 = vpop.f32.mrb[0].mxu0
    %v2115 = vadd.f32 %v409, %v2114
    %2116 = vdwg.mxu0
    %2117 = vmatprep.subr.bf16.mxu0 %v1523
    %2118 = vmatpush1.bf16.msra.mxu0 %v1522
    %2119 = vmatprep.subr.bf16.mxu0 %v1535
    %2120 = vmatpush1.bf16.msra.mxu0 %v1534
    %2121 = vmatprep.subr.bf16.mxu0 %v1547
    %2122 = vmatpush1.bf16.msra.mxu0 %v1546
    %2123 = vmatprep.subr.bf16.mxu0 %v1559
    %2124 = vmatpush1.bf16.msra.mxu0 %v1558
    %2125 = vmatprep.subr.bf16.mxu0 %v1571
    %2126 = vmatpush1.bf16.msra.mxu0 %v1570
    %2127 = vmatprep.subr.bf16.mxu0 %v1583
    %2128 = vmatpush1.bf16.msra.mxu0 %v1582
    %2129 = vmatprep.subr.bf16.mxu0 %v1595
    %2130 = vmatpush1.bf16.msra.mxu0 %v1594
    %2131 = vmatprep.subr.bf16.mxu0 %v1607
    %2132 = vmatpush1.bf16.msra.mxu0 %v1606
    %2133 = vmatprep.subr.bf16.mxu0 0
    %2134 = vmatpush1.bf16.msra.mxu0 0
    %2135 = vmatprep.subr.bf16.mxu0 0
    %2136 = vmatpush1.bf16.msra.mxu0 0
    %2137 = vmatprep.subr.bf16.mxu0 0
    %2138 = vmatpush1.bf16.msra.mxu0 0
    %2139 = vmatprep.subr.bf16.mxu0 0
    %2140 = vmatpush1.bf16.msra.mxu0 0
    %2141 = vmatprep.subr.bf16.mxu0 0
    %2142 = vmatpush1.bf16.msra.mxu0 0
    %2143 = vmatprep.subr.bf16.mxu0 0
    %2144 = vmatpush1.bf16.msra.mxu0 0
    %2145 = vmatprep.subr.bf16.mxu0 0
    %2146 = vmatpush1.bf16.msra.mxu0 0
    %2147 = vmatprep.subr.bf16.mxu0 0
    %2148 = vmatpush1.bf16.msra.mxu0 0
    %2149 = vmatprep.mubr.bf16.mxu0 0
    %2150 = vmatmul.mubr.bf16.gmra.mrb[0].mxu0 %v458
    %v2151 = vpop.f32.mrb[0].mxu0
    %v2152 = vadd.f32 %v2109, %v2151
    %v2153 = vpop.f32.mrb[0].mxu0
    %v2154 = vadd.f32 %v2111, %v2153
    %v2155 = vpop.f32.mrb[0].mxu0
    %v2156 = vadd.f32 %v2113, %v2155
    %v2157 = vpop.f32.mrb[0].mxu0
    %v2158 = vadd.f32 %v2115, %v2157
    %2159 = vdwg.mxu0
    %2160 = vmatprep.subr.bf16.mxu0 %v1333
    %2161 = vmatpush1.bf16.msra.mxu0 %v1332
    %2162 = vmatprep.subr.bf16.mxu0 %v1345
    %2163 = vmatpush1.bf16.msra.mxu0 %v1344
    %2164 = vmatprep.subr.bf16.mxu0 %v1357
    %2165 = vmatpush1.bf16.msra.mxu0 %v1356
    %2166 = vmatprep.subr.bf16.mxu0 %v1369
    %2167 = vmatpush1.bf16.msra.mxu0 %v1368
    %2168 = vmatprep.subr.bf16.mxu0 %v1381
    %2169 = vmatpush1.bf16.msra.mxu0 %v1380
    %2170 = vmatprep.subr.bf16.mxu0 %v1393
    %2171 = vmatpush1.bf16.msra.mxu0 %v1392
    %2172 = vmatprep.subr.bf16.mxu0 %v1405
    %2173 = vmatpush1.bf16.msra.mxu0 %v1404
    %2174 = vmatprep.subr.bf16.mxu0 %v1417
    %2175 = vmatpush1.bf16.msra.mxu0 %v1416
    %2176 = vmatprep.subr.bf16.mxu0 %v1429
    %2177 = vmatpush1.bf16.msra.mxu0 %v1428
    %2178 = vmatprep.subr.bf16.mxu0 %v1441
    %2179 = vmatpush1.bf16.msra.mxu0 %v1440
    %2180 = vmatprep.subr.bf16.mxu0 %v1453
    %2181 = vmatpush1.bf16.msra.mxu0 %v1452
    %2182 = vmatprep.subr.bf16.mxu0 %v1465
    %2183 = vmatpush1.bf16.msra.mxu0 %v1464
    %2184 = vmatprep.subr.bf16.mxu0 %v1477
    %2185 = vmatpush1.bf16.msra.mxu0 %v1476
    %2186 = vmatprep.subr.bf16.mxu0 %v1489
    %2187 = vmatpush1.bf16.msra.mxu0 %v1488
    %2188 = vmatprep.subr.bf16.mxu0 %v1501
    %2189 = vmatpush1.bf16.msra.mxu0 %v1500
    %2190 = vmatprep.subr.bf16.mxu0 %v1513
    %2191 = vmatpush1.bf16.msra.mxu0 %v1512
    %2192 = vmatprep.mubr.bf16.mxu0 %v457
    %2193 = vmatmul.mubr.bf16.gmra.mrb[0].mxu0 %v456
    %v2194 = vpop.f32.mrb[0].mxu0
    %v2195 = vadd.f32 %v413, %v2194
    %v2196 = vpop.f32.mrb[0].mxu0
    %v2197 = vadd.f32 %v417, %v2196
    %v2198 = vpop.f32.mrb[0].mxu0
    %v2199 = vadd.f32 %v413, %v2198
    %v2200 = vpop.f32.mrb[0].mxu0
    %v2201 = vadd.f32 %v417, %v2200
    %2202 = vdwg.mxu0
    %2203 = vmatprep.subr.bf16.mxu0 %v1525
    %2204 = vmatpush1.bf16.msra.mxu0 %v1524
    %2205 = vmatprep.subr.bf16.mxu0 %v1537
    %2206 = vmatpush1.bf16.msra.mxu0 %v1536
    %2207 = vmatprep.subr.bf16.mxu0 %v1549
    %2208 = vmatpush1.bf16.msra.mxu0 %v1548
    %2209 = vmatprep.subr.bf16.mxu0 %v1561
    %2210 = vmatpush1.bf16.msra.mxu0 %v1560
    %2211 = vmatprep.subr.bf16.mxu0 %v1573
    %2212 = vmatpush1.bf16.msra.mxu0 %v1572
    %2213 = vmatprep.subr.bf16.mxu0 %v1585
    %2214 = vmatpush1.bf16.msra.mxu0 %v1584
    %2215 = vmatprep.subr.bf16.mxu0 %v1597
    %2216 = vmatpush1.bf16.msra.mxu0 %v1596
    %2217 = vmatprep.subr.bf16.mxu0 %v1609
    %2218 = vmatpush1.bf16.msra.mxu0 %v1608
    %2219 = vmatprep.subr.bf16.mxu0 0
    %2220 = vmatpush1.bf16.msra.mxu0 0
    %2221 = vmatprep.subr.bf16.mxu0 0
    %2222 = vmatpush1.bf16.msra.mxu0 0
    %2223 = vmatprep.subr.bf16.mxu0 0
    %2224 = vmatpush1.bf16.msra.mxu0 0
    %2225 = vmatprep.subr.bf16.mxu0 0
    %2226 = vmatpush1.bf16.msra.mxu0 0
    %2227 = vmatprep.subr.bf16.mxu0 0
    %2228 = vmatpush1.bf16.msra.mxu0 0
    %2229 = vmatprep.subr.bf16.mxu0 0
    %2230 = vmatpush1.bf16.msra.mxu0 0
    %2231 = vmatprep.subr.bf16.mxu0 0
    %2232 = vmatpush1.bf16.msra.mxu0 0
    %2233 = vmatprep.subr.bf16.mxu0 0
    %2234 = vmatpush1.bf16.msra.mxu0 0
    %2235 = vmatprep.mubr.bf16.mxu0 0
    %2236 = vmatmul.mubr.bf16.gmra.mrb[0].mxu0 %v458
    %v2237 = vpop.f32.mrb[0].mxu0
    %v2238 = vadd.f32 %v2195, %v2237
    %v2239 = vpop.f32.mrb[0].mxu0
    %v2240 = vadd.f32 %v2197, %v2239
    %v2241 = vpop.f32.mrb[0].mxu0
    %v2242 = vadd.f32 %v2199, %v2241
    %v2243 = vpop.f32.mrb[0].mxu0
    %v2244 = vadd.f32 %v2201, %v2243
    %2245 = vdwg.mxu0
    %2246 = vmatprep.subr.bf16.mxu0 %v1335
    %2247 = vmatpush1.bf16.msra.mxu0 %v1334
    %2248 = vmatprep.subr.bf16.mxu0 %v1347
    %2249 = vmatpush1.bf16.msra.mxu0 %v1346
    %2250 = vmatprep.subr.bf16.mxu0 %v1359
    %2251 = vmatpush1.bf16.msra.mxu0 %v1358
    %2252 = vmatprep.subr.bf16.mxu0 %v1371
    %2253 = vmatpush1.bf16.msra.mxu0 %v1370
    %2254 = vmatprep.subr.bf16.mxu0 %v1383
    %2255 = vmatpush1.bf16.msra.mxu0 %v1382
    %2256 = vmatprep.subr.bf16.mxu0 %v1395
    %2257 = vmatpush1.bf16.msra.mxu0 %v1394
    %2258 = vmatprep.subr.bf16.mxu0 %v1407
    %2259 = vmatpush1.bf16.msra.mxu0 %v1406
    %2260 = vmatprep.subr.bf16.mxu0 %v1419
    %2261 = vmatpush1.bf16.msra.mxu0 %v1418
    %2262 = vmatprep.subr.bf16.mxu0 %v1431
    %2263 = vmatpush1.bf16.msra.mxu0 %v1430
    %2264 = vmatprep.subr.bf16.mxu0 %v1443
    %2265 = vmatpush1.bf16.msra.mxu0 %v1442
    %2266 = vmatprep.subr.bf16.mxu0 %v1455
    %2267 = vmatpush1.bf16.msra.mxu0 %v1454
    %2268 = vmatprep.subr.bf16.mxu0 %v1467
    %2269 = vmatpush1.bf16.msra.mxu0 %v1466
    %2270 = vmatprep.subr.bf16.mxu0 %v1479
    %2271 = vmatpush1.bf16.msra.mxu0 %v1478
    %2272 = vmatprep.subr.bf16.mxu0 %v1491
    %2273 = vmatpush1.bf16.msra.mxu0 %v1490
    %2274 = vmatprep.subr.bf16.mxu0 %v1503
    %2275 = vmatpush1.bf16.msra.mxu0 %v1502
    %2276 = vmatprep.subr.bf16.mxu0 %v1515
    %2277 = vmatpush1.bf16.msra.mxu0 %v1514
    %2278 = vmatprep.mubr.bf16.mxu0 %v457
    %2279 = vmatmul.mubr.bf16.gmra.mrb[0].mxu0 %v456
    %v2280 = vpop.f32.mrb[0].mxu0
    %v2281 = vadd.f32 %v421, %v2280
    %v2282 = vpop.f32.mrb[0].mxu0
    %v2283 = vadd.f32 %v425, %v2282
    %v2284 = vpop.f32.mrb[0].mxu0
    %v2285 = vadd.f32 %v421, %v2284
    %v2286 = vpop.f32.mrb[0].mxu0
    %v2287 = vadd.f32 %v425, %v2286
    %2288 = vdwg.mxu0
    %2289 = vmatprep.subr.bf16.mxu0 %v1527
    %2290 = vmatpush1.bf16.msra.mxu0 %v1526
    %2291 = vmatprep.subr.bf16.mxu0 %v1539
    %2292 = vmatpush1.bf16.msra.mxu0 %v1538
    %2293 = vmatprep.subr.bf16.mxu0 %v1551
    %2294 = vmatpush1.bf16.msra.mxu0 %v1550
    %2295 = vmatprep.subr.bf16.mxu0 %v1563
    %2296 = vmatpush1.bf16.msra.mxu0 %v1562
    %2297 = vmatprep.subr.bf16.mxu0 %v1575
    %2298 = vmatpush1.bf16.msra.mxu0 %v1574
    %2299 = vmatprep.subr.bf16.mxu0 %v1587
    %2300 = vmatpush1.bf16.msra.mxu0 %v1586
    %2301 = vmatprep.subr.bf16.mxu0 %v1599
    %2302 = vmatpush1.bf16.msra.mxu0 %v1598
    %2303 = vmatprep.subr.bf16.mxu0 %v1611
    %2304 = vmatpush1.bf16.msra.mxu0 %v1610
    %2305 = vmatprep.subr.bf16.mxu0 0
    %2306 = vmatpush1.bf16.msra.mxu0 0
    %2307 = vmatprep.subr.bf16.mxu0 0
    %2308 = vmatpush1.bf16.msra.mxu0 0
    %2309 = vmatprep.subr.bf16.mxu0 0
    %2310 = vmatpush1.bf16.msra.mxu0 0
    %2311 = vmatprep.subr.bf16.mxu0 0
    %2312 = vmatpush1.bf16.msra.mxu0 0
    %2313 = vmatprep.subr.bf16.mxu0 0
    %2314 = vmatpush1.bf16.msra.mxu0 0
    %2315 = vmatprep.subr.bf16.mxu0 0
    %2316 = vmatpush1.bf16.msra.mxu0 0
    %2317 = vmatprep.subr.bf16.mxu0 0
    %2318 = vmatpush1.bf16.msra.mxu0 0
    %2319 = vmatprep.subr.bf16.mxu0 0
    %2320 = vmatpush1.bf16.msra.mxu0 0
    %2321 = vmatprep.mubr.bf16.mxu0 0
    %2322 = vmatmul.mubr.bf16.gmra.mrb[0].mxu0 %v458
    %v2323 = vpop.f32.mrb[0].mxu0
    %v2324 = vadd.f32 %v2281, %v2323
    %v2325 = vpop.f32.mrb[0].mxu0
    %v2326 = vadd.f32 %v2283, %v2325
    %v2327 = vpop.f32.mrb[0].mxu0
    %v2328 = vadd.f32 %v2285, %v2327
    %v2329 = vpop.f32.mrb[0].mxu0
    %v2330 = vadd.f32 %v2287, %v2329
    %2331 = vdwg.mxu0
    %2332 = vmatprep.subr.bf16.mxu0 %v1337
    %2333 = vmatpush1.bf16.msra.mxu0 %v1336
    %2334 = vmatprep.subr.bf16.mxu0 %v1349
    %2335 = vmatpush1.bf16.msra.mxu0 %v1348
    %2336 = vmatprep.subr.bf16.mxu0 %v1361
    %2337 = vmatpush1.bf16.msra.mxu0 %v1360
    %2338 = vmatprep.subr.bf16.mxu0 %v1373
    %2339 = vmatpush1.bf16.msra.mxu0 %v1372
    %2340 = vmatprep.subr.bf16.mxu0 %v1385
    %2341 = vmatpush1.bf16.msra.mxu0 %v1384
    %2342 = vmatprep.subr.bf16.mxu0 %v1397
    %2343 = vmatpush1.bf16.msra.mxu0 %v1396
    %2344 = vmatprep.subr.bf16.mxu0 %v1409
    %2345 = vmatpush1.bf16.msra.mxu0 %v1408
    %2346 = vmatprep.subr.bf16.mxu0 %v1421
    %2347 = vmatpush1.bf16.msra.mxu0 %v1420
    %2348 = vmatprep.subr.bf16.mxu0 %v1433
    %2349 = vmatpush1.bf16.msra.mxu0 %v1432
    %2350 = vmatprep.subr.bf16.mxu0 %v1445
    %2351 = vmatpush1.bf16.msra.mxu0 %v1444
    %2352 = vmatprep.subr.bf16.mxu0 %v1457
    %2353 = vmatpush1.bf16.msra.mxu0 %v1456
    %2354 = vmatprep.subr.bf16.mxu0 %v1469
    %2355 = vmatpush1.bf16.msra.mxu0 %v1468
    %2356 = vmatprep.subr.bf16.mxu0 %v1481
    %2357 = vmatpush1.bf16.msra.mxu0 %v1480
    %2358 = vmatprep.subr.bf16.mxu0 %v1493
    %2359 = vmatpush1.bf16.msra.mxu0 %v1492
    %2360 = vmatprep.subr.bf16.mxu0 %v1505
    %2361 = vmatpush1.bf16.msra.mxu0 %v1504
    %2362 = vmatprep.subr.bf16.mxu0 %v1517
    %2363 = vmatpush1.bf16.msra.mxu0 %v1516
    %2364 = vmatprep.mubr.bf16.mxu0 %v457
    %2365 = vmatmul.mubr.bf16.gmra.mrb[0].mxu0 %v456
    %v2366 = vpop.f32.mrb[0].mxu0
    %v2367 = vadd.f32 %v429, %v2366
    %v2368 = vpop.f32.mrb[0].mxu0
    %v2369 = vadd.f32 %v433, %v2368
    %v2370 = vpop.f32.mrb[0].mxu0
    %v2371 = vadd.f32 %v429, %v2370
    %v2372 = vpop.f32.mrb[0].mxu0
    %v2373 = vadd.f32 %v433, %v2372
    %2374 = vdwg.mxu0
    %2375 = vmatprep.subr.bf16.mxu0 %v1529
    %2376 = vmatpush1.bf16.msra.mxu0 %v1528
    %2377 = vmatprep.subr.bf16.mxu0 %v1541
    %2378 = vmatpush1.bf16.msra.mxu0 %v1540
    %2379 = vmatprep.subr.bf16.mxu0 %v1553
    %2380 = vmatpush1.bf16.msra.mxu0 %v1552
    %2381 = vmatprep.subr.bf16.mxu0 %v1565
    %2382 = vmatpush1.bf16.msra.mxu0 %v1564
    %2383 = vmatprep.subr.bf16.mxu0 %v1577
    %2384 = vmatpush1.bf16.msra.mxu0 %v1576
    %2385 = vmatprep.subr.bf16.mxu0 %v1589
    %2386 = vmatpush1.bf16.msra.mxu0 %v1588
    %2387 = vmatprep.subr.bf16.mxu0 %v1601
    %2388 = vmatpush1.bf16.msra.mxu0 %v1600
    %2389 = vmatprep.subr.bf16.mxu0 %v1613
    %2390 = vmatpush1.bf16.msra.mxu0 %v1612
    %2391 = vmatprep.subr.bf16.mxu0 0
    %2392 = vmatpush1.bf16.msra.mxu0 0
    %2393 = vmatprep.subr.bf16.mxu0 0
    %2394 = vmatpush1.bf16.msra.mxu0 0
    %2395 = vmatprep.subr.bf16.mxu0 0
    %2396 = vmatpush1.bf16.msra.mxu0 0
    %2397 = vmatprep.subr.bf16.mxu0 0
    %2398 = vmatpush1.bf16.msra.mxu0 0
    %2399 = vmatprep.subr.bf16.mxu0 0
    %2400 = vmatpush1.bf16.msra.mxu0 0
    %2401 = vmatprep.subr.bf16.mxu0 0
    %2402 = vmatpush1.bf16.msra.mxu0 0
    %2403 = vmatprep.subr.bf16.mxu0 0
    %2404 = vmatpush1.bf16.msra.mxu0 0
    %2405 = vmatprep.subr.bf16.mxu0 0
    %2406 = vmatpush1.bf16.msra.mxu0 0
    %2407 = vmatprep.mubr.bf16.mxu0 0
    %2408 = vmatmul.mubr.bf16.gmra.mrb[0].mxu0 %v458
    %v2409 = vpop.f32.mrb[0].mxu0
    %v2410 = vadd.f32 %v2367, %v2409
    %v2411 = vpop.f32.mrb[0].mxu0
    %v2412 = vadd.f32 %v2369, %v2411
    %v2413 = vpop.f32.mrb[0].mxu0
    %v2414 = vadd.f32 %v2371, %v2413
    %v2415 = vpop.f32.mrb[0].mxu0
    %v2416 = vadd.f32 %v2373, %v2415
    %2417 = vdwg.mxu0
    %v2418 = vmax.f32 %v1980, 0.0
    %v2419 = vmax.f32 %v1982, 0.0
    %v2420 = vmax.f32 %v2066, 0.0
    %v2421 = vmax.f32 %v2068, 0.0
    %v2422 = vmax.f32 %v2152, 0.0
    %v2423 = vmax.f32 %v2154, 0.0
    %v2424 = vmax.f32 %v2238, 0.0
    %v2425 = vmax.f32 %v2240, 0.0
    %v2426 = vmax.f32 %v2324, 0.0
    %v2427 = vmax.f32 %v2326, 0.0
    %v2428 = vmax.f32 %v2410, 0.0
    %v2429 = vmax.f32 %v2412, 0.0
    %v2430 = vmax.f32 %v1984, 0.0
    %v2431 = vmax.f32 %v1986, 0.0
    %v2432 = vmax.f32 %v2070, 0.0
    %v2433 = vmax.f32 %v2072, 0.0
    %v2434 = vmax.f32 %v2156, 0.0
    %v2435 = vmax.f32 %v2158, 0.0
    %v2436 = vmax.f32 %v2242, 0.0
    %v2437 = vmax.f32 %v2244, 0.0
    %v2438 = vmax.f32 %v2328, 0.0
    %v2439 = vmax.f32 %v2330, 0.0
    %v2440 = vmax.f32 %v2414, 0.0
    %v2441 = vmax.f32 %v2416, 0.0
    %v2442 = vpack.c.bf16 %v2430, %v2418
    %v2443 = vpack.c.bf16 %v2431, %v2419
    %v2444 = vpack.c.bf16 %v2432, %v2420
    %v2445 = vpack.c.bf16 %v2433, %v2421
    %v2446 = vpack.c.bf16 %v2434, %v2422
    %v2447 = vpack.c.bf16 %v2435, %v2423
    %v2448 = vpack.c.bf16 %v2436, %v2424
    %v2449 = vpack.c.bf16 %v2437, %v2425
    %v2450 = vpack.c.bf16 %v2438, %v2426
    %v2451 = vpack.c.bf16 %v2439, %v2427
    %v2452 = vpack.c.bf16 %v2440, %v2428
    %v2453 = vpack.c.bf16 %v2441, %v2429
    %v2454 = vld [vmem:[#allocation9] sm:$0xff]
    %v2455 = vld [vmem:[#allocation9 + $0x8] sm:$0xf]
    %v2456 = vld [vmem:[#allocation9 + $0xc] sm:$0xff]
    %v2457 = vld [vmem:[#allocation9 + $0x14] sm:$0xf]
    %v2458 = vld [vmem:[#allocation9 + $0x18] sm:$0xff]
    %v2459 = vld [vmem:[#allocation9 + $0x20] sm:$0xf]
    %v2460 = vld [vmem:[#allocation9 + $0x24] sm:$0xff]
    %v2461 = vld [vmem:[#allocation9 + $0x2c] sm:$0xf]
    %v2462 = vld [vmem:[#allocation9 + $0x30] sm:$0xff]
    %v2463 = vld [vmem:[#allocation9 + $0x38] sm:$0xf]
    %v2464 = vld [vmem:[#allocation9 + $0x3c] sm:$0xff]
    %v2465 = vld [vmem:[#allocation9 + $0x44] sm:$0xf]
    %v2466 = vld [vmem:[#allocation9 + $0x48] sm:$0xff]
    %v2467 = vld [vmem:[#allocation9 + $0x50] sm:$0xf]
    %v2468 = vld [vmem:[#allocation9 + $0x54] sm:$0xff]
    %v2469 = vld [vmem:[#allocation9 + $0x5c] sm:$0xf]
    %v2470 = vld [vmem:[#allocation9 + $0x60] sm:$0xff]
    %v2471 = vld [vmem:[#allocation9 + $0x68] sm:$0xf]
    %v2472 = vld [vmem:[#allocation9 + $0x6c] sm:$0xff]
    %v2473 = vld [vmem:[#allocation9 + $0x74] sm:$0xf]
    %v2474 = vld [vmem:[#allocation9 + $0x78] sm:$0xff]
    %v2475 = vld [vmem:[#allocation9 + $0x80] sm:$0xf]
    %v2476 = vld [vmem:[#allocation9 + $0x84] sm:$0xff]
    %v2477 = vld [vmem:[#allocation9 + $0x8c] sm:$0xf]
    %v2478 = vld [vmem:[#allocation9 + $0x90] sm:$0xff]
    %v2479 = vld [vmem:[#allocation9 + $0x98] sm:$0xf]
    %v2480 = vld [vmem:[#allocation9 + $0x9c] sm:$0xff]
    %v2481 = vld [vmem:[#allocation9 + $0xa4] sm:$0xf]
    %v2482 = vld [vmem:[#allocation9 + $0xa8] sm:$0xff]
    %v2483 = vld [vmem:[#allocation9 + $0xb0] sm:$0xf]
    %v2484 = vld [vmem:[#allocation9 + $0xb4] sm:$0xff]
    %v2485 = vld [vmem:[#allocation9 + $0xbc] sm:$0xf]
    %v2486 = vld [vmem:[#allocation9 + $0xc0] sm:$0xff]
    %v2487 = vld [vmem:[#allocation9 + $0xc8] sm:$0xf]
    %v2488 = vld [vmem:[#allocation9 + $0xcc] sm:$0xff]
    %v2489 = vld [vmem:[#allocation9 + $0xd4] sm:$0xf]
    %v2490 = vld [vmem:[#allocation9 + $0xd8] sm:$0xff]
    %v2491 = vld [vmem:[#allocation9 + $0xe0] sm:$0xf]
    %v2492 = vld [vmem:[#allocation9 + $0xe4] sm:$0xff]
    %v2493 = vld [vmem:[#allocation9 + $0xec] sm:$0xf]
    %v2494 = vld [vmem:[#allocation9 + $0xf0] sm:$0xff]
    %v2495 = vld [vmem:[#allocation9 + $0xf8] sm:$0xf]
    %v2496 = vld [vmem:[#allocation9 + $0xfc] sm:$0xff]
    %v2497 = vld [vmem:[#allocation9 + $0x104] sm:$0xf]
    %v2498 = vld [vmem:[#allocation9 + $0x108] sm:$0xff]
    %v2499 = vld [vmem:[#allocation9 + $0x110] sm:$0xf]
    %v2500 = vld [vmem:[#allocation9 + $0x114] sm:$0xff]
    %v2501 = vld [vmem:[#allocation9 + $0x11c] sm:$0xf]
    %v2502 = vld [vmem:[#allocation9 + $0x120] sm:$0xff]
    %v2503 = vld [vmem:[#allocation9 + $0x128] sm:$0xf]
    %v2504 = vld [vmem:[#allocation9 + $0x12c] sm:$0xff]
    %v2505 = vld [vmem:[#allocation9 + $0x134] sm:$0xf]
    %v2506 = vld [vmem:[#allocation9 + $0x138] sm:$0xff]
    %v2507 = vld [vmem:[#allocation9 + $0x140] sm:$0xf]
    %v2508 = vld [vmem:[#allocation9 + $0x144] sm:$0xff]
    %v2509 = vld [vmem:[#allocation9 + $0x14c] sm:$0xf]
    %v2510 = vld [vmem:[#allocation9 + $0x150] sm:$0xff]
    %v2511 = vld [vmem:[#allocation9 + $0x158] sm:$0xf]
    %v2512 = vld [vmem:[#allocation9 + $0x15c] sm:$0xff]
    %v2513 = vld [vmem:[#allocation9 + $0x164] sm:$0xf]
    %v2514 = vld [vmem:[#allocation9 + $0x168] sm:$0xff]
    %v2515 = vld [vmem:[#allocation9 + $0x170] sm:$0xf]
    %v2516 = vld [vmem:[#allocation9 + $0x174] sm:$0xff]
    %v2517 = vld [vmem:[#allocation9 + $0x17c] sm:$0xf]
    %v2518 = vld [vmem:[#allocation9 + $0x180] sm:$0xff]
    %v2519 = vld [vmem:[#allocation9 + $0x188] sm:$0xf]
    %v2520 = vld [vmem:[#allocation9 + $0x18c] sm:$0xff]
    %v2521 = vld [vmem:[#allocation9 + $0x194] sm:$0xf]
    %v2522 = vld [vmem:[#allocation9 + $0x198] sm:$0xff]
    %v2523 = vld [vmem:[#allocation9 + $0x1a0] sm:$0xf]
    %v2524 = vld [vmem:[#allocation9 + $0x1a4] sm:$0xff]
    %v2525 = vld [vmem:[#allocation9 + $0x1ac] sm:$0xf]
    %v2526 = vld [vmem:[#allocation9 + $0x1b0] sm:$0xff]
    %v2527 = vld [vmem:[#allocation9 + $0x1b8] sm:$0xf]
    %v2528 = vld [vmem:[#allocation9 + $0x1bc] sm:$0xff]
    %v2529 = vld [vmem:[#allocation9 + $0x1c4] sm:$0xf]
    %v2530 = vld [vmem:[#allocation9 + $0x1c8] sm:$0xff]
    %v2531 = vld [vmem:[#allocation9 + $0x1d0] sm:$0xf]
    %v2532 = vld [vmem:[#allocation9 + $0x1d4] sm:$0xff]
    %v2533 = vld [vmem:[#allocation9 + $0x1dc] sm:$0xf]
    %v2534 = vld [vmem:[#allocation9 + $0x1e0] sm:$0xff]
    %v2535 = vld [vmem:[#allocation9 + $0x1e8] sm:$0xf]
    %v2536 = vld [vmem:[#allocation9 + $0x1ec] sm:$0xff]
    %v2537 = vld [vmem:[#allocation9 + $0x1f4] sm:$0xf]
    %v2538 = vld [vmem:[#allocation9 + $0x1f8] sm:$0xff]
    %v2539 = vld [vmem:[#allocation9 + $0x200] sm:$0xf]
    %v2540 = vld [vmem:[#allocation9 + $0x204] sm:$0xff]
    %v2541 = vld [vmem:[#allocation9 + $0x20c] sm:$0xf]
    %v2542 = vld [vmem:[#allocation9 + $0x210] sm:$0xff]
    %v2543 = vld [vmem:[#allocation9 + $0x218] sm:$0xf]
    %v2544 = vld [vmem:[#allocation9 + $0x21c] sm:$0xff]
    %v2545 = vld [vmem:[#allocation9 + $0x224] sm:$0xf]
    %v2546 = vld [vmem:[#allocation9 + $0x228] sm:$0xff]
    %v2547 = vld [vmem:[#allocation9 + $0x230] sm:$0xf]
    %v2548 = vld [vmem:[#allocation9 + $0x234] sm:$0xff]
    %v2549 = vld [vmem:[#allocation9 + $0x23c] sm:$0xf]
    %v2550 = vld [vmem:[#allocation9 + $0x240] sm:$0xff]
    %v2551 = vld [vmem:[#allocation9 + $0x248] sm:$0xf]
    %v2552 = vld [vmem:[#allocation9 + $0x24c] sm:$0xff]
    %v2553 = vld [vmem:[#allocation9 + $0x254] sm:$0xf]
    %v2554 = vld [vmem:[#allocation9 + $0x258] sm:$0xff]
    %v2555 = vld [vmem:[#allocation9 + $0x260] sm:$0xf]
    %v2556 = vld [vmem:[#allocation9 + $0x264] sm:$0xff]
    %v2557 = vld [vmem:[#allocation9 + $0x26c] sm:$0xf]
    %v2558 = vld [vmem:[#allocation9 + $0x270] sm:$0xff]
    %v2559 = vld [vmem:[#allocation9 + $0x278] sm:$0xf]
    %v2560 = vld [vmem:[#allocation9 + $0x27c] sm:$0xff]
    %v2561 = vld [vmem:[#allocation9 + $0x284] sm:$0xf]
    %v2562 = vld [vmem:[#allocation9 + $0x288] sm:$0xff]
    %v2563 = vld [vmem:[#allocation9 + $0x290] sm:$0xf]
    %v2564 = vld [vmem:[#allocation9 + $0x294] sm:$0xff]
    %v2565 = vld [vmem:[#allocation9 + $0x29c] sm:$0xf]
    %v2566 = vld [vmem:[#allocation9 + $0x2a0] sm:$0xff]
    %v2567 = vld [vmem:[#allocation9 + $0x2a8] sm:$0xf]
    %v2568 = vld [vmem:[#allocation9 + $0x2ac] sm:$0xff]
    %v2569 = vld [vmem:[#allocation9 + $0x2b4] sm:$0xf]
    %v2570 = vld [vmem:[#allocation9 + $0x2b8] sm:$0xff]
    %v2571 = vld [vmem:[#allocation9 + $0x2c0] sm:$0xf]
    %v2572 = vld [vmem:[#allocation9 + $0x2c4] sm:$0xff]
    %v2573 = vld [vmem:[#allocation9 + $0x2cc] sm:$0xf]
    %v2574 = vld [vmem:[#allocation9 + $0x2d0] sm:$0xff]
    %v2575 = vld [vmem:[#allocation9 + $0x2d8] sm:$0xf]
    %v2576 = vld [vmem:[#allocation9 + $0x2dc] sm:$0xff]
    %v2577 = vld [vmem:[#allocation9 + $0x2e4] sm:$0xf]
    %v2578 = vld [vmem:[#allocation9 + $0x2e8] sm:$0xff]
    %v2579 = vld [vmem:[#allocation9 + $0x2f0] sm:$0xf]
    %v2580 = vld [vmem:[#allocation9 + $0x2f4] sm:$0xff]
    %v2581 = vld [vmem:[#allocation9 + $0x2fc] sm:$0xf]
    %v2582 = vld [vmem:[#allocation9 + $0x300] sm:$0xff]
    %v2583 = vld [vmem:[#allocation9 + $0x308] sm:$0xf]
    %v2584 = vld [vmem:[#allocation9 + $0x30c] sm:$0xff]
    %v2585 = vld [vmem:[#allocation9 + $0x314] sm:$0xf]
    %v2586 = vld [vmem:[#allocation9 + $0x318] sm:$0xff]
    %v2587 = vld [vmem:[#allocation9 + $0x320] sm:$0xf]
    %v2588 = vld [vmem:[#allocation9 + $0x324] sm:$0xff]
    %v2589 = vld [vmem:[#allocation9 + $0x32c] sm:$0xf]
    %v2590 = vld [vmem:[#allocation9 + $0x330] sm:$0xff]
    %v2591 = vld [vmem:[#allocation9 + $0x338] sm:$0xf]
    %v2592 = vld [vmem:[#allocation9 + $0x33c] sm:$0xff]
    %v2593 = vld [vmem:[#allocation9 + $0x344] sm:$0xf]
    %v2594 = vld [vmem:[#allocation9 + $0x348] sm:$0xff]
    %v2595 = vld [vmem:[#allocation9 + $0x350] sm:$0xf]
    %v2596 = vld [vmem:[#allocation9 + $0x354] sm:$0xff]
    %v2597 = vld [vmem:[#allocation9 + $0x35c] sm:$0xf]
    %v2598 = vld [vmem:[#allocation9 + $0x360] sm:$0xff]
    %v2599 = vld [vmem:[#allocation9 + $0x368] sm:$0xf]
    %v2600 = vld [vmem:[#allocation9 + $0x36c] sm:$0xff]
    %v2601 = vld [vmem:[#allocation9 + $0x374] sm:$0xf]
    %v2602 = vld [vmem:[#allocation9 + $0x378] sm:$0xff]
    %v2603 = vld [vmem:[#allocation9 + $0x380] sm:$0xf]
    %v2604 = vld [vmem:[#allocation9 + $0x384] sm:$0xff]
    %v2605 = vld [vmem:[#allocation9 + $0x38c] sm:$0xf]
    %v2606 = vld [vmem:[#allocation9 + $0x390] sm:$0xff]
    %v2607 = vld [vmem:[#allocation9 + $0x398] sm:$0xf]
    %v2608 = vld [vmem:[#allocation9 + $0x39c] sm:$0xff]
    %v2609 = vld [vmem:[#allocation9 + $0x3a4] sm:$0xf]
    %v2610 = vld [vmem:[#allocation9 + $0x3a8] sm:$0xff]
    %v2611 = vld [vmem:[#allocation9 + $0x3b0] sm:$0xf]
    %v2612 = vld [vmem:[#allocation9 + $0x3b4] sm:$0xff]
    %v2613 = vld [vmem:[#allocation9 + $0x3bc] sm:$0xf]
    %v2614 = vld [vmem:[#allocation9 + $0x3c0] sm:$0xff]
    %v2615 = vld [vmem:[#allocation9 + $0x3c8] sm:$0xf]
    %v2616 = vld [vmem:[#allocation9 + $0x3cc] sm:$0xff]
    %v2617 = vld [vmem:[#allocation9 + $0x3d4] sm:$0xf]
    %v2618 = vld [vmem:[#allocation9 + $0x3d8] sm:$0xff]
    %v2619 = vld [vmem:[#allocation9 + $0x3e0] sm:$0xf]
    %v2620 = vld [vmem:[#allocation9 + $0x3e4] sm:$0xff]
    %v2621 = vld [vmem:[#allocation9 + $0x3ec] sm:$0xf]
    %v2622 = vld [vmem:[#allocation9 + $0x3f0] sm:$0xff]
    %v2623 = vld [vmem:[#allocation9 + $0x3f8] sm:$0xf]
    %v2624 = vld [vmem:[#allocation9 + $0x3fc] sm:$0xff]
    %v2625 = vld [vmem:[#allocation9 + $0x404] sm:$0xf]
    %v2626 = vld [vmem:[#allocation9 + $0x408] sm:$0xff]
    %v2627 = vld [vmem:[#allocation9 + $0x410] sm:$0xf]
    %v2628 = vld [vmem:[#allocation9 + $0x414] sm:$0xff]
    %v2629 = vld [vmem:[#allocation9 + $0x41c] sm:$0xf]
    %v2630 = vld [vmem:[#allocation9 + $0x420] sm:$0xff]
    %v2631 = vld [vmem:[#allocation9 + $0x428] sm:$0xf]
    %v2632 = vld [vmem:[#allocation9 + $0x42c] sm:$0xff]
    %v2633 = vld [vmem:[#allocation9 + $0x434] sm:$0xf]
    %v2634 = vld [vmem:[#allocation9 + $0x438] sm:$0xff]
    %v2635 = vld [vmem:[#allocation9 + $0x440] sm:$0xf]
    %v2636 = vld [vmem:[#allocation9 + $0x444] sm:$0xff]
    %v2637 = vld [vmem:[#allocation9 + $0x44c] sm:$0xf]
    %v2638 = vld [vmem:[#allocation9 + $0x450] sm:$0xff]
    %v2639 = vld [vmem:[#allocation9 + $0x458] sm:$0xf]
    %v2640 = vld [vmem:[#allocation9 + $0x45c] sm:$0xff]
    %v2641 = vld [vmem:[#allocation9 + $0x464] sm:$0xf]
    %v2642 = vld [vmem:[#allocation9 + $0x468] sm:$0xff]
    %v2643 = vld [vmem:[#allocation9 + $0x470] sm:$0xf]
    %v2644 = vld [vmem:[#allocation9 + $0x474] sm:$0xff]
    %v2645 = vld [vmem:[#allocation9 + $0x47c] sm:$0xf]
    %v2646 = vld [vmem:[#allocation9 + $0x480] sm:$0xff]
    %v2647 = vld [vmem:[#allocation9 + $0x488] sm:$0xf]
    %v2648 = vld [vmem:[#allocation9 + $0x48c] sm:$0xff]
    %v2649 = vld [vmem:[#allocation9 + $0x494] sm:$0xf]
    %v2650 = vld [vmem:[#allocation9 + $0x498] sm:$0xff]
    %v2651 = vld [vmem:[#allocation9 + $0x4a0] sm:$0xf]
    %v2652 = vld [vmem:[#allocation9 + $0x4a4] sm:$0xff]
    %v2653 = vld [vmem:[#allocation9 + $0x4ac] sm:$0xf]
    %v2654 = vld [vmem:[#allocation9 + $0x4b0] sm:$0xff]
    %v2655 = vld [vmem:[#allocation9 + $0x4b8] sm:$0xf]
    %v2656 = vld [vmem:[#allocation9 + $0x4bc] sm:$0xff]
    %v2657 = vld [vmem:[#allocation9 + $0x4c4] sm:$0xf]
    %v2658 = vld [vmem:[#allocation9 + $0x4c8] sm:$0xff]
    %v2659 = vld [vmem:[#allocation9 + $0x4d0] sm:$0xf]
    %v2660 = vld [vmem:[#allocation9 + $0x4d4] sm:$0xff]
    %v2661 = vld [vmem:[#allocation9 + $0x4dc] sm:$0xf]
    %v2662 = vld [vmem:[#allocation9 + $0x4e0] sm:$0xff]
    %v2663 = vld [vmem:[#allocation9 + $0x4e8] sm:$0xf]
    %v2664 = vld [vmem:[#allocation9 + $0x4ec] sm:$0xff]
    %v2665 = vld [vmem:[#allocation9 + $0x4f4] sm:$0xf]
    %v2666 = vld [vmem:[#allocation9 + $0x4f8] sm:$0xff]
    %v2667 = vld [vmem:[#allocation9 + $0x500] sm:$0xf]
    %v2668 = vld [vmem:[#allocation9 + $0x504] sm:$0xff]
    %v2669 = vld [vmem:[#allocation9 + $0x50c] sm:$0xf]
    %v2670 = vld [vmem:[#allocation9 + $0x510] sm:$0xff]
    %v2671 = vld [vmem:[#allocation9 + $0x518] sm:$0xf]
    %v2672 = vld [vmem:[#allocation9 + $0x51c] sm:$0xff]
    %v2673 = vld [vmem:[#allocation9 + $0x524] sm:$0xf]
    %v2674 = vld [vmem:[#allocation9 + $0x528] sm:$0xff]
    %v2675 = vld [vmem:[#allocation9 + $0x530] sm:$0xf]
    %v2676 = vld [vmem:[#allocation9 + $0x534] sm:$0xff]
    %v2677 = vld [vmem:[#allocation9 + $0x53c] sm:$0xf]
    %v2678 = vld [vmem:[#allocation9 + $0x540] sm:$0xff]
    %v2679 = vld [vmem:[#allocation9 + $0x548] sm:$0xf]
    %v2680 = vld [vmem:[#allocation9 + $0x54c] sm:$0xff]
    %v2681 = vld [vmem:[#allocation9 + $0x554] sm:$0xf]
    %v2682 = vld [vmem:[#allocation9 + $0x558] sm:$0xff]
    %v2683 = vld [vmem:[#allocation9 + $0x560] sm:$0xf]
    %v2684 = vld [vmem:[#allocation9 + $0x564] sm:$0xff]
    %v2685 = vld [vmem:[#allocation9 + $0x56c] sm:$0xf]
    %v2686 = vld [vmem:[#allocation9 + $0x570] sm:$0xff]
    %v2687 = vld [vmem:[#allocation9 + $0x578] sm:$0xf]
    %v2688 = vld [vmem:[#allocation9 + $0x57c] sm:$0xff]
    %v2689 = vld [vmem:[#allocation9 + $0x584] sm:$0xf]
    %v2690 = vld [vmem:[#allocation9 + $0x588] sm:$0xff]
    %v2691 = vld [vmem:[#allocation9 + $0x590] sm:$0xf]
    %v2692 = vld [vmem:[#allocation9 + $0x594] sm:$0xff]
    %v2693 = vld [vmem:[#allocation9 + $0x59c] sm:$0xf]
    %v2694 = vld [vmem:[#allocation9 + $0x5a0] sm:$0xff]
    %v2695 = vld [vmem:[#allocation9 + $0x5a8] sm:$0xf]
    %v2696 = vld [vmem:[#allocation9 + $0x5ac] sm:$0xff]
    %v2697 = vld [vmem:[#allocation9 + $0x5b4] sm:$0xf]
    %v2698 = vld [vmem:[#allocation9 + $0x5b8] sm:$0xff]
    %v2699 = vld [vmem:[#allocation9 + $0x5c0] sm:$0xf]
    %v2700 = vld [vmem:[#allocation9 + $0x5c4] sm:$0xff]
    %v2701 = vld [vmem:[#allocation9 + $0x5cc] sm:$0xf]
    %v2702 = vld [vmem:[#allocation9 + $0x5d0] sm:$0xff]
    %v2703 = vld [vmem:[#allocation9 + $0x5d8] sm:$0xf]
    %v2704 = vld [vmem:[#allocation9 + $0x5dc] sm:$0xff]
    %v2705 = vld [vmem:[#allocation9 + $0x5e4] sm:$0xf]
    %v2706 = vld [vmem:[#allocation9 + $0x5e8] sm:$0xff]
    %v2707 = vld [vmem:[#allocation9 + $0x5f0] sm:$0xf]
    %v2708 = vld [vmem:[#allocation9 + $0x5f4] sm:$0xff]
    %v2709 = vld [vmem:[#allocation9 + $0x5fc] sm:$0xf]
    %v2710 = vld [vmem:[#allocation9 + $0x600] sm:$0xff]
    %v2711 = vld [vmem:[#allocation9 + $0x608] sm:$0xf]
    %v2712 = vld [vmem:[#allocation9 + $0x60c] sm:$0xff]
    %v2713 = vld [vmem:[#allocation9 + $0x614] sm:$0xf]
    %v2714 = vld [vmem:[#allocation9 + $0x618] sm:$0xff]
    %v2715 = vld [vmem:[#allocation9 + $0x620] sm:$0xf]
    %v2716 = vld [vmem:[#allocation9 + $0x624] sm:$0xff]
    %v2717 = vld [vmem:[#allocation9 + $0x62c] sm:$0xf]
    %v2718 = vld [vmem:[#allocation9 + $0x630] sm:$0xff]
    %v2719 = vld [vmem:[#allocation9 + $0x638] sm:$0xf]
    %v2720 = vld [vmem:[#allocation9 + $0x63c] sm:$0xff]
    %v2721 = vld [vmem:[#allocation9 + $0x644] sm:$0xf]
    %v2722 = vld [vmem:[#allocation9 + $0x648] sm:$0xff]
    %v2723 = vld [vmem:[#allocation9 + $0x650] sm:$0xf]
    %v2724 = vld [vmem:[#allocation9 + $0x654] sm:$0xff]
    %v2725 = vld [vmem:[#allocation9 + $0x65c] sm:$0xf]
    %v2726 = vld [vmem:[#allocation9 + $0x660] sm:$0xff]
    %v2727 = vld [vmem:[#allocation9 + $0x668] sm:$0xf]
    %v2728 = vld [vmem:[#allocation9 + $0x66c] sm:$0xff]
    %v2729 = vld [vmem:[#allocation9 + $0x674] sm:$0xf]
    %v2730 = vld [vmem:[#allocation9 + $0x678] sm:$0xff]
    %v2731 = vld [vmem:[#allocation9 + $0x680] sm:$0xf]
    %v2732 = vld [vmem:[#allocation9 + $0x684] sm:$0xff]
    %v2733 = vld [vmem:[#allocation9 + $0x68c] sm:$0xf]
    %v2734 = vld [vmem:[#allocation9 + $0x690] sm:$0xff]
    %v2735 = vld [vmem:[#allocation9 + $0x698] sm:$0xf]
    %v2736 = vld [vmem:[#allocation9 + $0x69c] sm:$0xff]
    %v2737 = vld [vmem:[#allocation9 + $0x6a4] sm:$0xf]
    %v2738 = vld [vmem:[#allocation9 + $0x6a8] sm:$0xff]
    %v2739 = vld [vmem:[#allocation9 + $0x6b0] sm:$0xf]
    %v2740 = vld [vmem:[#allocation9 + $0x6b4] sm:$0xff]
    %v2741 = vld [vmem:[#allocation9 + $0x6bc] sm:$0xf]
    %v2742 = vld [vmem:[#allocation9 + $0x6c0] sm:$0xff]
    %v2743 = vld [vmem:[#allocation9 + $0x6c8] sm:$0xf]
    %v2744 = vld [vmem:[#allocation9 + $0x6cc] sm:$0xff]
    %v2745 = vld [vmem:[#allocation9 + $0x6d4] sm:$0xf]
    %v2746 = vld [vmem:[#allocation9 + $0x6d8] sm:$0xff]
    %v2747 = vld [vmem:[#allocation9 + $0x6e0] sm:$0xf]
    %v2748 = vld [vmem:[#allocation9 + $0x6e4] sm:$0xff]
    %v2749 = vld [vmem:[#allocation9 + $0x6ec] sm:$0xf]
    %v2750 = vld [vmem:[#allocation9 + $0x6f0] sm:$0xff]
    %v2751 = vld [vmem:[#allocation9 + $0x6f8] sm:$0xf]
    %v2752 = vld [vmem:[#allocation9 + $0x6fc] sm:$0xff]
    %v2753 = vld [vmem:[#allocation9 + $0x704] sm:$0xf]
    %v2754 = vld [vmem:[#allocation9 + $0x708] sm:$0xff]
    %v2755 = vld [vmem:[#allocation9 + $0x710] sm:$0xf]
    %v2756 = vld [vmem:[#allocation9 + $0x714] sm:$0xff]
    %v2757 = vld [vmem:[#allocation9 + $0x71c] sm:$0xf]
    %v2758 = vld [vmem:[#allocation9 + $0x720] sm:$0xff]
    %v2759 = vld [vmem:[#allocation9 + $0x728] sm:$0xf]
    %v2760 = vld [vmem:[#allocation9 + $0x72c] sm:$0xff]
    %v2761 = vld [vmem:[#allocation9 + $0x734] sm:$0xf]
    %v2762 = vld [vmem:[#allocation9 + $0x738] sm:$0xff]
    %v2763 = vld [vmem:[#allocation9 + $0x740] sm:$0xf]
    %v2764 = vld [vmem:[#allocation9 + $0x744] sm:$0xff]
    %v2765 = vld [vmem:[#allocation9 + $0x74c] sm:$0xf]
    %v2766 = vld [vmem:[#allocation9 + $0x750] sm:$0xff]
    %v2767 = vld [vmem:[#allocation9 + $0x758] sm:$0xf]
    %v2768 = vld [vmem:[#allocation9 + $0x75c] sm:$0xff]
    %v2769 = vld [vmem:[#allocation9 + $0x764] sm:$0xf]
    %v2770 = vld [vmem:[#allocation9 + $0x768] sm:$0xff]
    %v2771 = vld [vmem:[#allocation9 + $0x770] sm:$0xf]
    %v2772 = vld [vmem:[#allocation9 + $0x774] sm:$0xff]
    %v2773 = vld [vmem:[#allocation9 + $0x77c] sm:$0xf]
    %v2774 = vld [vmem:[#allocation9 + $0x780] sm:$0xff]
    %v2775 = vld [vmem:[#allocation9 + $0x788] sm:$0xf]
    %v2776 = vld [vmem:[#allocation9 + $0x78c] sm:$0xff]
    %v2777 = vld [vmem:[#allocation9 + $0x794] sm:$0xf]
    %v2778 = vld [vmem:[#allocation9 + $0x798] sm:$0xff]
    %v2779 = vld [vmem:[#allocation9 + $0x7a0] sm:$0xf]
    %v2780 = vld [vmem:[#allocation9 + $0x7a4] sm:$0xff]
    %v2781 = vld [vmem:[#allocation9 + $0x7ac] sm:$0xf]
    %v2782 = vld [vmem:[#allocation9 + $0x7b0] sm:$0xff]
    %v2783 = vld [vmem:[#allocation9 + $0x7b8] sm:$0xf]
    %v2784 = vld [vmem:[#allocation9 + $0x7bc] sm:$0xff]
    %v2785 = vld [vmem:[#allocation9 + $0x7c4] sm:$0xf]
    %v2786 = vld [vmem:[#allocation9 + $0x7c8] sm:$0xff]
    %v2787 = vld [vmem:[#allocation9 + $0x7d0] sm:$0xf]
    %v2788 = vld [vmem:[#allocation9 + $0x7d4] sm:$0xff]
    %v2789 = vld [vmem:[#allocation9 + $0x7dc] sm:$0xf]
    %v2790 = vld [vmem:[#allocation9 + $0x7e0] sm:$0xff]
    %v2791 = vld [vmem:[#allocation9 + $0x7e8] sm:$0xf]
    %v2792 = vld [vmem:[#allocation9 + $0x7ec] sm:$0xff]
    %v2793 = vld [vmem:[#allocation9 + $0x7f4] sm:$0xf]
    %v2794 = vld [vmem:[#allocation9 + $0x7f8] sm:$0xff]
    %v2795 = vld [vmem:[#allocation9 + $0x800] sm:$0xf]
    %v2796 = vld [vmem:[#allocation9 + $0x804] sm:$0xff]
    %v2797 = vld [vmem:[#allocation9 + $0x80c] sm:$0xf]
    %v2798 = vld [vmem:[#allocation9 + $0x810] sm:$0xff]
    %v2799 = vld [vmem:[#allocation9 + $0x818] sm:$0xf]
    %v2800 = vld [vmem:[#allocation9 + $0x81c] sm:$0xff]
    %v2801 = vld [vmem:[#allocation9 + $0x824] sm:$0xf]
    %v2802 = vld [vmem:[#allocation9 + $0x828] sm:$0xff]
    %v2803 = vld [vmem:[#allocation9 + $0x830] sm:$0xf]
    %v2804 = vld [vmem:[#allocation9 + $0x834] sm:$0xff]
    %v2805 = vld [vmem:[#allocation9 + $0x83c] sm:$0xf]
    %v2806 = vld [vmem:[#allocation9 + $0x840] sm:$0xff]
    %v2807 = vld [vmem:[#allocation9 + $0x848] sm:$0xf]
    %v2808 = vld [vmem:[#allocation9 + $0x84c] sm:$0xff]
    %v2809 = vld [vmem:[#allocation9 + $0x854] sm:$0xf]
    %v2810 = vld [vmem:[#allocation9 + $0x858] sm:$0xff]
    %v2811 = vld [vmem:[#allocation9 + $0x860] sm:$0xf]
    %v2812 = vld [vmem:[#allocation9 + $0x864] sm:$0xff]
    %v2813 = vld [vmem:[#allocation9 + $0x86c] sm:$0xf]
    %v2814 = vld [vmem:[#allocation9 + $0x870] sm:$0xff]
    %v2815 = vld [vmem:[#allocation9 + $0x878] sm:$0xf]
    %v2816 = vld [vmem:[#allocation9 + $0x87c] sm:$0xff]
    %v2817 = vld [vmem:[#allocation9 + $0x884] sm:$0xf]
    %v2818 = vld [vmem:[#allocation9 + $0x888] sm:$0xff]
    %v2819 = vld [vmem:[#allocation9 + $0x890] sm:$0xf]
    %v2820 = vld [vmem:[#allocation9 + $0x894] sm:$0xff]
    %v2821 = vld [vmem:[#allocation9 + $0x89c] sm:$0xf]
    %v2822 = vld [vmem:[#allocation9 + $0x8a0] sm:$0xff]
    %v2823 = vld [vmem:[#allocation9 + $0x8a8] sm:$0xf]
    %v2824 = vld [vmem:[#allocation9 + $0x8ac] sm:$0xff]
    %v2825 = vld [vmem:[#allocation9 + $0x8b4] sm:$0xf]
    %v2826 = vld [vmem:[#allocation9 + $0x8b8] sm:$0xff]
    %v2827 = vld [vmem:[#allocation9 + $0x8c0] sm:$0xf]
    %v2828 = vld [vmem:[#allocation9 + $0x8c4] sm:$0xff]
    %v2829 = vld [vmem:[#allocation9 + $0x8cc] sm:$0xf]
    %v2830 = vld [vmem:[#allocation9 + $0x8d0] sm:$0xff]
    %v2831 = vld [vmem:[#allocation9 + $0x8d8] sm:$0xf]
    %v2832 = vld [vmem:[#allocation9 + $0x8dc] sm:$0xff]
    %v2833 = vld [vmem:[#allocation9 + $0x8e4] sm:$0xf]
    %v2834 = vld [vmem:[#allocation9 + $0x8e8] sm:$0xff]
    %v2835 = vld [vmem:[#allocation9 + $0x8f0] sm:$0xf]
    %v2836 = vld [vmem:[#allocation9 + $0x8f4] sm:$0xff]
    %v2837 = vld [vmem:[#allocation9 + $0x8fc] sm:$0xf]
    %v2838 = vld [vmem:[#allocation11] sm:$0x7]
    %v2840 = vlaneseq
    %v2841 = vshrl.u32 %v2840, 7
    %v2842 = vsub.s32 0, %v2841
    %v2843 = vrot.slane %v2838, %v2842
    %v2844 = vlaneseq
    %v2845 = vshrl.u32 %v2844, 7
    %v2846 = vsub.s32 1, %v2845
    %v2847 = vrot.slane %v2838, %v2846
    %v2848 = vlaneseq
    %v2849 = vshrl.u32 %v2848, 7
    %v2850 = vsub.s32 2, %v2849
    %v2851 = vrot.slane %v2838, %v2850
    %v3239 = vunpack.c.l.b16 %v2454
    %v3240 = vunpack.c.h.b16 %v2454
    %v3241 = vunpack.c.l.b16 %v2455
    %v3242 = vunpack.c.l.b16 %v2456
    %v3243 = vunpack.c.h.b16 %v2456
    %v3244 = vunpack.c.l.b16 %v2457
    %v3245 = vunpack.c.l.b16 %v2458
    %v3246 = vunpack.c.h.b16 %v2458
    %v3247 = vunpack.c.l.b16 %v2459
    %v3248 = vunpack.c.l.b16 %v2460
    %v3249 = vunpack.c.h.b16 %v2460
    %v3250 = vunpack.c.l.b16 %v2461
    %v3251 = vunpack.c.l.b16 %v2462
    %v3252 = vunpack.c.h.b16 %v2462
    %v3253 = vunpack.c.l.b16 %v2463
    %v3254 = vunpack.c.l.b16 %v2464
    %v3255 = vunpack.c.h.b16 %v2464
    %v3256 = vunpack.c.l.b16 %v2465
    %v3257 = vunpack.c.l.b16 %v2466
    %v3258 = vunpack.c.h.b16 %v2466
    %v3259 = vunpack.c.l.b16 %v2467
    %v3260 = vunpack.c.l.b16 %v2468
    %v3261 = vunpack.c.h.b16 %v2468
    %v3262 = vunpack.c.l.b16 %v2469
    %v3263 = vunpack.c.l.b16 %v2470
    %v3264 = vunpack.c.h.b16 %v2470
    %v3265 = vunpack.c.l.b16 %v2471
    %v3266 = vunpack.c.l.b16 %v2472
    %v3267 = vunpack.c.h.b16 %v2472
    %v3268 = vunpack.c.l.b16 %v2473
    %v3269 = vunpack.c.l.b16 %v2474
    %v3270 = vunpack.c.h.b16 %v2474
    %v3271 = vunpack.c.l.b16 %v2475
    %v3272 = vunpack.c.l.b16 %v2476
    %v3273 = vunpack.c.h.b16 %v2476
    %v3274 = vunpack.c.l.b16 %v2477
    %v3275 = vunpack.c.l.b16 %v2478
    %v3276 = vunpack.c.h.b16 %v2478
    %v3277 = vunpack.c.l.b16 %v2479
    %v3278 = vunpack.c.l.b16 %v2480
    %v3279 = vunpack.c.h.b16 %v2480
    %v3280 = vunpack.c.l.b16 %v2481
    %v3281 = vunpack.c.l.b16 %v2482
    %v3282 = vunpack.c.h.b16 %v2482
    %v3283 = vunpack.c.l.b16 %v2483
    %v3284 = vunpack.c.l.b16 %v2484
    %v3285 = vunpack.c.h.b16 %v2484
    %v3286 = vunpack.c.l.b16 %v2485
    %v3287 = vunpack.c.l.b16 %v2486
    %v3288 = vunpack.c.h.b16 %v2486
    %v3289 = vunpack.c.l.b16 %v2487
    %v3290 = vunpack.c.l.b16 %v2488
    %v3291 = vunpack.c.h.b16 %v2488
    %v3292 = vunpack.c.l.b16 %v2489
    %v3293 = vunpack.c.l.b16 %v2490
    %v3294 = vunpack.c.h.b16 %v2490
    %v3295 = vunpack.c.l.b16 %v2491
    %v3296 = vunpack.c.l.b16 %v2492
    %v3297 = vunpack.c.h.b16 %v2492
    %v3298 = vunpack.c.l.b16 %v2493
    %v3299 = vunpack.c.l.b16 %v2494
    %v3300 = vunpack.c.h.b16 %v2494
    %v3301 = vunpack.c.l.b16 %v2495
    %v3302 = vunpack.c.l.b16 %v2496
    %v3303 = vunpack.c.h.b16 %v2496
    %v3304 = vunpack.c.l.b16 %v2497
    %v3305 = vunpack.c.l.b16 %v2498
    %v3306 = vunpack.c.h.b16 %v2498
    %v3307 = vunpack.c.l.b16 %v2499
    %v3308 = vunpack.c.l.b16 %v2500
    %v3309 = vunpack.c.h.b16 %v2500
    %v3310 = vunpack.c.l.b16 %v2501
    %v3311 = vunpack.c.l.b16 %v2502
    %v3312 = vunpack.c.h.b16 %v2502
    %v3313 = vunpack.c.l.b16 %v2503
    %v3314 = vunpack.c.l.b16 %v2504
    %v3315 = vunpack.c.h.b16 %v2504
    %v3316 = vunpack.c.l.b16 %v2505
    %v3317 = vunpack.c.l.b16 %v2506
    %v3318 = vunpack.c.h.b16 %v2506
    %v3319 = vunpack.c.l.b16 %v2507
    %v3320 = vunpack.c.l.b16 %v2508
    %v3321 = vunpack.c.h.b16 %v2508
    %v3322 = vunpack.c.l.b16 %v2509
    %v3323 = vunpack.c.l.b16 %v2510
    %v3324 = vunpack.c.h.b16 %v2510
    %v3325 = vunpack.c.l.b16 %v2511
    %v3326 = vunpack.c.l.b16 %v2512
    %v3327 = vunpack.c.h.b16 %v2512
    %v3328 = vunpack.c.l.b16 %v2513
    %v3329 = vunpack.c.l.b16 %v2514
    %v3330 = vunpack.c.h.b16 %v2514
    %v3331 = vunpack.c.l.b16 %v2515
    %v3332 = vunpack.c.l.b16 %v2516
    %v3333 = vunpack.c.h.b16 %v2516
    %v3334 = vunpack.c.l.b16 %v2517
    %v3335 = vunpack.c.l.b16 %v2518
    %v3336 = vunpack.c.h.b16 %v2518
    %v3337 = vunpack.c.l.b16 %v2519
    %v3338 = vunpack.c.l.b16 %v2520
    %v3339 = vunpack.c.h.b16 %v2520
    %v3340 = vunpack.c.l.b16 %v2521
    %v3341 = vunpack.c.l.b16 %v2522
    %v3342 = vunpack.c.h.b16 %v2522
    %v3343 = vunpack.c.l.b16 %v2523
    %v3344 = vunpack.c.l.b16 %v2524
    %v3345 = vunpack.c.h.b16 %v2524
    %v3346 = vunpack.c.l.b16 %v2525
    %v3347 = vunpack.c.l.b16 %v2526
    %v3348 = vunpack.c.h.b16 %v2526
    %v3349 = vunpack.c.l.b16 %v2527
    %v3350 = vunpack.c.l.b16 %v2528
    %v3351 = vunpack.c.h.b16 %v2528
    %v3352 = vunpack.c.l.b16 %v2529
    %v3353 = vunpack.c.l.b16 %v2530
    %v3354 = vunpack.c.h.b16 %v2530
    %v3355 = vunpack.c.l.b16 %v2531
    %v3356 = vunpack.c.l.b16 %v2532
    %v3357 = vunpack.c.h.b16 %v2532
    %v3358 = vunpack.c.l.b16 %v2533
    %v3359 = vunpack.c.l.b16 %v2534
    %v3360 = vunpack.c.h.b16 %v2534
    %v3361 = vunpack.c.l.b16 %v2535
    %v3362 = vunpack.c.l.b16 %v2536
    %v3363 = vunpack.c.h.b16 %v2536
    %v3364 = vunpack.c.l.b16 %v2537
    %v3365 = vunpack.c.l.b16 %v2538
    %v3366 = vunpack.c.h.b16 %v2538
    %v3367 = vunpack.c.l.b16 %v2539
    %v3368 = vunpack.c.l.b16 %v2540
    %v3369 = vunpack.c.h.b16 %v2540
    %v3370 = vunpack.c.l.b16 %v2541
    %v3371 = vunpack.c.l.b16 %v2542
    %v3372 = vunpack.c.h.b16 %v2542
    %v3373 = vunpack.c.l.b16 %v2543
    %v3374 = vunpack.c.l.b16 %v2544
    %v3375 = vunpack.c.h.b16 %v2544
    %v3376 = vunpack.c.l.b16 %v2545
    %v3377 = vunpack.c.l.b16 %v2546
    %v3378 = vunpack.c.h.b16 %v2546
    %v3379 = vunpack.c.l.b16 %v2547
    %v3380 = vunpack.c.l.b16 %v2548
    %v3381 = vunpack.c.h.b16 %v2548
    %v3382 = vunpack.c.l.b16 %v2549
    %v3383 = vunpack.c.l.b16 %v2550
    %v3384 = vunpack.c.h.b16 %v2550
    %v3385 = vunpack.c.l.b16 %v2551
    %v3386 = vunpack.c.l.b16 %v2552
    %v3387 = vunpack.c.h.b16 %v2552
    %v3388 = vunpack.c.l.b16 %v2553
    %v3389 = vunpack.c.l.b16 %v2554
    %v3390 = vunpack.c.h.b16 %v2554
    %v3391 = vunpack.c.l.b16 %v2555
    %v3392 = vunpack.c.l.b16 %v2556
    %v3393 = vunpack.c.h.b16 %v2556
    %v3394 = vunpack.c.l.b16 %v2557
    %v3395 = vunpack.c.l.b16 %v2558
    %v3396 = vunpack.c.h.b16 %v2558
    %v3397 = vunpack.c.l.b16 %v2559
    %v3398 = vunpack.c.l.b16 %v2560
    %v3399 = vunpack.c.h.b16 %v2560
    %v3400 = vunpack.c.l.b16 %v2561
    %v3401 = vunpack.c.l.b16 %v2562
    %v3402 = vunpack.c.h.b16 %v2562
    %v3403 = vunpack.c.l.b16 %v2563
    %v3404 = vunpack.c.l.b16 %v2564
    %v3405 = vunpack.c.h.b16 %v2564
    %v3406 = vunpack.c.l.b16 %v2565
    %v3407 = vunpack.c.l.b16 %v2566
    %v3408 = vunpack.c.h.b16 %v2566
    %v3409 = vunpack.c.l.b16 %v2567
    %v3410 = vunpack.c.l.b16 %v2568
    %v3411 = vunpack.c.h.b16 %v2568
    %v3412 = vunpack.c.l.b16 %v2569
    %v3413 = vunpack.c.l.b16 %v2570
    %v3414 = vunpack.c.h.b16 %v2570
    %v3415 = vunpack.c.l.b16 %v2571
    %v3416 = vunpack.c.l.b16 %v2572
    %v3417 = vunpack.c.h.b16 %v2572
    %v3418 = vunpack.c.l.b16 %v2573
    %v3419 = vunpack.c.l.b16 %v2574
    %v3420 = vunpack.c.h.b16 %v2574
    %v3421 = vunpack.c.l.b16 %v2575
    %v3422 = vunpack.c.l.b16 %v2576
    %v3423 = vunpack.c.h.b16 %v2576
    %v3424 = vunpack.c.l.b16 %v2577
    %v3425 = vunpack.c.l.b16 %v2578
    %v3426 = vunpack.c.h.b16 %v2578
    %v3427 = vunpack.c.l.b16 %v2579
    %v3428 = vunpack.c.l.b16 %v2580
    %v3429 = vunpack.c.h.b16 %v2580
    %v3430 = vunpack.c.l.b16 %v2581
    %v3431 = vunpack.c.l.b16 %v2582
    %v3432 = vunpack.c.h.b16 %v2582
    %v3433 = vunpack.c.l.b16 %v2583
    %v3434 = vunpack.c.l.b16 %v2584
    %v3435 = vunpack.c.h.b16 %v2584
    %v3436 = vunpack.c.l.b16 %v2585
    %v3437 = vunpack.c.l.b16 %v2586
    %v3438 = vunpack.c.h.b16 %v2586
    %v3439 = vunpack.c.l.b16 %v2587
    %v3440 = vunpack.c.l.b16 %v2588
    %v3441 = vunpack.c.h.b16 %v2588
    %v3442 = vunpack.c.l.b16 %v2589
    %v3443 = vunpack.c.l.b16 %v2590
    %v3444 = vunpack.c.h.b16 %v2590
    %v3445 = vunpack.c.l.b16 %v2591
    %v3446 = vunpack.c.l.b16 %v2592
    %v3447 = vunpack.c.h.b16 %v2592
    %v3448 = vunpack.c.l.b16 %v2593
    %v3449 = vunpack.c.l.b16 %v2594
    %v3450 = vunpack.c.h.b16 %v2594
    %v3451 = vunpack.c.l.b16 %v2595
    %v3452 = vunpack.c.l.b16 %v2596
    %v3453 = vunpack.c.h.b16 %v2596
    %v3454 = vunpack.c.l.b16 %v2597
    %v3455 = vunpack.c.l.b16 %v2598
    %v3456 = vunpack.c.h.b16 %v2598
    %v3457 = vunpack.c.l.b16 %v2599
    %v3458 = vunpack.c.l.b16 %v2600
    %v3459 = vunpack.c.h.b16 %v2600
    %v3460 = vunpack.c.l.b16 %v2601
    %v3461 = vunpack.c.l.b16 %v2602
    %v3462 = vunpack.c.h.b16 %v2602
    %v3463 = vunpack.c.l.b16 %v2603
    %v3464 = vunpack.c.l.b16 %v2604
    %v3465 = vunpack.c.h.b16 %v2604
    %v3466 = vunpack.c.l.b16 %v2605
    %v3467 = vunpack.c.l.b16 %v2606
    %v3468 = vunpack.c.h.b16 %v2606
    %v3469 = vunpack.c.l.b16 %v2607
    %v3470 = vunpack.c.l.b16 %v2608
    %v3471 = vunpack.c.h.b16 %v2608
    %v3472 = vunpack.c.l.b16 %v2609
    %v3473 = vunpack.c.l.b16 %v2610
    %v3474 = vunpack.c.h.b16 %v2610
    %v3475 = vunpack.c.l.b16 %v2611
    %v3476 = vunpack.c.l.b16 %v2612
    %v3477 = vunpack.c.h.b16 %v2612
    %v3478 = vunpack.c.l.b16 %v2613
    %v3479 = vunpack.c.l.b16 %v2614
    %v3480 = vunpack.c.h.b16 %v2614
    %v3481 = vunpack.c.l.b16 %v2615
    %v3482 = vunpack.c.l.b16 %v2616
    %v3483 = vunpack.c.h.b16 %v2616
    %v3484 = vunpack.c.l.b16 %v2617
    %v3485 = vunpack.c.l.b16 %v2618
    %v3486 = vunpack.c.h.b16 %v2618
    %v3487 = vunpack.c.l.b16 %v2619
    %v3488 = vunpack.c.l.b16 %v2620
    %v3489 = vunpack.c.h.b16 %v2620
    %v3490 = vunpack.c.l.b16 %v2621
    %v3491 = vunpack.c.l.b16 %v2622
    %v3492 = vunpack.c.h.b16 %v2622
    %v3493 = vunpack.c.l.b16 %v2623
    %v3494 = vunpack.c.l.b16 %v2624
    %v3495 = vunpack.c.h.b16 %v2624
    %v3496 = vunpack.c.l.b16 %v2625
    %v3497 = vunpack.c.l.b16 %v2626
    %v3498 = vunpack.c.h.b16 %v2626
    %v3499 = vunpack.c.l.b16 %v2627
    %v3500 = vunpack.c.l.b16 %v2628
    %v3501 = vunpack.c.h.b16 %v2628
    %v3502 = vunpack.c.l.b16 %v2629
    %v3503 = vunpack.c.l.b16 %v2630
    %v3504 = vunpack.c.h.b16 %v2630
    %v3505 = vunpack.c.l.b16 %v2631
    %v3506 = vunpack.c.l.b16 %v2632
    %v3507 = vunpack.c.h.b16 %v2632
    %v3508 = vunpack.c.l.b16 %v2633
    %v3509 = vunpack.c.l.b16 %v2634
    %v3510 = vunpack.c.h.b16 %v2634
    %v3511 = vunpack.c.l.b16 %v2635
    %v3512 = vunpack.c.l.b16 %v2636
    %v3513 = vunpack.c.h.b16 %v2636
    %v3514 = vunpack.c.l.b16 %v2637
    %v3515 = vunpack.c.l.b16 %v2638
    %v3516 = vunpack.c.h.b16 %v2638
    %v3517 = vunpack.c.l.b16 %v2639
    %v3518 = vunpack.c.l.b16 %v2640
    %v3519 = vunpack.c.h.b16 %v2640
    %v3520 = vunpack.c.l.b16 %v2641
    %v3521 = vunpack.c.l.b16 %v2642
    %v3522 = vunpack.c.h.b16 %v2642
    %v3523 = vunpack.c.l.b16 %v2643
    %v3524 = vunpack.c.l.b16 %v2644
    %v3525 = vunpack.c.h.b16 %v2644
    %v3526 = vunpack.c.l.b16 %v2645
    %v3527 = vunpack.c.l.b16 %v2646
    %v3528 = vunpack.c.h.b16 %v2646
    %v3529 = vunpack.c.l.b16 %v2647
    %v3530 = vunpack.c.l.b16 %v2648
    %v3531 = vunpack.c.h.b16 %v2648
    %v3532 = vunpack.c.l.b16 %v2649
    %v3533 = vunpack.c.l.b16 %v2650
    %v3534 = vunpack.c.h.b16 %v2650
    %v3535 = vunpack.c.l.b16 %v2651
    %v3536 = vunpack.c.l.b16 %v2652
    %v3537 = vunpack.c.h.b16 %v2652
    %v3538 = vunpack.c.l.b16 %v2653
    %v3539 = vunpack.c.l.b16 %v2654
    %v3540 = vunpack.c.h.b16 %v2654
    %v3541 = vunpack.c.l.b16 %v2655
    %v3542 = vunpack.c.l.b16 %v2656
    %v3543 = vunpack.c.h.b16 %v2656
    %v3544 = vunpack.c.l.b16 %v2657
    %v3545 = vunpack.c.l.b16 %v2658
    %v3546 = vunpack.c.h.b16 %v2658
    %v3547 = vunpack.c.l.b16 %v2659
    %v3548 = vunpack.c.l.b16 %v2660
    %v3549 = vunpack.c.h.b16 %v2660
    %v3550 = vunpack.c.l.b16 %v2661
    %v3551 = vunpack.c.l.b16 %v2662
    %v3552 = vunpack.c.h.b16 %v2662
    %v3553 = vunpack.c.l.b16 %v2663
    %v3554 = vunpack.c.l.b16 %v2664
    %v3555 = vunpack.c.h.b16 %v2664
    %v3556 = vunpack.c.l.b16 %v2665
    %v3557 = vunpack.c.l.b16 %v2666
    %v3558 = vunpack.c.h.b16 %v2666
    %v3559 = vunpack.c.l.b16 %v2667
    %v3560 = vunpack.c.l.b16 %v2668
    %v3561 = vunpack.c.h.b16 %v2668
    %v3562 = vunpack.c.l.b16 %v2669
    %v3563 = vunpack.c.l.b16 %v2670
    %v3564 = vunpack.c.h.b16 %v2670
    %v3565 = vunpack.c.l.b16 %v2671
    %v3566 = vunpack.c.l.b16 %v2672
    %v3567 = vunpack.c.h.b16 %v2672
    %v3568 = vunpack.c.l.b16 %v2673
    %v3569 = vunpack.c.l.b16 %v2674
    %v3570 = vunpack.c.h.b16 %v2674
    %v3571 = vunpack.c.l.b16 %v2675
    %v3572 = vunpack.c.l.b16 %v2676
    %v3573 = vunpack.c.h.b16 %v2676
    %v3574 = vunpack.c.l.b16 %v2677
    %v3575 = vunpack.c.l.b16 %v2678
    %v3576 = vunpack.c.h.b16 %v2678
    %v3577 = vunpack.c.l.b16 %v2679
    %v3578 = vunpack.c.l.b16 %v2680
    %v3579 = vunpack.c.h.b16 %v2680
    %v3580 = vunpack.c.l.b16 %v2681
    %v3581 = vunpack.c.l.b16 %v2682
    %v3582 = vunpack.c.h.b16 %v2682
    %v3583 = vunpack.c.l.b16 %v2683
    %v3584 = vunpack.c.l.b16 %v2684
    %v3585 = vunpack.c.h.b16 %v2684
    %v3586 = vunpack.c.l.b16 %v2685
    %v3587 = vunpack.c.l.b16 %v2686
    %v3588 = vunpack.c.h.b16 %v2686
    %v3589 = vunpack.c.l.b16 %v2687
    %v3590 = vunpack.c.l.b16 %v2688
    %v3591 = vunpack.c.h.b16 %v2688
    %v3592 = vunpack.c.l.b16 %v2689
    %v3593 = vunpack.c.l.b16 %v2690
    %v3594 = vunpack.c.h.b16 %v2690
    %v3595 = vunpack.c.l.b16 %v2691
    %v3596 = vunpack.c.l.b16 %v2692
    %v3597 = vunpack.c.h.b16 %v2692
    %v3598 = vunpack.c.l.b16 %v2693
    %v3599 = vunpack.c.l.b16 %v2694
    %v3600 = vunpack.c.h.b16 %v2694
    %v3601 = vunpack.c.l.b16 %v2695
    %v3602 = vunpack.c.l.b16 %v2696
    %v3603 = vunpack.c.h.b16 %v2696
    %v3604 = vunpack.c.l.b16 %v2697
    %v3605 = vunpack.c.l.b16 %v2698
    %v3606 = vunpack.c.h.b16 %v2698
    %v3607 = vunpack.c.l.b16 %v2699
    %v3608 = vunpack.c.l.b16 %v2700
    %v3609 = vunpack.c.h.b16 %v2700
    %v3610 = vunpack.c.l.b16 %v2701
    %v3611 = vunpack.c.l.b16 %v2702
    %v3612 = vunpack.c.h.b16 %v2702
    %v3613 = vunpack.c.l.b16 %v2703
    %v3614 = vunpack.c.l.b16 %v2704
    %v3615 = vunpack.c.h.b16 %v2704
    %v3616 = vunpack.c.l.b16 %v2705
    %v3617 = vunpack.c.l.b16 %v2706
    %v3618 = vunpack.c.h.b16 %v2706
    %v3619 = vunpack.c.l.b16 %v2707
    %v3620 = vunpack.c.l.b16 %v2708
    %v3621 = vunpack.c.h.b16 %v2708
    %v3622 = vunpack.c.l.b16 %v2709
    %v3623 = vunpack.c.l.b16 %v2710
    %v3624 = vunpack.c.h.b16 %v2710
    %v3625 = vunpack.c.l.b16 %v2711
    %v3626 = vunpack.c.l.b16 %v2712
    %v3627 = vunpack.c.h.b16 %v2712
    %v3628 = vunpack.c.l.b16 %v2713
    %v3629 = vunpack.c.l.b16 %v2714
    %v3630 = vunpack.c.h.b16 %v2714
    %v3631 = vunpack.c.l.b16 %v2715
    %v3632 = vunpack.c.l.b16 %v2716
    %v3633 = vunpack.c.h.b16 %v2716
    %v3634 = vunpack.c.l.b16 %v2717
    %v3635 = vunpack.c.l.b16 %v2718
    %v3636 = vunpack.c.h.b16 %v2718
    %v3637 = vunpack.c.l.b16 %v2719
    %v3638 = vunpack.c.l.b16 %v2720
    %v3639 = vunpack.c.h.b16 %v2720
    %v3640 = vunpack.c.l.b16 %v2721
    %v3641 = vunpack.c.l.b16 %v2722
    %v3642 = vunpack.c.h.b16 %v2722
    %v3643 = vunpack.c.l.b16 %v2723
    %v3644 = vunpack.c.l.b16 %v2724
    %v3645 = vunpack.c.h.b16 %v2724
    %v3646 = vunpack.c.l.b16 %v2725
    %v3647 = vunpack.c.l.b16 %v2726
    %v3648 = vunpack.c.h.b16 %v2726
    %v3649 = vunpack.c.l.b16 %v2727
    %v3650 = vunpack.c.l.b16 %v2728
    %v3651 = vunpack.c.h.b16 %v2728
    %v3652 = vunpack.c.l.b16 %v2729
    %v3653 = vunpack.c.l.b16 %v2730
    %v3654 = vunpack.c.h.b16 %v2730
    %v3655 = vunpack.c.l.b16 %v2731
    %v3656 = vunpack.c.l.b16 %v2732
    %v3657 = vunpack.c.h.b16 %v2732
    %v3658 = vunpack.c.l.b16 %v2733
    %v3659 = vunpack.c.l.b16 %v2734
    %v3660 = vunpack.c.h.b16 %v2734
    %v3661 = vunpack.c.l.b16 %v2735
    %v3662 = vunpack.c.l.b16 %v2736
    %v3663 = vunpack.c.h.b16 %v2736
    %v3664 = vunpack.c.l.b16 %v2737
    %v3665 = vunpack.c.l.b16 %v2738
    %v3666 = vunpack.c.h.b16 %v2738
    %v3667 = vunpack.c.l.b16 %v2739
    %v3668 = vunpack.c.l.b16 %v2740
    %v3669 = vunpack.c.h.b16 %v2740
    %v3670 = vunpack.c.l.b16 %v2741
    %v3671 = vunpack.c.l.b16 %v2742
    %v3672 = vunpack.c.h.b16 %v2742
    %v3673 = vunpack.c.l.b16 %v2743
    %v3674 = vunpack.c.l.b16 %v2744
    %v3675 = vunpack.c.h.b16 %v2744
    %v3676 = vunpack.c.l.b16 %v2745
    %v3677 = vunpack.c.l.b16 %v2746
    %v3678 = vunpack.c.h.b16 %v2746
    %v3679 = vunpack.c.l.b16 %v2747
    %v3680 = vunpack.c.l.b16 %v2748
    %v3681 = vunpack.c.h.b16 %v2748
    %v3682 = vunpack.c.l.b16 %v2749
    %v3683 = vunpack.c.l.b16 %v2750
    %v3684 = vunpack.c.h.b16 %v2750
    %v3685 = vunpack.c.l.b16 %v2751
    %v3686 = vunpack.c.l.b16 %v2752
    %v3687 = vunpack.c.h.b16 %v2752
    %v3688 = vunpack.c.l.b16 %v2753
    %v3689 = vunpack.c.l.b16 %v2754
    %v3690 = vunpack.c.h.b16 %v2754
    %v3691 = vunpack.c.l.b16 %v2755
    %v3692 = vunpack.c.l.b16 %v2756
    %v3693 = vunpack.c.h.b16 %v2756
    %v3694 = vunpack.c.l.b16 %v2757
    %v3695 = vunpack.c.l.b16 %v2758
    %v3696 = vunpack.c.h.b16 %v2758
    %v3697 = vunpack.c.l.b16 %v2759
    %v3698 = vunpack.c.l.b16 %v2760
    %v3699 = vunpack.c.h.b16 %v2760
    %v3700 = vunpack.c.l.b16 %v2761
    %v3701 = vunpack.c.l.b16 %v2762
    %v3702 = vunpack.c.h.b16 %v2762
    %v3703 = vunpack.c.l.b16 %v2763
    %v3704 = vunpack.c.l.b16 %v2764
    %v3705 = vunpack.c.h.b16 %v2764
    %v3706 = vunpack.c.l.b16 %v2765
    %v3707 = vunpack.c.l.b16 %v2766
    %v3708 = vunpack.c.h.b16 %v2766
    %v3709 = vunpack.c.l.b16 %v2767
    %v3710 = vunpack.c.l.b16 %v2768
    %v3711 = vunpack.c.h.b16 %v2768
    %v3712 = vunpack.c.l.b16 %v2769
    %v3713 = vunpack.c.l.b16 %v2770
    %v3714 = vunpack.c.h.b16 %v2770
    %v3715 = vunpack.c.l.b16 %v2771
    %v3716 = vunpack.c.l.b16 %v2772
    %v3717 = vunpack.c.h.b16 %v2772
    %v3718 = vunpack.c.l.b16 %v2773
    %v3719 = vunpack.c.l.b16 %v2774
    %v3720 = vunpack.c.h.b16 %v2774
    %v3721 = vunpack.c.l.b16 %v2775
    %v3722 = vunpack.c.l.b16 %v2776
    %v3723 = vunpack.c.h.b16 %v2776
    %v3724 = vunpack.c.l.b16 %v2777
    %v3725 = vunpack.c.l.b16 %v2778
    %v3726 = vunpack.c.h.b16 %v2778
    %v3727 = vunpack.c.l.b16 %v2779
    %v3728 = vunpack.c.l.b16 %v2780
    %v3729 = vunpack.c.h.b16 %v2780
    %v3730 = vunpack.c.l.b16 %v2781
    %v3731 = vunpack.c.l.b16 %v2782
    %v3732 = vunpack.c.h.b16 %v2782
    %v3733 = vunpack.c.l.b16 %v2783
    %v3734 = vunpack.c.l.b16 %v2784
    %v3735 = vunpack.c.h.b16 %v2784
    %v3736 = vunpack.c.l.b16 %v2785
    %v3737 = vunpack.c.l.b16 %v2786
    %v3738 = vunpack.c.h.b16 %v2786
    %v3739 = vunpack.c.l.b16 %v2787
    %v3740 = vunpack.c.l.b16 %v2788
    %v3741 = vunpack.c.h.b16 %v2788
    %v3742 = vunpack.c.l.b16 %v2789
    %v3743 = vunpack.c.l.b16 %v2790
    %v3744 = vunpack.c.h.b16 %v2790
    %v3745 = vunpack.c.l.b16 %v2791
    %v3746 = vunpack.c.l.b16 %v2792
    %v3747 = vunpack.c.h.b16 %v2792
    %v3748 = vunpack.c.l.b16 %v2793
    %v3749 = vunpack.c.l.b16 %v2794
    %v3750 = vunpack.c.h.b16 %v2794
    %v3751 = vunpack.c.l.b16 %v2795
    %v3752 = vunpack.c.l.b16 %v2796
    %v3753 = vunpack.c.h.b16 %v2796
    %v3754 = vunpack.c.l.b16 %v2797
    %v3755 = vunpack.c.l.b16 %v2798
    %v3756 = vunpack.c.h.b16 %v2798
    %v3757 = vunpack.c.l.b16 %v2799
    %v3758 = vunpack.c.l.b16 %v2800
    %v3759 = vunpack.c.h.b16 %v2800
    %v3760 = vunpack.c.l.b16 %v2801
    %v3761 = vunpack.c.l.b16 %v2802
    %v3762 = vunpack.c.h.b16 %v2802
    %v3763 = vunpack.c.l.b16 %v2803
    %v3764 = vunpack.c.l.b16 %v2804
    %v3765 = vunpack.c.h.b16 %v2804
    %v3766 = vunpack.c.l.b16 %v2805
    %v3767 = vunpack.c.l.b16 %v2806
    %v3768 = vunpack.c.h.b16 %v2806
    %v3769 = vunpack.c.l.b16 %v2807
    %v3770 = vunpack.c.l.b16 %v2808
    %v3771 = vunpack.c.h.b16 %v2808
    %v3772 = vunpack.c.l.b16 %v2809
    %v3773 = vunpack.c.l.b16 %v2810
    %v3774 = vunpack.c.h.b16 %v2810
    %v3775 = vunpack.c.l.b16 %v2811
    %v3776 = vunpack.c.l.b16 %v2812
    %v3777 = vunpack.c.h.b16 %v2812
    %v3778 = vunpack.c.l.b16 %v2813
    %v3779 = vunpack.c.l.b16 %v2814
    %v3780 = vunpack.c.h.b16 %v2814
    %v3781 = vunpack.c.l.b16 %v2815
    %v3782 = vunpack.c.l.b16 %v2816
    %v3783 = vunpack.c.h.b16 %v2816
    %v3784 = vunpack.c.l.b16 %v2817
    %v3785 = vunpack.c.l.b16 %v2818
    %v3786 = vunpack.c.h.b16 %v2818
    %v3787 = vunpack.c.l.b16 %v2819
    %v3788 = vunpack.c.l.b16 %v2820
    %v3789 = vunpack.c.h.b16 %v2820
    %v3790 = vunpack.c.l.b16 %v2821
    %v3791 = vunpack.c.l.b16 %v2822
    %v3792 = vunpack.c.h.b16 %v2822
    %v3793 = vunpack.c.l.b16 %v2823
    %v3794 = vunpack.c.l.b16 %v2824
    %v3795 = vunpack.c.h.b16 %v2824
    %v3796 = vunpack.c.l.b16 %v2825
    %v3797 = vunpack.c.l.b16 %v2826
    %v3798 = vunpack.c.h.b16 %v2826
    %v3799 = vunpack.c.l.b16 %v2827
    %v3800 = vunpack.c.l.b16 %v2828
    %v3801 = vunpack.c.h.b16 %v2828
    %v3802 = vunpack.c.l.b16 %v2829
    %v3803 = vunpack.c.l.b16 %v2830
    %v3804 = vunpack.c.h.b16 %v2830
    %v3805 = vunpack.c.l.b16 %v2831
    %v3806 = vunpack.c.l.b16 %v2832
    %v3807 = vunpack.c.h.b16 %v2832
    %v3808 = vunpack.c.l.b16 %v2833
    %v3809 = vunpack.c.l.b16 %v2834
    %v3810 = vunpack.c.h.b16 %v2834
    %v3811 = vunpack.c.l.b16 %v2835
    %v3812 = vunpack.c.l.b16 %v2836
    %v3813 = vunpack.c.h.b16 %v2836
    %v3814 = vunpack.c.l.b16 %v2837
    %v3815 = vpack.c.b16 %v3242, %v3239
    %v3816 = vpack.c.b16 %v3243, %v3240
    %v3817 = vpack.c.b16 %v3244, %v3241
    %v3818 = vpack.c.b16 %v3248, %v3245
    %v3819 = vpack.c.b16 %v3249, %v3246
    %v3820 = vpack.c.b16 %v3250, %v3247
    %v3821 = vpack.c.b16 %v3254, %v3251
    %v3822 = vpack.c.b16 %v3255, %v3252
    %v3823 = vpack.c.b16 %v3256, %v3253
    %v3824 = vpack.c.b16 %v3260, %v3257
    %v3825 = vpack.c.b16 %v3261, %v3258
    %v3826 = vpack.c.b16 %v3262, %v3259
    %v3827 = vpack.c.b16 %v3266, %v3263
    %v3828 = vpack.c.b16 %v3267, %v3264
    %v3829 = vpack.c.b16 %v3268, %v3265
    %v3830 = vpack.c.b16 %v3272, %v3269
    %v3831 = vpack.c.b16 %v3273, %v3270
    %v3832 = vpack.c.b16 %v3274, %v3271
    %v3833 = vpack.c.b16 %v3278, %v3275
    %v3834 = vpack.c.b16 %v3279, %v3276
    %v3835 = vpack.c.b16 %v3280, %v3277
    %v3836 = vpack.c.b16 %v3284, %v3281
    %v3837 = vpack.c.b16 %v3285, %v3282
    %v3838 = vpack.c.b16 %v3286, %v3283
    %v3839 = vpack.c.b16 %v3290, %v3287
    %v3840 = vpack.c.b16 %v3291, %v3288
    %v3841 = vpack.c.b16 %v3292, %v3289
    %v3842 = vpack.c.b16 %v3296, %v3293
    %v3843 = vpack.c.b16 %v3297, %v3294
    %v3844 = vpack.c.b16 %v3298, %v3295
    %v3845 = vpack.c.b16 %v3302, %v3299
    %v3846 = vpack.c.b16 %v3303, %v3300
    %v3847 = vpack.c.b16 %v3304, %v3301
    %v3848 = vpack.c.b16 %v3308, %v3305
    %v3849 = vpack.c.b16 %v3309, %v3306
    %v3850 = vpack.c.b16 %v3310, %v3307
    %v3851 = vpack.c.b16 %v3314, %v3311
    %v3852 = vpack.c.b16 %v3315, %v3312
    %v3853 = vpack.c.b16 %v3316, %v3313
    %v3854 = vpack.c.b16 %v3320, %v3317
    %v3855 = vpack.c.b16 %v3321, %v3318
    %v3856 = vpack.c.b16 %v3322, %v3319
    %v3857 = vpack.c.b16 %v3326, %v3323
    %v3858 = vpack.c.b16 %v3327, %v3324
    %v3859 = vpack.c.b16 %v3328, %v3325
    %v3860 = vpack.c.b16 %v3332, %v3329
    %v3861 = vpack.c.b16 %v3333, %v3330
    %v3862 = vpack.c.b16 %v3334, %v3331
    %v3863 = vpack.c.b16 %v3338, %v3335
    %v3864 = vpack.c.b16 %v3339, %v3336
    %v3865 = vpack.c.b16 %v3340, %v3337
    %v3866 = vpack.c.b16 %v3344, %v3341
    %v3867 = vpack.c.b16 %v3345, %v3342
    %v3868 = vpack.c.b16 %v3346, %v3343
    %v3869 = vpack.c.b16 %v3350, %v3347
    %v3870 = vpack.c.b16 %v3351, %v3348
    %v3871 = vpack.c.b16 %v3352, %v3349
    %v3872 = vpack.c.b16 %v3356, %v3353
    %v3873 = vpack.c.b16 %v3357, %v3354
    %v3874 = vpack.c.b16 %v3358, %v3355
    %v3875 = vpack.c.b16 %v3362, %v3359
    %v3876 = vpack.c.b16 %v3363, %v3360
    %v3877 = vpack.c.b16 %v3364, %v3361
    %v3878 = vpack.c.b16 %v3368, %v3365
    %v3879 = vpack.c.b16 %v3369, %v3366
    %v3880 = vpack.c.b16 %v3370, %v3367
    %v3881 = vpack.c.b16 %v3374, %v3371
    %v3882 = vpack.c.b16 %v3375, %v3372
    %v3883 = vpack.c.b16 %v3376, %v3373
    %v3884 = vpack.c.b16 %v3380, %v3377
    %v3885 = vpack.c.b16 %v3381, %v3378
    %v3886 = vpack.c.b16 %v3382, %v3379
    %v3887 = vpack.c.b16 %v3386, %v3383
    %v3888 = vpack.c.b16 %v3387, %v3384
    %v3889 = vpack.c.b16 %v3388, %v3385
    %v3890 = vpack.c.b16 %v3392, %v3389
    %v3891 = vpack.c.b16 %v3393, %v3390
    %v3892 = vpack.c.b16 %v3394, %v3391
    %v3893 = vpack.c.b16 %v3398, %v3395
    %v3894 = vpack.c.b16 %v3399, %v3396
    %v3895 = vpack.c.b16 %v3400, %v3397
    %v3896 = vpack.c.b16 %v3404, %v3401
    %v3897 = vpack.c.b16 %v3405, %v3402
    %v3898 = vpack.c.b16 %v3406, %v3403
    %v3899 = vpack.c.b16 %v3410, %v3407
    %v3900 = vpack.c.b16 %v3411, %v3408
    %v3901 = vpack.c.b16 %v3412, %v3409
    %v3902 = vpack.c.b16 %v3416, %v3413
    %v3903 = vpack.c.b16 %v3417, %v3414
    %v3904 = vpack.c.b16 %v3418, %v3415
    %v3905 = vpack.c.b16 %v3422, %v3419
    %v3906 = vpack.c.b16 %v3423, %v3420
    %v3907 = vpack.c.b16 %v3424, %v3421
    %v3908 = vpack.c.b16 %v3428, %v3425
    %v3909 = vpack.c.b16 %v3429, %v3426
    %v3910 = vpack.c.b16 %v3430, %v3427
    %v3911 = vpack.c.b16 %v3434, %v3431
    %v3912 = vpack.c.b16 %v3435, %v3432
    %v3913 = vpack.c.b16 %v3436, %v3433
    %v3914 = vpack.c.b16 %v3440, %v3437
    %v3915 = vpack.c.b16 %v3441, %v3438
    %v3916 = vpack.c.b16 %v3442, %v3439
    %v3917 = vpack.c.b16 %v3446, %v3443
    %v3918 = vpack.c.b16 %v3447, %v3444
    %v3919 = vpack.c.b16 %v3448, %v3445
    %v3920 = vpack.c.b16 %v3452, %v3449
    %v3921 = vpack.c.b16 %v3453, %v3450
    %v3922 = vpack.c.b16 %v3454, %v3451
    %v3923 = vpack.c.b16 %v3458, %v3455
    %v3924 = vpack.c.b16 %v3459, %v3456
    %v3925 = vpack.c.b16 %v3460, %v3457
    %v3926 = vpack.c.b16 %v3464, %v3461
    %v3927 = vpack.c.b16 %v3465, %v3462
    %v3928 = vpack.c.b16 %v3466, %v3463
    %v3929 = vpack.c.b16 %v3470, %v3467
    %v3930 = vpack.c.b16 %v3471, %v3468
    %v3931 = vpack.c.b16 %v3472, %v3469
    %v3932 = vpack.c.b16 %v3476, %v3473
    %v3933 = vpack.c.b16 %v3477, %v3474
    %v3934 = vpack.c.b16 %v3478, %v3475
    %v3935 = vpack.c.b16 %v3482, %v3479
    %v3936 = vpack.c.b16 %v3483, %v3480
    %v3937 = vpack.c.b16 %v3484, %v3481
    %v3938 = vpack.c.b16 %v3488, %v3485
    %v3939 = vpack.c.b16 %v3489, %v3486
    %v3940 = vpack.c.b16 %v3490, %v3487
    %v3941 = vpack.c.b16 %v3494, %v3491
    %v3942 = vpack.c.b16 %v3495, %v3492
    %v3943 = vpack.c.b16 %v3496, %v3493
    %v3944 = vpack.c.b16 %v3500, %v3497
    %v3945 = vpack.c.b16 %v3501, %v3498
    %v3946 = vpack.c.b16 %v3502, %v3499
    %v3947 = vpack.c.b16 %v3506, %v3503
    %v3948 = vpack.c.b16 %v3507, %v3504
    %v3949 = vpack.c.b16 %v3508, %v3505
    %v3950 = vpack.c.b16 %v3512, %v3509
    %v3951 = vpack.c.b16 %v3513, %v3510
    %v3952 = vpack.c.b16 %v3514, %v3511
    %v3953 = vpack.c.b16 %v3518, %v3515
    %v3954 = vpack.c.b16 %v3519, %v3516
    %v3955 = vpack.c.b16 %v3520, %v3517
    %v3956 = vpack.c.b16 %v3524, %v3521
    %v3957 = vpack.c.b16 %v3525, %v3522
    %v3958 = vpack.c.b16 %v3526, %v3523
    %v3959 = vpack.c.b16 %v3530, %v3527
    %v3960 = vpack.c.b16 %v3531, %v3528
    %v3961 = vpack.c.b16 %v3532, %v3529
    %v3962 = vpack.c.b16 %v3536, %v3533
    %v3963 = vpack.c.b16 %v3537, %v3534
    %v3964 = vpack.c.b16 %v3538, %v3535
    %v3965 = vpack.c.b16 %v3542, %v3539
    %v3966 = vpack.c.b16 %v3543, %v3540
    %v3967 = vpack.c.b16 %v3544, %v3541
    %v3968 = vpack.c.b16 %v3548, %v3545
    %v3969 = vpack.c.b16 %v3549, %v3546
    %v3970 = vpack.c.b16 %v3550, %v3547
    %v3971 = vpack.c.b16 %v3554, %v3551
    %v3972 = vpack.c.b16 %v3555, %v3552
    %v3973 = vpack.c.b16 %v3556, %v3553
    %v3974 = vpack.c.b16 %v3560, %v3557
    %v3975 = vpack.c.b16 %v3561, %v3558
    %v3976 = vpack.c.b16 %v3562, %v3559
    %v3977 = vpack.c.b16 %v3566, %v3563
    %v3978 = vpack.c.b16 %v3567, %v3564
    %v3979 = vpack.c.b16 %v3568, %v3565
    %v3980 = vpack.c.b16 %v3572, %v3569
    %v3981 = vpack.c.b16 %v3573, %v3570
    %v3982 = vpack.c.b16 %v3574, %v3571
    %v3983 = vpack.c.b16 %v3578, %v3575
    %v3984 = vpack.c.b16 %v3579, %v3576
    %v3985 = vpack.c.b16 %v3580, %v3577
    %v3986 = vpack.c.b16 %v3584, %v3581
    %v3987 = vpack.c.b16 %v3585, %v3582
    %v3988 = vpack.c.b16 %v3586, %v3583
    %v3989 = vpack.c.b16 %v3590, %v3587
    %v3990 = vpack.c.b16 %v3591, %v3588
    %v3991 = vpack.c.b16 %v3592, %v3589
    %v3992 = vpack.c.b16 %v3596, %v3593
    %v3993 = vpack.c.b16 %v3597, %v3594
    %v3994 = vpack.c.b16 %v3598, %v3595
    %v3995 = vpack.c.b16 %v3602, %v3599
    %v3996 = vpack.c.b16 %v3603, %v3600
    %v3997 = vpack.c.b16 %v3604, %v3601
    %v3998 = vpack.c.b16 %v3608, %v3605
    %v3999 = vpack.c.b16 %v3609, %v3606
    %v4000 = vpack.c.b16 %v3610, %v3607
    %v4001 = vpack.c.b16 %v3614, %v3611
    %v4002 = vpack.c.b16 %v3615, %v3612
    %v4003 = vpack.c.b16 %v3616, %v3613
    %v4004 = vpack.c.b16 %v3620, %v3617
    %v4005 = vpack.c.b16 %v3621, %v3618
    %v4006 = vpack.c.b16 %v3622, %v3619
    %v4007 = vpack.c.b16 %v3626, %v3623
    %v4008 = vpack.c.b16 %v3627, %v3624
    %v4009 = vpack.c.b16 %v3628, %v3625
    %v4010 = vpack.c.b16 %v3632, %v3629
    %v4011 = vpack.c.b16 %v3633, %v3630
    %v4012 = vpack.c.b16 %v3634, %v3631
    %v4013 = vpack.c.b16 %v3638, %v3635
    %v4014 = vpack.c.b16 %v3639, %v3636
    %v4015 = vpack.c.b16 %v3640, %v3637
    %v4016 = vpack.c.b16 %v3644, %v3641
    %v4017 = vpack.c.b16 %v3645, %v3642
    %v4018 = vpack.c.b16 %v3646, %v3643
    %v4019 = vpack.c.b16 %v3650, %v3647
    %v4020 = vpack.c.b16 %v3651, %v3648
    %v4021 = vpack.c.b16 %v3652, %v3649
    %v4022 = vpack.c.b16 %v3656, %v3653
    %v4023 = vpack.c.b16 %v3657, %v3654
    %v4024 = vpack.c.b16 %v3658, %v3655
    %v4025 = vpack.c.b16 %v3662, %v3659
    %v4026 = vpack.c.b16 %v3663, %v3660
    %v4027 = vpack.c.b16 %v3664, %v3661
    %v4028 = vpack.c.b16 %v3668, %v3665
    %v4029 = vpack.c.b16 %v3669, %v3666
    %v4030 = vpack.c.b16 %v3670, %v3667
    %v4031 = vpack.c.b16 %v3674, %v3671
    %v4032 = vpack.c.b16 %v3675, %v3672
    %v4033 = vpack.c.b16 %v3676, %v3673
    %v4034 = vpack.c.b16 %v3680, %v3677
    %v4035 = vpack.c.b16 %v3681, %v3678
    %v4036 = vpack.c.b16 %v3682, %v3679
    %v4037 = vpack.c.b16 %v3686, %v3683
    %v4038 = vpack.c.b16 %v3687, %v3684
    %v4039 = vpack.c.b16 %v3688, %v3685
    %v4040 = vpack.c.b16 %v3692, %v3689
    %v4041 = vpack.c.b16 %v3693, %v3690
    %v4042 = vpack.c.b16 %v3694, %v3691
    %v4043 = vpack.c.b16 %v3698, %v3695
    %v4044 = vpack.c.b16 %v3699, %v3696
    %v4045 = vpack.c.b16 %v3700, %v3697
    %v4046 = vpack.c.b16 %v3704, %v3701
    %v4047 = vpack.c.b16 %v3705, %v3702
    %v4048 = vpack.c.b16 %v3706, %v3703
    %v4049 = vpack.c.b16 %v3710, %v3707
    %v4050 = vpack.c.b16 %v3711, %v3708
    %v4051 = vpack.c.b16 %v3712, %v3709
    %v4052 = vpack.c.b16 %v3716, %v3713
    %v4053 = vpack.c.b16 %v3717, %v3714
    %v4054 = vpack.c.b16 %v3718, %v3715
    %v4055 = vpack.c.b16 %v3722, %v3719
    %v4056 = vpack.c.b16 %v3723, %v3720
    %v4057 = vpack.c.b16 %v3724, %v3721
    %v4058 = vpack.c.b16 %v3728, %v3725
    %v4059 = vpack.c.b16 %v3729, %v3726
    %v4060 = vpack.c.b16 %v3730, %v3727
    %v4061 = vpack.c.b16 %v3734, %v3731
    %v4062 = vpack.c.b16 %v3735, %v3732
    %v4063 = vpack.c.b16 %v3736, %v3733
    %v4064 = vpack.c.b16 %v3740, %v3737
    %v4065 = vpack.c.b16 %v3741, %v3738
    %v4066 = vpack.c.b16 %v3742, %v3739
    %v4067 = vpack.c.b16 %v3746, %v3743
    %v4068 = vpack.c.b16 %v3747, %v3744
    %v4069 = vpack.c.b16 %v3748, %v3745
    %v4070 = vpack.c.b16 %v3752, %v3749
    %v4071 = vpack.c.b16 %v3753, %v3750
    %v4072 = vpack.c.b16 %v3754, %v3751
    %v4073 = vpack.c.b16 %v3758, %v3755
    %v4074 = vpack.c.b16 %v3759, %v3756
    %v4075 = vpack.c.b16 %v3760, %v3757
    %v4076 = vpack.c.b16 %v3764, %v3761
    %v4077 = vpack.c.b16 %v3765, %v3762
    %v4078 = vpack.c.b16 %v3766, %v3763
    %v4079 = vpack.c.b16 %v3770, %v3767
    %v4080 = vpack.c.b16 %v3771, %v3768
    %v4081 = vpack.c.b16 %v3772, %v3769
    %v4082 = vpack.c.b16 %v3776, %v3773
    %v4083 = vpack.c.b16 %v3777, %v3774
    %v4084 = vpack.c.b16 %v3778, %v3775
    %v4085 = vpack.c.b16 %v3782, %v3779
    %v4086 = vpack.c.b16 %v3783, %v3780
    %v4087 = vpack.c.b16 %v3784, %v3781
    %v4088 = vpack.c.b16 %v3788, %v3785
    %v4089 = vpack.c.b16 %v3789, %v3786
    %v4090 = vpack.c.b16 %v3790, %v3787
    %v4091 = vpack.c.b16 %v3794, %v3791
    %v4092 = vpack.c.b16 %v3795, %v3792
    %v4093 = vpack.c.b16 %v3796, %v3793
    %v4094 = vpack.c.b16 %v3800, %v3797
    %v4095 = vpack.c.b16 %v3801, %v3798
    %v4096 = vpack.c.b16 %v3802, %v3799
    %v4097 = vpack.c.b16 %v3806, %v3803
    %v4098 = vpack.c.b16 %v3807, %v3804
    %v4099 = vpack.c.b16 %v3808, %v3805
    %v4100 = vpack.c.b16 %v3812, %v3809
    %v4101 = vpack.c.b16 %v3813, %v3810
    %v4102 = vpack.c.b16 %v3814, %v3811
    %4391 = vmatprep.subr.bf16.mxu0 %v3816
    %4392 = vmatpush1.bf16.msra.mxu0 %v3815
    %4393 = vmatprep.subr.bf16.mxu0 %v3819
    %4394 = vmatpush1.bf16.msra.mxu0 %v3818
    %4395 = vmatprep.subr.bf16.mxu0 %v3822
    %4396 = vmatpush1.bf16.msra.mxu0 %v3821
    %4397 = vmatprep.subr.bf16.mxu0 %v3825
    %4398 = vmatpush1.bf16.msra.mxu0 %v3824
    %4399 = vmatprep.subr.bf16.mxu0 %v3828
    %4400 = vmatpush1.bf16.msra.mxu0 %v3827
    %4401 = vmatprep.subr.bf16.mxu0 %v3831
    %4402 = vmatpush1.bf16.msra.mxu0 %v3830
    %4403 = vmatprep.subr.bf16.mxu0 %v3834
    %4404 = vmatpush1.bf16.msra.mxu0 %v3833
    %4405 = vmatprep.subr.bf16.mxu0 %v3837
    %4406 = vmatpush1.bf16.msra.mxu0 %v3836
    %4407 = vmatprep.subr.bf16.mxu0 %v3840
    %4408 = vmatpush1.bf16.msra.mxu0 %v3839
    %4409 = vmatprep.subr.bf16.mxu0 %v3843
    %4410 = vmatpush1.bf16.msra.mxu0 %v3842
    %4411 = vmatprep.subr.bf16.mxu0 %v3846
    %4412 = vmatpush1.bf16.msra.mxu0 %v3845
    %4413 = vmatprep.subr.bf16.mxu0 %v3849
    %4414 = vmatpush1.bf16.msra.mxu0 %v3848
    %4415 = vmatprep.subr.bf16.mxu0 %v3852
    %4416 = vmatpush1.bf16.msra.mxu0 %v3851
    %4417 = vmatprep.subr.bf16.mxu0 %v3855
    %4418 = vmatpush1.bf16.msra.mxu0 %v3854
    %4419 = vmatprep.subr.bf16.mxu0 %v3858
    %4420 = vmatpush1.bf16.msra.mxu0 %v3857
    %4421 = vmatprep.subr.bf16.mxu0 %v3861
    %4422 = vmatpush1.bf16.msra.mxu0 %v3860
    %4423 = vmatprep.mubr.bf16.mxu0 %v2443
    %4424 = vmatmul.mubr.bf16.gmra.mrb[0].mxu0 %v2442
    %v4425 = vpop.f32.mrb[0].mxu0
    %v4426 = vadd.f32 %v2843, %v4425
    %v4427 = vpop.f32.mrb[0].mxu0
    %v4428 = vadd.f32 %v2847, %v4427
    %v4429 = vpop.f32.mrb[0].mxu0
    %v4430 = vadd.f32 %v2843, %v4429
    %v4431 = vpop.f32.mrb[0].mxu0
    %v4432 = vadd.f32 %v2847, %v4431
    %4433 = vdwg.mxu0
    %4434 = vmatprep.subr.bf16.mxu0 %v3864
    %4435 = vmatpush1.bf16.msra.mxu0 %v3863
    %4436 = vmatprep.subr.bf16.mxu0 %v3867
    %4437 = vmatpush1.bf16.msra.mxu0 %v3866
    %4438 = vmatprep.subr.bf16.mxu0 %v3870
    %4439 = vmatpush1.bf16.msra.mxu0 %v3869
    %4440 = vmatprep.subr.bf16.mxu0 %v3873
    %4441 = vmatpush1.bf16.msra.mxu0 %v3872
    %4442 = vmatprep.subr.bf16.mxu0 %v3876
    %4443 = vmatpush1.bf16.msra.mxu0 %v3875
    %4444 = vmatprep.subr.bf16.mxu0 %v3879
    %4445 = vmatpush1.bf16.msra.mxu0 %v3878
    %4446 = vmatprep.subr.bf16.mxu0 %v3882
    %4447 = vmatpush1.bf16.msra.mxu0 %v3881
    %4448 = vmatprep.subr.bf16.mxu0 %v3885
    %4449 = vmatpush1.bf16.msra.mxu0 %v3884
    %4450 = vmatprep.subr.bf16.mxu0 %v3888
    %4451 = vmatpush1.bf16.msra.mxu0 %v3887
    %4452 = vmatprep.subr.bf16.mxu0 %v3891
    %4453 = vmatpush1.bf16.msra.mxu0 %v3890
    %4454 = vmatprep.subr.bf16.mxu0 %v3894
    %4455 = vmatpush1.bf16.msra.mxu0 %v3893
    %4456 = vmatprep.subr.bf16.mxu0 %v3897
    %4457 = vmatpush1.bf16.msra.mxu0 %v3896
    %4458 = vmatprep.subr.bf16.mxu0 %v3900
    %4459 = vmatpush1.bf16.msra.mxu0 %v3899
    %4460 = vmatprep.subr.bf16.mxu0 %v3903
    %4461 = vmatpush1.bf16.msra.mxu0 %v3902
    %4462 = vmatprep.subr.bf16.mxu0 %v3906
    %4463 = vmatpush1.bf16.msra.mxu0 %v3905
    %4464 = vmatprep.subr.bf16.mxu0 %v3909
    %4465 = vmatpush1.bf16.msra.mxu0 %v3908
    %4466 = vmatprep.mubr.bf16.mxu0 %v2445
    %4467 = vmatmul.mubr.bf16.gmra.mrb[0].mxu0 %v2444
    %v4468 = vpop.f32.mrb[0].mxu0
    %v4469 = vadd.f32 %v4426, %v4468
    %v4470 = vpop.f32.mrb[0].mxu0
    %v4471 = vadd.f32 %v4428, %v4470
    %v4472 = vpop.f32.mrb[0].mxu0
    %v4473 = vadd.f32 %v4430, %v4472
    %v4474 = vpop.f32.mrb[0].mxu0
    %v4475 = vadd.f32 %v4432, %v4474
    %4476 = vdwg.mxu0
    %4477 = vmatprep.subr.bf16.mxu0 %v3912
    %4478 = vmatpush1.bf16.msra.mxu0 %v3911
    %4479 = vmatprep.subr.bf16.mxu0 %v3915
    %4480 = vmatpush1.bf16.msra.mxu0 %v3914
    %4481 = vmatprep.subr.bf16.mxu0 %v3918
    %4482 = vmatpush1.bf16.msra.mxu0 %v3917
    %4483 = vmatprep.subr.bf16.mxu0 %v3921
    %4484 = vmatpush1.bf16.msra.mxu0 %v3920
    %4485 = vmatprep.subr.bf16.mxu0 %v3924
    %4486 = vmatpush1.bf16.msra.mxu0 %v3923
    %4487 = vmatprep.subr.bf16.mxu0 %v3927
    %4488 = vmatpush1.bf16.msra.mxu0 %v3926
    %4489 = vmatprep.subr.bf16.mxu0 %v3930
    %4490 = vmatpush1.bf16.msra.mxu0 %v3929
    %4491 = vmatprep.subr.bf16.mxu0 %v3933
    %4492 = vmatpush1.bf16.msra.mxu0 %v3932
    %4493 = vmatprep.subr.bf16.mxu0 %v3936
    %4494 = vmatpush1.bf16.msra.mxu0 %v3935
    %4495 = vmatprep.subr.bf16.mxu0 %v3939
    %4496 = vmatpush1.bf16.msra.mxu0 %v3938
    %4497 = vmatprep.subr.bf16.mxu0 %v3942
    %4498 = vmatpush1.bf16.msra.mxu0 %v3941
    %4499 = vmatprep.subr.bf16.mxu0 %v3945
    %4500 = vmatpush1.bf16.msra.mxu0 %v3944
    %4501 = vmatprep.subr.bf16.mxu0 %v3948
    %4502 = vmatpush1.bf16.msra.mxu0 %v3947
    %4503 = vmatprep.subr.bf16.mxu0 %v3951
    %4504 = vmatpush1.bf16.msra.mxu0 %v3950
    %4505 = vmatprep.subr.bf16.mxu0 %v3954
    %4506 = vmatpush1.bf16.msra.mxu0 %v3953
    %4507 = vmatprep.subr.bf16.mxu0 %v3957
    %4508 = vmatpush1.bf16.msra.mxu0 %v3956
    %4509 = vmatprep.mubr.bf16.mxu0 %v2447
    %4510 = vmatmul.mubr.bf16.gmra.mrb[0].mxu0 %v2446
    %v4511 = vpop.f32.mrb[0].mxu0
    %v4512 = vadd.f32 %v4469, %v4511
    %v4513 = vpop.f32.mrb[0].mxu0
    %v4514 = vadd.f32 %v4471, %v4513
    %v4515 = vpop.f32.mrb[0].mxu0
    %v4516 = vadd.f32 %v4473, %v4515
    %v4517 = vpop.f32.mrb[0].mxu0
    %v4518 = vadd.f32 %v4475, %v4517
    %4519 = vdwg.mxu0
    %4520 = vmatprep.subr.bf16.mxu0 %v3960
    %4521 = vmatpush1.bf16.msra.mxu0 %v3959
    %4522 = vmatprep.subr.bf16.mxu0 %v3963
    %4523 = vmatpush1.bf16.msra.mxu0 %v3962
    %4524 = vmatprep.subr.bf16.mxu0 %v3966
    %4525 = vmatpush1.bf16.msra.mxu0 %v3965
    %4526 = vmatprep.subr.bf16.mxu0 %v3969
    %4527 = vmatpush1.bf16.msra.mxu0 %v3968
    %4528 = vmatprep.subr.bf16.mxu0 %v3972
    %4529 = vmatpush1.bf16.msra.mxu0 %v3971
    %4530 = vmatprep.subr.bf16.mxu0 %v3975
    %4531 = vmatpush1.bf16.msra.mxu0 %v3974
    %4532 = vmatprep.subr.bf16.mxu0 %v3978
    %4533 = vmatpush1.bf16.msra.mxu0 %v3977
    %4534 = vmatprep.subr.bf16.mxu0 %v3981
    %4535 = vmatpush1.bf16.msra.mxu0 %v3980
    %4536 = vmatprep.subr.bf16.mxu0 %v3984
    %4537 = vmatpush1.bf16.msra.mxu0 %v3983
    %4538 = vmatprep.subr.bf16.mxu0 %v3987
    %4539 = vmatpush1.bf16.msra.mxu0 %v3986
    %4540 = vmatprep.subr.bf16.mxu0 %v3990
    %4541 = vmatpush1.bf16.msra.mxu0 %v3989
    %4542 = vmatprep.subr.bf16.mxu0 %v3993
    %4543 = vmatpush1.bf16.msra.mxu0 %v3992
    %4544 = vmatprep.subr.bf16.mxu0 %v3996
    %4545 = vmatpush1.bf16.msra.mxu0 %v3995
    %4546 = vmatprep.subr.bf16.mxu0 %v3999
    %4547 = vmatpush1.bf16.msra.mxu0 %v3998
    %4548 = vmatprep.subr.bf16.mxu0 %v4002
    %4549 = vmatpush1.bf16.msra.mxu0 %v4001
    %4550 = vmatprep.subr.bf16.mxu0 %v4005
    %4551 = vmatpush1.bf16.msra.mxu0 %v4004
    %4552 = vmatprep.mubr.bf16.mxu0 %v2449
    %4553 = vmatmul.mubr.bf16.gmra.mrb[0].mxu0 %v2448
    %v4554 = vpop.f32.mrb[0].mxu0
    %v4555 = vadd.f32 %v4512, %v4554
    %v4556 = vpop.f32.mrb[0].mxu0
    %v4557 = vadd.f32 %v4514, %v4556
    %v4558 = vpop.f32.mrb[0].mxu0
    %v4559 = vadd.f32 %v4516, %v4558
    %v4560 = vpop.f32.mrb[0].mxu0
    %v4561 = vadd.f32 %v4518, %v4560
    %4562 = vdwg.mxu0
    %4563 = vmatprep.subr.bf16.mxu0 %v4008
    %4564 = vmatpush1.bf16.msra.mxu0 %v4007
    %4565 = vmatprep.subr.bf16.mxu0 %v4011
    %4566 = vmatpush1.bf16.msra.mxu0 %v4010
    %4567 = vmatprep.subr.bf16.mxu0 %v4014
    %4568 = vmatpush1.bf16.msra.mxu0 %v4013
    %4569 = vmatprep.subr.bf16.mxu0 %v4017
    %4570 = vmatpush1.bf16.msra.mxu0 %v4016
    %4571 = vmatprep.subr.bf16.mxu0 %v4020
    %4572 = vmatpush1.bf16.msra.mxu0 %v4019
    %4573 = vmatprep.subr.bf16.mxu0 %v4023
    %4574 = vmatpush1.bf16.msra.mxu0 %v4022
    %4575 = vmatprep.subr.bf16.mxu0 %v4026
    %4576 = vmatpush1.bf16.msra.mxu0 %v4025
    %4577 = vmatprep.subr.bf16.mxu0 %v4029
    %4578 = vmatpush1.bf16.msra.mxu0 %v4028
    %4579 = vmatprep.subr.bf16.mxu0 %v4032
    %4580 = vmatpush1.bf16.msra.mxu0 %v4031
    %4581 = vmatprep.subr.bf16.mxu0 %v4035
    %4582 = vmatpush1.bf16.msra.mxu0 %v4034
    %4583 = vmatprep.subr.bf16.mxu0 %v4038
    %4584 = vmatpush1.bf16.msra.mxu0 %v4037
    %4585 = vmatprep.subr.bf16.mxu0 %v4041
    %4586 = vmatpush1.bf16.msra.mxu0 %v4040
    %4587 = vmatprep.subr.bf16.mxu0 %v4044
    %4588 = vmatpush1.bf16.msra.mxu0 %v4043
    %4589 = vmatprep.subr.bf16.mxu0 %v4047
    %4590 = vmatpush1.bf16.msra.mxu0 %v4046
    %4591 = vmatprep.subr.bf16.mxu0 %v4050
    %4592 = vmatpush1.bf16.msra.mxu0 %v4049
    %4593 = vmatprep.subr.bf16.mxu0 %v4053
    %4594 = vmatpush1.bf16.msra.mxu0 %v4052
    %4595 = vmatprep.mubr.bf16.mxu0 %v2451
    %4596 = vmatmul.mubr.bf16.gmra.mrb[0].mxu0 %v2450
    %v4597 = vpop.f32.mrb[0].mxu0
    %v4598 = vadd.f32 %v4555, %v4597
    %v4599 = vpop.f32.mrb[0].mxu0
    %v4600 = vadd.f32 %v4557, %v4599
    %v4601 = vpop.f32.mrb[0].mxu0
    %v4602 = vadd.f32 %v4559, %v4601
    %v4603 = vpop.f32.mrb[0].mxu0
    %v4604 = vadd.f32 %v4561, %v4603
    %4605 = vdwg.mxu0
    %4606 = vmatprep.subr.bf16.mxu0 %v4056
    %4607 = vmatpush1.bf16.msra.mxu0 %v4055
    %4608 = vmatprep.subr.bf16.mxu0 %v4059
    %4609 = vmatpush1.bf16.msra.mxu0 %v4058
    %4610 = vmatprep.subr.bf16.mxu0 %v4062
    %4611 = vmatpush1.bf16.msra.mxu0 %v4061
    %4612 = vmatprep.subr.bf16.mxu0 %v4065
    %4613 = vmatpush1.bf16.msra.mxu0 %v4064
    %4614 = vmatprep.subr.bf16.mxu0 %v4068
    %4615 = vmatpush1.bf16.msra.mxu0 %v4067
    %4616 = vmatprep.subr.bf16.mxu0 %v4071
    %4617 = vmatpush1.bf16.msra.mxu0 %v4070
    %4618 = vmatprep.subr.bf16.mxu0 %v4074
    %4619 = vmatpush1.bf16.msra.mxu0 %v4073
    %4620 = vmatprep.subr.bf16.mxu0 %v4077
    %4621 = vmatpush1.bf16.msra.mxu0 %v4076
    %4622 = vmatprep.subr.bf16.mxu0 %v4080
    %4623 = vmatpush1.bf16.msra.mxu0 %v4079
    %4624 = vmatprep.subr.bf16.mxu0 %v4083
    %4625 = vmatpush1.bf16.msra.mxu0 %v4082
    %4626 = vmatprep.subr.bf16.mxu0 %v4086
    %4627 = vmatpush1.bf16.msra.mxu0 %v4085
    %4628 = vmatprep.subr.bf16.mxu0 %v4089
    %4629 = vmatpush1.bf16.msra.mxu0 %v4088
    %4630 = vmatprep.subr.bf16.mxu0 %v4092
    %4631 = vmatpush1.bf16.msra.mxu0 %v4091
    %4632 = vmatprep.subr.bf16.mxu0 %v4095
    %4633 = vmatpush1.bf16.msra.mxu0 %v4094
    %4634 = vmatprep.subr.bf16.mxu0 %v4098
    %4635 = vmatpush1.bf16.msra.mxu0 %v4097
    %4636 = vmatprep.subr.bf16.mxu0 %v4101
    %4637 = vmatpush1.bf16.msra.mxu0 %v4100
    %4638 = vmatprep.mubr.bf16.mxu0 %v2453
    %4639 = vmatmul.mubr.bf16.gmra.mrb[0].mxu0 %v2452
    %v4640 = vpop.f32.mrb[0].mxu0
    %v4641 = vadd.f32 %v4598, %v4640
    %v4642 = vpop.f32.mrb[0].mxu0
    %v4643 = vadd.f32 %v4600, %v4642
    %v4644 = vpop.f32.mrb[0].mxu0
    %v4645 = vadd.f32 %v4602, %v4644
    %v4646 = vpop.f32.mrb[0].mxu0
    %v4647 = vadd.f32 %v4604, %v4646
    %4648 = vdwg.mxu0
    %4649 = vmatprep.subr.bf16.mxu0 0
    %4650 = vmatpush1.bf16.msra.mxu0 %v3817
    %4651 = vmatprep.subr.bf16.mxu0 0
    %4652 = vmatpush1.bf16.msra.mxu0 %v3820
    %4653 = vmatprep.subr.bf16.mxu0 0
    %4654 = vmatpush1.bf16.msra.mxu0 %v3823
    %4655 = vmatprep.subr.bf16.mxu0 0
    %4656 = vmatpush1.bf16.msra.mxu0 %v3826
    %4657 = vmatprep.subr.bf16.mxu0 0
    %4658 = vmatpush1.bf16.msra.mxu0 %v3829
    %4659 = vmatprep.subr.bf16.mxu0 0
    %4660 = vmatpush1.bf16.msra.mxu0 %v3832
    %4661 = vmatprep.subr.bf16.mxu0 0
    %4662 = vmatpush1.bf16.msra.mxu0 %v3835
    %4663 = vmatprep.subr.bf16.mxu0 0
    %4664 = vmatpush1.bf16.msra.mxu0 %v3838
    %4665 = vmatprep.subr.bf16.mxu0 0
    %4666 = vmatpush1.bf16.msra.mxu0 %v3841
    %4667 = vmatprep.subr.bf16.mxu0 0
    %4668 = vmatpush1.bf16.msra.mxu0 %v3844
    %4669 = vmatprep.subr.bf16.mxu0 0
    %4670 = vmatpush1.bf16.msra.mxu0 %v3847
    %4671 = vmatprep.subr.bf16.mxu0 0
    %4672 = vmatpush1.bf16.msra.mxu0 %v3850
    %4673 = vmatprep.subr.bf16.mxu0 0
    %4674 = vmatpush1.bf16.msra.mxu0 %v3853
    %4675 = vmatprep.subr.bf16.mxu0 0
    %4676 = vmatpush1.bf16.msra.mxu0 %v3856
    %4677 = vmatprep.subr.bf16.mxu0 0
    %4678 = vmatpush1.bf16.msra.mxu0 %v3859
    %4679 = vmatprep.subr.bf16.mxu0 0
    %4680 = vmatpush1.bf16.msra.mxu0 %v3862
    %4681 = vmatprep.mubr.bf16.mxu0 %v2443
    %4682 = vmatmul.mubr.bf16.gmra.mrb[0].mxu0 %v2442
    %v4683 = vpop.f32.mrb[0].mxu0
    %v4684 = vadd.f32 %v2851, %v4683
    %v4685 = vpop.f32.mrb[0].mxu0
    %v4686 = vpop.f32.mrb[0].mxu0
    %v4687 = vadd.f32 %v2851, %v4686
    %v4688 = vpop.f32.mrb[0].mxu0
    %4689 = vdwg.mxu0
    %4690 = vmatprep.subr.bf16.mxu0 0
    %4691 = vmatpush1.bf16.msra.mxu0 %v3865
    %4692 = vmatprep.subr.bf16.mxu0 0
    %4693 = vmatpush1.bf16.msra.mxu0 %v3868
    %4694 = vmatprep.subr.bf16.mxu0 0
    %4695 = vmatpush1.bf16.msra.mxu0 %v3871
    %4696 = vmatprep.subr.bf16.mxu0 0
    %4697 = vmatpush1.bf16.msra.mxu0 %v3874
    %4698 = vmatprep.subr.bf16.mxu0 0
    %4699 = vmatpush1.bf16.msra.mxu0 %v3877
    %4700 = vmatprep.subr.bf16.mxu0 0
    %4701 = vmatpush1.bf16.msra.mxu0 %v3880
    %4702 = vmatprep.subr.bf16.mxu0 0
    %4703 = vmatpush1.bf16.msra.mxu0 %v3883
    %4704 = vmatprep.subr.bf16.mxu0 0
    %4705 = vmatpush1.bf16.msra.mxu0 %v3886
    %4706 = vmatprep.subr.bf16.mxu0 0
    %4707 = vmatpush1.bf16.msra.mxu0 %v3889
    %4708 = vmatprep.subr.bf16.mxu0 0
    %4709 = vmatpush1.bf16.msra.mxu0 %v3892
    %4710 = vmatprep.subr.bf16.mxu0 0
    %4711 = vmatpush1.bf16.msra.mxu0 %v3895
    %4712 = vmatprep.subr.bf16.mxu0 0
    %4713 = vmatpush1.bf16.msra.mxu0 %v3898
    %4714 = vmatprep.subr.bf16.mxu0 0
    %4715 = vmatpush1.bf16.msra.mxu0 %v3901
    %4716 = vmatprep.subr.bf16.mxu0 0
    %4717 = vmatpush1.bf16.msra.mxu0 %v3904
    %4718 = vmatprep.subr.bf16.mxu0 0
    %4719 = vmatpush1.bf16.msra.mxu0 %v3907
    %4720 = vmatprep.subr.bf16.mxu0 0
    %4721 = vmatpush1.bf16.msra.mxu0 %v3910
    %4722 = vmatprep.mubr.bf16.mxu0 %v2445
    %4723 = vmatmul.mubr.bf16.gmra.mrb[0].mxu0 %v2444
    %v4724 = vpop.f32.mrb[0].mxu0
    %v4725 = vadd.f32 %v4684, %v4724
    %v4726 = vpop.f32.mrb[0].mxu0
    %v4727 = vpop.f32.mrb[0].mxu0
    %v4728 = vadd.f32 %v4687, %v4727
    %v4729 = vpop.f32.mrb[0].mxu0
    %4730 = vdwg.mxu0
    %4731 = vmatprep.subr.bf16.mxu0 0
    %4732 = vmatpush1.bf16.msra.mxu0 %v3913
    %4733 = vmatprep.subr.bf16.mxu0 0
    %4734 = vmatpush1.bf16.msra.mxu0 %v3916
    %4735 = vmatprep.subr.bf16.mxu0 0
    %4736 = vmatpush1.bf16.msra.mxu0 %v3919
    %4737 = vmatprep.subr.bf16.mxu0 0
    %4738 = vmatpush1.bf16.msra.mxu0 %v3922
    %4739 = vmatprep.subr.bf16.mxu0 0
    %4740 = vmatpush1.bf16.msra.mxu0 %v3925
    %4741 = vmatprep.subr.bf16.mxu0 0
    %4742 = vmatpush1.bf16.msra.mxu0 %v3928
    %4743 = vmatprep.subr.bf16.mxu0 0
    %4744 = vmatpush1.bf16.msra.mxu0 %v3931
    %4745 = vmatprep.subr.bf16.mxu0 0
    %4746 = vmatpush1.bf16.msra.mxu0 %v3934
    %4747 = vmatprep.subr.bf16.mxu0 0
    %4748 = vmatpush1.bf16.msra.mxu0 %v3937
    %4749 = vmatprep.subr.bf16.mxu0 0
    %4750 = vmatpush1.bf16.msra.mxu0 %v3940
    %4751 = vmatprep.subr.bf16.mxu0 0
    %4752 = vmatpush1.bf16.msra.mxu0 %v3943
    %4753 = vmatprep.subr.bf16.mxu0 0
    %4754 = vmatpush1.bf16.msra.mxu0 %v3946
    %4755 = vmatprep.subr.bf16.mxu0 0
    %4756 = vmatpush1.bf16.msra.mxu0 %v3949
    %4757 = vmatprep.subr.bf16.mxu0 0
    %4758 = vmatpush1.bf16.msra.mxu0 %v3952
    %4759 = vmatprep.subr.bf16.mxu0 0
    %4760 = vmatpush1.bf16.msra.mxu0 %v3955
    %4761 = vmatprep.subr.bf16.mxu0 0
    %4762 = vmatpush1.bf16.msra.mxu0 %v3958
    %4763 = vmatprep.mubr.bf16.mxu0 %v2447
    %4764 = vmatmul.mubr.bf16.gmra.mrb[0].mxu0 %v2446
    %v4765 = vpop.f32.mrb[0].mxu0
    %v4766 = vadd.f32 %v4725, %v4765
    %v4767 = vpop.f32.mrb[0].mxu0
    %v4768 = vpop.f32.mrb[0].mxu0
    %v4769 = vadd.f32 %v4728, %v4768
    %v4770 = vpop.f32.mrb[0].mxu0
    %4771 = vdwg.mxu0
    %4772 = vmatprep.subr.bf16.mxu0 0
    %4773 = vmatpush1.bf16.msra.mxu0 %v3961
    %4774 = vmatprep.subr.bf16.mxu0 0
    %4775 = vmatpush1.bf16.msra.mxu0 %v3964
    %4776 = vmatprep.subr.bf16.mxu0 0
    %4777 = vmatpush1.bf16.msra.mxu0 %v3967
    %4778 = vmatprep.subr.bf16.mxu0 0
    %4779 = vmatpush1.bf16.msra.mxu0 %v3970
    %4780 = vmatprep.subr.bf16.mxu0 0
    %4781 = vmatpush1.bf16.msra.mxu0 %v3973
    %4782 = vmatprep.subr.bf16.mxu0 0
    %4783 = vmatpush1.bf16.msra.mxu0 %v3976
    %4784 = vmatprep.subr.bf16.mxu0 0
    %4785 = vmatpush1.bf16.msra.mxu0 %v3979
    %4786 = vmatprep.subr.bf16.mxu0 0
    %4787 = vmatpush1.bf16.msra.mxu0 %v3982
    %4788 = vmatprep.subr.bf16.mxu0 0
    %4789 = vmatpush1.bf16.msra.mxu0 %v3985
    %4790 = vmatprep.subr.bf16.mxu0 0
    %4791 = vmatpush1.bf16.msra.mxu0 %v3988
    %4792 = vmatprep.subr.bf16.mxu0 0
    %4793 = vmatpush1.bf16.msra.mxu0 %v3991
    %4794 = vmatprep.subr.bf16.mxu0 0
    %4795 = vmatpush1.bf16.msra.mxu0 %v3994
    %4796 = vmatprep.subr.bf16.mxu0 0
    %4797 = vmatpush1.bf16.msra.mxu0 %v3997
    %4798 = vmatprep.subr.bf16.mxu0 0
    %4799 = vmatpush1.bf16.msra.mxu0 %v4000
    %4800 = vmatprep.subr.bf16.mxu0 0
    %4801 = vmatpush1.bf16.msra.mxu0 %v4003
    %4802 = vmatprep.subr.bf16.mxu0 0
    %4803 = vmatpush1.bf16.msra.mxu0 %v4006
    %4804 = vmatprep.mubr.bf16.mxu0 %v2449
    %4805 = vmatmul.mubr.bf16.gmra.mrb[0].mxu0 %v2448
    %v4806 = vpop.f32.mrb[0].mxu0
    %v4807 = vadd.f32 %v4766, %v4806
    %v4808 = vpop.f32.mrb[0].mxu0
    %v4809 = vpop.f32.mrb[0].mxu0
    %v4810 = vadd.f32 %v4769, %v4809
    %v4811 = vpop.f32.mrb[0].mxu0
    %4812 = vdwg.mxu0
    %4813 = vmatprep.subr.bf16.mxu0 0
    %4814 = vmatpush1.bf16.msra.mxu0 %v4009
    %4815 = vmatprep.subr.bf16.mxu0 0
    %4816 = vmatpush1.bf16.msra.mxu0 %v4012
    %4817 = vmatprep.subr.bf16.mxu0 0
    %4818 = vmatpush1.bf16.msra.mxu0 %v4015
    %4819 = vmatprep.subr.bf16.mxu0 0
    %4820 = vmatpush1.bf16.msra.mxu0 %v4018
    %4821 = vmatprep.subr.bf16.mxu0 0
    %4822 = vmatpush1.bf16.msra.mxu0 %v4021
    %4823 = vmatprep.subr.bf16.mxu0 0
    %4824 = vmatpush1.bf16.msra.mxu0 %v4024
    %4825 = vmatprep.subr.bf16.mxu0 0
    %4826 = vmatpush1.bf16.msra.mxu0 %v4027
    %4827 = vmatprep.subr.bf16.mxu0 0
    %4828 = vmatpush1.bf16.msra.mxu0 %v4030
    %4829 = vmatprep.subr.bf16.mxu0 0
    %4830 = vmatpush1.bf16.msra.mxu0 %v4033
    %4831 = vmatprep.subr.bf16.mxu0 0
    %4832 = vmatpush1.bf16.msra.mxu0 %v4036
    %4833 = vmatprep.subr.bf16.mxu0 0
    %4834 = vmatpush1.bf16.msra.mxu0 %v4039
    %4835 = vmatprep.subr.bf16.mxu0 0
    %4836 = vmatpush1.bf16.msra.mxu0 %v4042
    %4837 = vmatprep.subr.bf16.mxu0 0
    %4838 = vmatpush1.bf16.msra.mxu0 %v4045
    %4839 = vmatprep.subr.bf16.mxu0 0
    %4840 = vmatpush1.bf16.msra.mxu0 %v4048
    %4841 = vmatprep.subr.bf16.mxu0 0
    %4842 = vmatpush1.bf16.msra.mxu0 %v4051
    %4843 = vmatprep.subr.bf16.mxu0 0
    %4844 = vmatpush1.bf16.msra.mxu0 %v4054
    %4845 = vmatprep.mubr.bf16.mxu0 %v2451
    %4846 = vmatmul.mubr.bf16.gmra.mrb[0].mxu0 %v2450
    %v4847 = vpop.f32.mrb[0].mxu0
    %v4848 = vadd.f32 %v4807, %v4847
    %v4849 = vpop.f32.mrb[0].mxu0
    %v4850 = vpop.f32.mrb[0].mxu0
    %v4851 = vadd.f32 %v4810, %v4850
    %v4852 = vpop.f32.mrb[0].mxu0
    %4853 = vdwg.mxu0
    %4854 = vmatprep.subr.bf16.mxu0 0
    %4855 = vmatpush1.bf16.msra.mxu0 %v4057
    %4856 = vmatprep.subr.bf16.mxu0 0
    %4857 = vmatpush1.bf16.msra.mxu0 %v4060
    %4858 = vmatprep.subr.bf16.mxu0 0
    %4859 = vmatpush1.bf16.msra.mxu0 %v4063
    %4860 = vmatprep.subr.bf16.mxu0 0
    %4861 = vmatpush1.bf16.msra.mxu0 %v4066
    %4862 = vmatprep.subr.bf16.mxu0 0
    %4863 = vmatpush1.bf16.msra.mxu0 %v4069
    %4864 = vmatprep.subr.bf16.mxu0 0
    %4865 = vmatpush1.bf16.msra.mxu0 %v4072
    %4866 = vmatprep.subr.bf16.mxu0 0
    %4867 = vmatpush1.bf16.msra.mxu0 %v4075
    %4868 = vmatprep.subr.bf16.mxu0 0
    %4869 = vmatpush1.bf16.msra.mxu0 %v4078
    %4870 = vmatprep.subr.bf16.mxu0 0
    %4871 = vmatpush1.bf16.msra.mxu0 %v4081
    %4872 = vmatprep.subr.bf16.mxu0 0
    %4873 = vmatpush1.bf16.msra.mxu0 %v4084
    %4874 = vmatprep.subr.bf16.mxu0 0
    %4875 = vmatpush1.bf16.msra.mxu0 %v4087
    %4876 = vmatprep.subr.bf16.mxu0 0
    %4877 = vmatpush1.bf16.msra.mxu0 %v4090
    %4878 = vmatprep.subr.bf16.mxu0 0
    %4879 = vmatpush1.bf16.msra.mxu0 %v4093
    %4880 = vmatprep.subr.bf16.mxu0 0
    %4881 = vmatpush1.bf16.msra.mxu0 %v4096
    %4882 = vmatprep.subr.bf16.mxu0 0
    %4883 = vmatpush1.bf16.msra.mxu0 %v4099
    %4884 = vmatprep.subr.bf16.mxu0 0
    %4885 = vmatpush1.bf16.msra.mxu0 %v4102
    %4886 = vmatprep.mubr.bf16.mxu0 %v2453
    %4887 = vmatmul.mubr.bf16.gmra.mrb[0].mxu0 %v2452
    %v4888 = vpop.f32.mrb[0].mxu0
    %v4889 = vadd.f32 %v4848, %v4888
    %v4890 = vpop.f32.mrb[0].mxu0
    %v4891 = vpop.f32.mrb[0].mxu0
    %v4892 = vadd.f32 %v4851, %v4891
    %v4893 = vpop.f32.mrb[0].mxu0
    %4894 = vdwg.mxu0
    %v4895 = vlaneseq
    %v4896 = vshrl.u32 %v4895, 7
    %v4897 = vadd.s32 %v4896, 8
    %v4898 = vlaneseq
    %v4899 = vand.u32 %v4898, 127
    %v4900 = vadd.s32 %v4899, 128
    %v4901 = vadd.s32 %v4899, 256
    %s4902 = smul.u32 0, 16
    %v4903 = vstv %s4902
    %v4904 = vadd.s32 %v4896, %v4903
    %v4905 = vadd.s32 %v4897, %v4903
    %v4906 = vmul.u32 %v4904, 384
    %v4907 = vmul.u32 %v4905, 384
    %v4908 = vadd.s32 %v4906, %v4899
    %v4909 = vadd.s32 %v4906, %v4900
    %v4910 = vadd.s32 %v4906, %v4901
    %v4911 = vadd.s32 %v4907, %v4899
    %v4912 = vadd.s32 %v4907, %v4900
    %v4913 = vadd.s32 %v4907, %v4901
    %s4914 = sld [smem:[#allocation2]]
    %v4915 = vstv %s4914
    %v4916 = vxor.u32 %v4908, %v4915
    %v4917 = vxor.u32 %v4909, %v4915
    %v4918 = vxor.u32 %v4910, %v4915
    %v4919 = vxor.u32 %v4911, %v4915
    %v4920 = vxor.u32 %v4912, %v4915
    %v4921 = vxor.u32 %v4913, %v4915
    %v4922 = vshrl.u32 %v4916, 16
    %v4923 = vshrl.u32 %v4917, 16
    %v4924 = vshrl.u32 %v4918, 16
    %v4925 = vshrl.u32 %v4919, 16
    %v4926 = vshrl.u32 %v4920, 16
    %v4927 = vshrl.u32 %v4921, 16
    %v4928 = vxor.u32 %v4916, %v4922
    %v4929 = vxor.u32 %v4917, %v4923
    %v4930 = vxor.u32 %v4918, %v4924
    %v4931 = vxor.u32 %v4919, %v4925
    %v4932 = vxor.u32 %v4920, %v4926
    %v4933 = vxor.u32 %v4921, %v4927
    %v4934 = vmul.u32 %v4928, 2146121005
    %v4935 = vmul.u32 %v4929, 2146121005
    %v4936 = vmul.u32 %v4930, 2146121005
    %v4937 = vmul.u32 %v4931, 2146121005
    %v4938 = vmul.u32 %v4932, 2146121005
    %v4939 = vmul.u32 %v4933, 2146121005
    %v4940 = vshrl.u32 %v4934, 15
    %v4941 = vshrl.u32 %v4935, 15
    %v4942 = vshrl.u32 %v4936, 15
    %v4943 = vshrl.u32 %v4937, 15
    %v4944 = vshrl.u32 %v4938, 15
    %v4945 = vshrl.u32 %v4939, 15
    %v4946 = vxor.u32 %v4934, %v4940
    %v4947 = vxor.u32 %v4935, %v4941
    %v4948 = vxor.u32 %v4936, %v4942
    %v4949 = vxor.u32 %v4937, %v4943
    %v4950 = vxor.u32 %v4938, %v4944
    %v4951 = vxor.u32 %v4939, %v4945
    %v4952 = vmul.u32 %v4946, 2222339723
    %v4953 = vmul.u32 %v4947, 2222339723
    %v4954 = vmul.u32 %v4948, 2222339723
    %v4955 = vmul.u32 %v4949, 2222339723
    %v4956 = vmul.u32 %v4950, 2222339723
    %v4957 = vmul.u32 %v4951, 2222339723
    %v4958 = vshrl.u32 %v4952, 16
    %v4959 = vshrl.u32 %v4953, 16
    %v4960 = vshrl.u32 %v4954, 16
    %v4961 = vshrl.u32 %v4955, 16
    %v4962 = vshrl.u32 %v4956, 16
    %v4963 = vshrl.u32 %v4957, 16
    %v4964 = vxor.u32 %v4952, %v4958
    %v4965 = vxor.u32 %v4953, %v4959
    %v4966 = vxor.u32 %v4954, %v4960
    %v4967 = vxor.u32 %v4955, %v4961
    %v4968 = vxor.u32 %v4956, %v4962
    %v4969 = vxor.u32 %v4957, %v4963
    %v4970 = vshrl.u32 %v4964, 8
    %v4971 = vshrl.u32 %v4965, 8
    %v4972 = vshrl.u32 %v4966, 8
    %v4973 = vshrl.u32 %v4967, 8
    %v4974 = vshrl.u32 %v4968, 8
    %v4975 = vshrl.u32 %v4969, 8
    %vm4976 = vcmp.ge.s32.totalorder %v4970, 3355443
    %vm4977 = vcmp.ge.s32.totalorder %v4971, 3355443
    %vm4978 = vcmp.ge.s32.totalorder %v4972, 3355443
    %vm4979 = vcmp.ge.s32.totalorder %v4973, 3355443
    %vm4980 = vcmp.ge.s32.totalorder %v4974, 3355443
    %vm4981 = vcmp.ge.s32.totalorder %v4975, 3355443
    %v4982 = vmul.f32 %v4641, 1.25
    %v4983 = vmul.f32 %v4643, 1.25
    %v4984 = vmul.f32 %v4889, 1.25
    %v4985 = vmul.f32 %v4645, 1.25
    %v4986 = vmul.f32 %v4647, 1.25
    %v4987 = vmul.f32 %v4892, 1.25
    %v4988 = vsel %vm4976, %v4982, 0.0
    %v4989 = vsel %vm4977, %v4983, 0.0
    %v4990 = vsel %vm4978, %v4984, 0.0
    %v4991 = vsel %vm4979, %v4985, 0.0
    %v4992 = vsel %vm4980, %v4986, 0.0
    %v4993 = vsel %vm4981, %v4987, 0.0
    %4994 = vst [vmem:[#allocation12] sm:$0xff] %v4988
    %4995 = vst [vmem:[#allocation12 + $0x8] sm:$0xff] %v4989
    %4996 = vst [vmem:[#allocation12 + $0x10] sm:$0xff] %v4990
    %4997 = vst [vmem:[#allocation12 + $0x18] sm:$0xff] %v4991
    %4998 = vst [vmem:[#allocation12 + $0x20] sm:$0xff] %v4992
    %4999 = vst [vmem:[#allocation12 + $0x28] sm:$0xff] %v4993
    // Predicated region
    $region46: #{tpu_custom_call.1} parent=1 // pred_check
      _
    $region47: #{tpu_custom_call.1} parent=1 // pred_check_branch
      %5001 = sbr.rel (0) target = $region49
    $region48: #{tpu_custom_call.1} parent=1 // pred_region
      %s5003 = ssub.s32 768, 768
      %5004 = vsyncadd [#allocation5], %s5003
      %s5005 = sshll.u32 [#allocation12], 4
      %s5006 = int_to_ptr.vmem [resolvable:$true] %s5005
      %5011 = dma.vmem_to_hbm [thread:$0]  %s5006, 768, %s6, [#allocation5], 384, 384, 24
    $region49: #{tpu_custom_call.1} parent=1 // pred_fallthru
      _
    // Predicated region
    $region50: #{tpu_custom_call.1} parent=1 // pred_check
      _
    $region51: #{tpu_custom_call.1} parent=1 // pred_check_branch
      %5013 = sbr.rel (0) target = $region53
    $region52: #{tpu_custom_call.1} parent=1 // pred_region
      %5014 = dma.done [#allocation5], 768
    $region53: #{tpu_custom_call.1} parent=1 // pred_fallthru
      _
    %5015 = vsyncpa [#allocation4], 1
    %5016 = vsyncpa [#allocation7], 1
    %5017 = vsyncpa [#allocation10], 1
    %5018 = vsyncpa [#allocation5], 1

</llo_original>
